<compile_context>
chip_gen: v7x
topology: tpu7x:2x2x1
jax: 0.10.0
libtpu: 0.0.40
codegen_flags: <defaults>
</compile_context>

<pallas_src>
import math
import functools

import jax
import jax.numpy as jnp
from jax.experimental import pallas as pl
from jax.experimental.pallas import tpu as pltpu

# ---- small synthetic config (stands in for roberta-large) -------------------
B, S, H, NH, FF, L, V = 2, 8, 32, 2, 64, 2, 100
HD = H // NH
NB = 3 * B            # news + prop + reason folded into one encoder batch
EPS = 1e-5
HEAD_PAD = 128        # lane-dense packed head-logit slab width


def _layernorm(x, g, b):
    mu = jnp.mean(x, axis=-1, keepdims=True)
    var = jnp.mean((x - mu) ** 2, axis=-1, keepdims=True)
    return (x - mu) * jax.lax.rsqrt(var + EPS) * g + b


# ---------------------------------------------------------------------------
# Pallas kernel: full encoder stack over ALL folded examples, one layer per
# grid step.  The (3B*S, H) residual stream lives in a VMEM scratch across the
# layer axis.  The three prediction heads are fused into the last-layer
# epilogue, so only a lane-dense (2B, 128) logit slab ever leaves the kernel.
# ---------------------------------------------------------------------------
def encoder_stack_kernel(x_hbm, bias_ref,
                         wqkv_ref, bqkv_ref, wo_ref, bo_ref, g1_ref, be1_ref,
                         w1_ref, bf1_ref, w2_ref, bf2_ref, g2_ref, be2_ref,
                         wh_ref, bh_ref,
                         heads_ref,
                         act_ref, copy_sem,
                         *, nb, n_grp, seq, hid, n_heads, head_dim):
    layer = pl.program_id(0)

    # One-shot DMA of the folded embeddings (HBM, memory_space=pl.ANY) straight
    # into the resident activation scratch — no double-buffered embedding block
    # kept alive for the rest of the layer loop.
    @pl.when(layer == 0)
    def _():
        cp = pltpu.make_async_copy(x_hbm, act_ref, copy_sem)
        cp.start()
        cp.wait()

    x2d = act_ref[...]                                   # (3B*S, H) f32 residual
    xb = x2d.astype(jnp.bfloat16)

    # ---- fused QKV projection (Q columns carry the folded 1/sqrt(HD) scale) ----
    qkv = jnp.dot(xb, wqkv_ref[0],
                  preferred_element_type=jnp.float32) + bqkv_ref[0]   # (3B*S, 3H)

    # ---- multi-head attention, batched over (example, head) in one einsum ----
    # TODO(synk): at real scale replace the NH static lane slices with a single
    # head-major relayout (or a head grid axis); kept slice-based here for
    # Mosaic lowering robustness at these tiny non-tile-aligned shapes.
    def split_heads(base):
        # (3B*S, 3H) -> (3B*NH, S, HD): lane slices + row-regroup reshapes only.
        return jnp.stack(
            [qkv[:, base + h * head_dim: base + (h + 1) * head_dim]
                 .reshape(nb, seq, head_dim)
             for h in range(n_heads)], axis=1
        ).reshape(nb * n_heads, seq, head_dim)

    q = split_heads(0).astype(jnp.bfloat16)
    k = split_heads(hid).astype(jnp.bfloat16)
    v = split_heads(2 * hid).astype(jnp.bfloat16)

    scores = jnp.einsum("zqd,zkd->zqk", q, k,
                        preferred_element_type=jnp.float32)           # (3B*NH, S, S)
    scores = scores + bias_ref[...]                                   # additive key mask

    # f32 softmax (v5e-safe). TODO(synk): bf16 exp path on v6e/v7x.
    m = jnp.max(scores, axis=-1, keepdims=True)
    e = jnp.exp(scores - m)
    denom = jnp.sum(e, axis=-1, keepdims=True)
    probs = e * pl.reciprocal(denom, approx=True)        # EUP reciprocal + VPU mul

    ctx = jnp.einsum("zqk,zkd->zqd", probs.astype(jnp.bfloat16), v,
                     preferred_element_type=jnp.float32)              # (3B*NH, S, HD)
    ctx = ctx.reshape(nb, n_heads, seq, head_dim)
    ctx2d = jnp.concatenate([ctx[:, h] for h in range(n_heads)], axis=-1)
    ctx2d = ctx2d.reshape(nb * seq, hid)                              # (3B*S, H)

    attn = jnp.dot(ctx2d.astype(jnp.bfloat16), wo_ref[0],
                   preferred_element_type=jnp.float32) + bo_ref[0]
    h1 = _layernorm(x2d + attn, g1_ref[0], be1_ref[0])

    # ---- feed-forward ----
    ff = jnp.dot(h1.astype(jnp.bfloat16), w1_ref[0],
                 preferred_element_type=jnp.float32) + bf1_ref[0]
    ff = jax.nn.gelu(ff)
    ff = jnp.dot(ff.astype(jnp.bfloat16), w2_ref[0],
                 preferred_element_type=jnp.float32) + bf2_ref[0]
    h2 = _layernorm(h1 + ff, g2_ref[0], be2_ref[0])

    act_ref[...] = h2                                    # carry to next layer

    # ---- fused heads epilogue (last layer only) ----
    #   counter   = cls_prop - cls_reason
    #   prop_pred = counter @ Wp + bp                    (no activation)
    #   news_pred = sigmoid((cls_news - counter) @ Wn + bn)
    #   score     = sigmoid(counter @ Ws + bs)
    # One (2B, H) x (H, 128) matmul on stacked [amplified; counter] rows with
    # [Wn|Wp|Ws] packed into lane-padded columns 0..4.
    @pl.when(layer == pl.num_programs(0) - 1)
    def _():
        cls = h2.reshape(nb, seq, hid)[:, 0, :]          # (3B, H) CLS rows
        cls_news = cls[:n_grp]
        cls_prop = cls[n_grp:2 * n_grp]
        cls_reason = cls[2 * n_grp:]
        counter = cls_prop - cls_reason                  # counterpropaganda_semantic
        amplified = cls_news - counter                   # amplified_propaganda_news
        xh = jnp.concatenate([amplified, counter], axis=0)        # (2B, H)
        logits = jnp.dot(xh, wh_ref[...],
                         preferred_element_type=jnp.float32) + bh_ref[...]
        col = jax.lax.broadcasted_iota(jnp.int32, logits.shape, 1)
        apply_sig = (col == 0) | (col == 4)              # news + prop_score heads
        heads_ref[...] = jnp.where(apply_sig, jax.nn.sigmoid(logits), logits)


def encode_and_heads(x2d, bias_z, sp, hp, nb, n_grp):
    weights = [sp["wqkv"], sp["bqkv"], sp["wo"], sp["bo"], sp["g1"], sp["be1"],
               sp["w1"], sp["bf1"], sp["w2"], sp["bf2"], sp["g2"], sp["be2"]]

    def layer_spec(arr):
        # layer-indexed: next layer's weights are DMA'd while this one computes,
        # and each layer's weights are streamed exactly ONCE per forward.
        return pl.BlockSpec((1,) + arr.shape[1:], lambda l: (l, 0, 0))

    # Packed, lane-padded head weights: cols [0]=news, [1:4]=propaganda, [4]=score.
    wh = jnp.zeros((H, HEAD_PAD), jnp.float32)
    wh = wh.at[:, 0:1].set(hp["wn"]).at[:, 1:4].set(hp["wp"]).at[:, 4:5].set(hp["ws"])
    bh = jnp.zeros((1, HEAD_PAD), jnp.float32)
    bh = bh.at[:, 0:1].set(hp["bn"]).at[:, 1:4].set(hp["bp"]).at[:, 4:5].set(hp["bs"])

    kernel = functools.partial(encoder_stack_kernel, nb=nb, n_grp=n_grp,
                               seq=S, hid=H, n_heads=NH, head_dim=HD)

    in_specs = ([pl.BlockSpec(memory_space=pl.ANY),                    # embeddings
                 pl.BlockSpec(bias_z.shape, lambda l: (0, 0, 0))]      # attn mask bias
                + [layer_spec(w) for w in weights]
                + [pl.BlockSpec(wh.shape, lambda l: (0, 0)),
                   pl.BlockSpec(bh.shape, lambda l: (0, 0))])

    return pl.pallas_call(
        kernel,
        out_shape=jax.ShapeDtypeStruct((2 * n_grp, HEAD_PAD), jnp.float32),
        grid=(L,),
        in_specs=in_specs,
        out_specs=pl.BlockSpec((2 * n_grp, HEAD_PAD), lambda l: (0, 0)),
        scratch_shapes=[pltpu.VMEM((nb * S, H), jnp.float32),
                        pltpu.SemaphoreType.DMA],
        compiler_params=pltpu.CompilerParams(
            dimension_semantics=("arbitrary",),
            vmem_limit_bytes=56 * 1024 * 1024),
        # TODO(synk): on v7x (2 TCs) optionally split the folded batch 2-way on a
        # leading "parallel" grid axis (2x weight restream, both cores busy).
    )(x2d, bias_z, *weights, wh, bh)


# ---------------------------------------------------------------------------
# Parameter init (deterministic, synthetic) and glue
# ---------------------------------------------------------------------------
def init_params(key):
    def nrm(k, shape, scale=0.02):
        return scale * jax.random.normal(k, shape, dtype=jnp.float32)

    keys = jax.random.split(key, 9)
    bf = jnp.bfloat16
    q_scale = 1.0 / math.sqrt(HD)

    wqkv = nrm(keys[2], (L, H, 3 * H))
    wqkv = wqkv.at[:, :, :H].multiply(q_scale)          # fold 1/sqrt(HD) into Q
    bqkv = jnp.zeros((L, 1, 3 * H), jnp.float32)
    bqkv = bqkv.at[:, :, :H].multiply(q_scale)          # (zeros here, kept for generality)

    return {
        "tok_emb": nrm(keys[0], (V, H)),
        "pos_emb": nrm(keys[1], (S, H)),
        "emb_g": jnp.ones((H,), jnp.float32),
        "emb_b": jnp.zeros((H,), jnp.float32),
        # encoder layer weights stacked on a leading L axis (streamed per layer)
        "stack": {
            "wqkv": wqkv.astype(bf),
            "bqkv": bqkv,
            "wo":   nrm(keys[3], (L, H, H)).astype(bf),
            "bo":   jnp.zeros((L, 1, H), jnp.float32),
            "g1":   jnp.ones((L, 1, H), jnp.float32),
            "be1":  jnp.zeros((L, 1, H), jnp.float32),
            "w1":   nrm(keys[4], (L, H, FF)).astype(bf),
            "bf1":  jnp.zeros((L, 1, FF), jnp.float32),
            "w2":   nrm(keys[5], (L, FF, H)).astype(bf),
            "bf2":  jnp.zeros((L, 1, H), jnp.float32),
            "g2":   jnp.ones((L, 1, H), jnp.float32),
            "be2":  jnp.zeros((L, 1, H), jnp.float32),
        },
        "heads": {
            "wn": nrm(keys[6], (H, 1)), "bn": jnp.zeros((1, 1), jnp.float32),
            "wp": nrm(keys[7], (H, 3)), "bp": jnp.zeros((1, 3), jnp.float32),
            "ws": nrm(keys[8], (H, 1)), "bs": jnp.zeros((1, 1), jnp.float32),
        },
    }


def encode_forward(params, ids_all, mask_all, n_grp):
    # TODO(synk): token/position embedding gather + embedding layernorm kept as
    # plain-JAX glue (gather has no clean small-scale Pallas win here).
    nb = ids_all.shape[0]
    x = params["tok_emb"][ids_all] + params["pos_emb"][None, :, :]
    x = _layernorm(x, params["emb_g"], params["emb_b"])
    x2d = x.reshape(nb * S, H)
    # Additive key-mask bias computed ONCE (f32), pre-expanded to the (b, head)
    # batch ordering used inside the kernel.
    bias = ((1.0 - mask_all.astype(jnp.float32)) * (-1e9)).reshape(nb, 1, S)
    bias_z = jnp.repeat(bias, NH, axis=0)                # (3B*NH, 1, S)
    return encode_and_heads(x2d, bias_z, params["stack"], params["heads"],
                            nb=nb, n_grp=n_grp)


def forward(params, input_ids_news, attention_mask_news,
            input_ids_prop, attention_mask_prop,
            reason, attention_mask_reason, propaganda_score=None):
    # branch: news + prop + reason (+ propaganda_score), return_embeddings=False.
    # The three sequences share the encoder, so they run as one folded encode.
    n_grp = input_ids_news.shape[0]
    ids = jnp.concatenate([input_ids_news, input_ids_prop, reason], axis=0)
    masks = jnp.concatenate([attention_mask_news, attention_mask_prop,
                             attention_mask_reason], axis=0)
    out = encode_forward(params, ids, masks, n_grp)      # (2B, 128) packed head slab

    news_pred = out[:n_grp, 0:1]          # sigmoid(linear_news(amplified))
    propaganda_pred = out[n_grp:, 1:4]    # linear_propaganda(counter)   (no activation)
    prop_score_pred = out[n_grp:, 4:5]    # sigmoid(linear_prop_score(counter))

    embeddings = []   # return_embeddings=False branch
    if propaganda_score is not None:
        return news_pred, propaganda_pred, prop_score_pred, embeddings
    return news_pred, propaganda_pred, embeddings


if __name__ == "__main__":
    key = jax.random.PRNGKey(0)
    pkey, k1, k2, k3 = jax.random.split(key, 4)
    params = init_params(pkey)

    input_ids_news = jax.random.randint(k1, (B, S), 0, V, dtype=jnp.int32)
    input_ids_prop = jax.random.randint(k2, (B, S), 0, V, dtype=jnp.int32)
    reason_ids = jax.random.randint(k3, (B, S), 0, V, dtype=jnp.int32)

    am_news = jnp.ones((B, S), jnp.float32)
    am_prop = jnp.ones((B, S), jnp.float32).at[:, -2:].set(0.0)   # some padding
    am_reason = jnp.ones((B, S), jnp.float32).at[:, -1:].set(0.0)

    propaganda_score = jnp.ones((B, 1), jnp.float32)  # presence triggers 3rd head

    news_pred, propaganda_pred, prop_score_pred, _ = forward(
        params, input_ids_news, am_news, input_ids_prop, am_prop,
        reason_ids, am_reason, propaganda_score)

    jax.block_until_ready((news_pred, propaganda_pred, prop_score_pred))
    assert news_pred.shape == (B, 1)
    assert propaganda_pred.shape == (B, 3)
    assert prop_score_pred.shape == (B, 1)
    assert bool(jnp.all(jnp.isfinite(news_pred)))
    assert bool(jnp.all(jnp.isfinite(propaganda_pred)))
    assert bool(jnp.all(jnp.isfinite(prop_score_pred)))
    assert bool(jnp.all((news_pred > 0.0) & (news_pred < 1.0)))
    assert bool(jnp.all((prop_score_pred > 0.0) & (prop_score_pred < 1.0)))
    print("KERNEL_OK")
</pallas_src>

<mosaic_0001>
module attributes {stable_mosaic.version = 11 : i64} {
  func.func @encoder_stack_kernel(%arg0: i32, %arg1: memref<48x32xf32, #tpu.memory_space<any>>, %arg2: memref<12x1x8xf32, #tpu.memory_space<vmem>>, %arg3: memref<1x32x96xbf16, #tpu.memory_space<vmem>>, %arg4: memref<1x1x96xf32, #tpu.memory_space<vmem>>, %arg5: memref<1x32x32xbf16, #tpu.memory_space<vmem>>, %arg6: memref<1x1x32xf32, #tpu.memory_space<vmem>>, %arg7: memref<1x1x32xf32, #tpu.memory_space<vmem>>, %arg8: memref<1x1x32xf32, #tpu.memory_space<vmem>>, %arg9: memref<1x32x64xbf16, #tpu.memory_space<vmem>>, %arg10: memref<1x1x64xf32, #tpu.memory_space<vmem>>, %arg11: memref<1x64x32xbf16, #tpu.memory_space<vmem>>, %arg12: memref<1x1x32xf32, #tpu.memory_space<vmem>>, %arg13: memref<1x1x32xf32, #tpu.memory_space<vmem>>, %arg14: memref<1x1x32xf32, #tpu.memory_space<vmem>>, %arg15: memref<32x128xf32, #tpu.memory_space<vmem>>, %arg16: memref<1x128xf32, #tpu.memory_space<vmem>>, %arg17: memref<4x128xf32, #tpu.memory_space<vmem>>, %arg18: memref<48x32xf32, #tpu.memory_space<vmem>>, %arg19: memref<!tpu.dma_semaphore, #tpu.memory_space<semaphore_mem>>) attributes {dimension_semantics = [#tpu.dimension_semantics<arbitrary>], iteration_bounds = array<i64: 2>, scalar_prefetch = 0 : i64, scratch_operands = 2 : i64, tpu.core_type = #tpu.core_type<tc>, window_params = [{}, {pipeline_mode = #tpu.pipeline_mode<synchronous>, transform_indices = @transform_1, window_bounds = array<i64: 12, 1, 8>}, {transform_indices = @transform_2, window_bounds = array<i64: 1, 32, 96>}, {transform_indices = @transform_3, window_bounds = array<i64: 1, 1, 96>}, {transform_indices = @transform_4, window_bounds = array<i64: 1, 32, 32>}, {transform_indices = @transform_5, window_bounds = array<i64: 1, 1, 32>}, {transform_indices = @transform_6, window_bounds = array<i64: 1, 1, 32>}, {transform_indices = @transform_7, window_bounds = array<i64: 1, 1, 32>}, {transform_indices = @transform_8, window_bounds = array<i64: 1, 32, 64>}, {transform_indices = @transform_9, window_bounds = array<i64: 1, 1, 64>}, {transform_indices = @transform_10, window_bounds = array<i64: 1, 64, 32>}, {transform_indices = @transform_11, window_bounds = array<i64: 1, 1, 32>}, {transform_indices = @transform_12, window_bounds = array<i64: 1, 1, 32>}, {transform_indices = @transform_13, window_bounds = array<i64: 1, 1, 32>}, {pipeline_mode = #tpu.pipeline_mode<synchronous>, transform_indices = @transform_14, window_bounds = array<i64: 32, 128>}, {pipeline_mode = #tpu.pipeline_mode<synchronous>, transform_indices = @transform_15, window_bounds = array<i64: 1, 128>}, {pipeline_mode = #tpu.pipeline_mode<synchronous>, transform_indices = @transform_16, window_bounds = array<i64: 4, 128>}]} {
    %c0_i32 = arith.constant 0 : i32
    %0 = arith.cmpi eq, %arg0, %c0_i32 : i32
    %1 = arith.extui %0 : i1 to i32
    %c0_i32_0 = arith.constant 0 : i32
    %2 = arith.cmpi ne, %1, %c0_i32_0 : i32
    scf.if %2 {
      tpu.enqueue_dma source(%arg1 : memref<48x32xf32, #tpu.memory_space<any>>) target(%arg18 : memref<48x32xf32, #tpu.memory_space<vmem>>) target_semaphore(%arg19 : memref<!tpu.dma_semaphore, #tpu.memory_space<semaphore_mem>>)
      tpu.wait_dma2 semaphore(%arg19 : memref<!tpu.dma_semaphore, #tpu.memory_space<semaphore_mem>>) src(%arg1 : memref<48x32xf32, #tpu.memory_space<any>>) dst(%arg18 : memref<48x32xf32, #tpu.memory_space<vmem>>)
    } else {
    }
    %c0 = arith.constant 0 : index
    %c0_1 = arith.constant 0 : index
    %3 = vector.load %arg18[%c0, %c0_1] : memref<48x32xf32, #tpu.memory_space<vmem>>, vector<48x32xf32>
    %4 = arith.truncf %3 : vector<48x32xf32> to vector<48x32xbf16>
    %c0_2 = arith.constant 0 : index
    %c0_3 = arith.constant 0 : index
    %c0_4 = arith.constant 0 : index
    %5 = vector.load %arg3[%c0_2, %c0_3, %c0_4] : memref<1x32x96xbf16, #tpu.memory_space<vmem>>, vector<1x32x96xbf16>
    %6 = vector.shape_cast %5 : vector<1x32x96xbf16> to vector<32x96xbf16>
    %cst = arith.constant dense<0.000000e+00> : vector<48x96xf32>
    %7 = tpu.matmul %4, %6, %cst {dimension_numbers = #tpu.dot_dimension_numbers<[1], [0], [0], [1], [0, 0, 1, 1], [], []>} : vector<48x32xbf16>, vector<32x96xbf16>, vector<48x96xf32> -> vector<48x96xf32>
    %c0_5 = arith.constant 0 : index
    %c0_6 = arith.constant 0 : index
    %c0_7 = arith.constant 0 : index
    %8 = vector.load %arg4[%c0_5, %c0_6, %c0_7] : memref<1x1x96xf32, #tpu.memory_space<vmem>>, vector<1x1x96xf32>
    %9 = vector.shape_cast %8 : vector<1x1x96xf32> to vector<1x96xf32>
    %10 = vector.broadcast %9 : vector<1x96xf32> to vector<48x96xf32>
    %11 = arith.addf %7, %10 : vector<48x96xf32>
    %12 = vector.extract_strided_slice %11 {offsets = [0, 0], sizes = [48, 16], strides = [1, 1]} : vector<48x96xf32> to vector<48x16xf32>
    %13 = vector.shape_cast %12 : vector<48x16xf32> to vector<6x8x16xf32>
    %14 = vector.extract_strided_slice %11 {offsets = [0, 16], sizes = [48, 16], strides = [1, 1]} : vector<48x96xf32> to vector<48x16xf32>
    %15 = vector.shape_cast %14 : vector<48x16xf32> to vector<6x8x16xf32>
    %16 = vector.shape_cast %13 : vector<6x8x16xf32> to vector<6x1x8x16xf32>
    %17 = vector.shape_cast %15 : vector<6x8x16xf32> to vector<6x1x8x16xf32>
    %18 = tpu.concatenate %16, %17 in 1 : vector<6x1x8x16xf32>, vector<6x1x8x16xf32> -> vector<6x2x8x16xf32>
    %19 = vector.shape_cast %18 : vector<6x2x8x16xf32> to vector<12x8x16xf32>
    %20 = arith.truncf %19 : vector<12x8x16xf32> to vector<12x8x16xbf16>
    %21 = vector.extract_strided_slice %11 {offsets = [0, 32], sizes = [48, 16], strides = [1, 1]} : vector<48x96xf32> to vector<48x16xf32>
    %22 = vector.shape_cast %21 : vector<48x16xf32> to vector<6x8x16xf32>
    %23 = vector.extract_strided_slice %11 {offsets = [0, 48], sizes = [48, 16], strides = [1, 1]} : vector<48x96xf32> to vector<48x16xf32>
    %24 = vector.shape_cast %23 : vector<48x16xf32> to vector<6x8x16xf32>
    %25 = vector.shape_cast %22 : vector<6x8x16xf32> to vector<6x1x8x16xf32>
    %26 = vector.shape_cast %24 : vector<6x8x16xf32> to vector<6x1x8x16xf32>
    %27 = tpu.concatenate %25, %26 in 1 : vector<6x1x8x16xf32>, vector<6x1x8x16xf32> -> vector<6x2x8x16xf32>
    %28 = vector.shape_cast %27 : vector<6x2x8x16xf32> to vector<12x8x16xf32>
    %29 = arith.truncf %28 : vector<12x8x16xf32> to vector<12x8x16xbf16>
    %30 = vector.extract_strided_slice %11 {offsets = [0, 64], sizes = [48, 16], strides = [1, 1]} : vector<48x96xf32> to vector<48x16xf32>
    %31 = vector.shape_cast %30 : vector<48x16xf32> to vector<6x8x16xf32>
    %32 = vector.extract_strided_slice %11 {offsets = [0, 80], sizes = [48, 16], strides = [1, 1]} : vector<48x96xf32> to vector<48x16xf32>
    %33 = vector.shape_cast %32 : vector<48x16xf32> to vector<6x8x16xf32>
    %34 = vector.shape_cast %31 : vector<6x8x16xf32> to vector<6x1x8x16xf32>
    %35 = vector.shape_cast %33 : vector<6x8x16xf32> to vector<6x1x8x16xf32>
    %36 = tpu.concatenate %34, %35 in 1 : vector<6x1x8x16xf32>, vector<6x1x8x16xf32> -> vector<6x2x8x16xf32>
    %37 = vector.shape_cast %36 : vector<6x2x8x16xf32> to vector<12x8x16xf32>
    %38 = arith.truncf %37 : vector<12x8x16xf32> to vector<12x8x16xbf16>
    "tpu.trace_start"() <{level = 10 : i32, message = "zqd,zkd->zqk"}> : () -> ()
    %cst_8 = arith.constant dense<0.000000e+00> : vector<12x8x8xf32>
    %39 = tpu.matmul %20, %29, %cst_8 {dimension_numbers = #tpu.dot_dimension_numbers<[2], [2], [1], [1], [0, 0, 0, 1, 1, 1], [0], [0]>} : vector<12x8x16xbf16>, vector<12x8x16xbf16>, vector<12x8x8xf32> -> vector<12x8x8xf32>
    "tpu.trace_stop"() : () -> ()
    %c0_9 = arith.constant 0 : index
    %c0_10 = arith.constant 0 : index
    %c0_11 = arith.constant 0 : index
    %40 = vector.load %arg2[%c0_9, %c0_10, %c0_11] : memref<12x1x8xf32, #tpu.memory_space<vmem>>, vector<12x1x8xf32>
    %41 = vector.broadcast %40 : vector<12x1x8xf32> to vector<12x8x8xf32>
    %42 = arith.addf %39, %41 : vector<12x8x8xf32>
    %cst_12 = arith.constant dense<0xFF800000> : vector<12x8xf32>
    %43 = vector.multi_reduction <maximumf>, %42, %cst_12 [2] : vector<12x8x8xf32> to vector<12x8xf32>
    %44 = vector.shape_cast %43 : vector<12x8xf32> to vector<12x8x1xf32>
    %45 = vector.broadcast %44 : vector<12x8x1xf32> to vector<12x8x8xf32>
    %46 = arith.subf %42, %45 : vector<12x8x8xf32>
    %47 = math.exp %46 : vector<12x8x8xf32>
    %cst_13 = arith.constant dense<0.000000e+00> : vector<12x8xf32>
    %48 = vector.multi_reduction <add>, %47, %cst_13 [2] : vector<12x8x8xf32> to vector<12x8xf32>
    %49 = vector.shape_cast %48 : vector<12x8xf32> to vector<12x8x1xf32>
    %50 = tpu.reciprocal %49 {approx = true} : vector<12x8x1xf32> -> vector<12x8x1xf32>
    %51 = vector.broadcast %50 : vector<12x8x1xf32> to vector<12x8x8xf32>
    %52 = arith.mulf %47, %51 : vector<12x8x8xf32>
    %53 = arith.truncf %52 : vector<12x8x8xf32> to vector<12x8x8xbf16>
    "tpu.trace_start"() <{level = 10 : i32, message = "zqk,zkd->zqd"}> : () -> ()
    %cst_14 = arith.constant dense<0.000000e+00> : vector<12x8x16xf32>
    %54 = tpu.matmul %53, %38, %cst_14 {dimension_numbers = #tpu.dot_dimension_numbers<[2], [1], [1], [2], [0, 0, 0, 1, 1, 2], [0], [0]>} : vector<12x8x8xbf16>, vector<12x8x16xbf16>, vector<12x8x16xf32> -> vector<12x8x16xf32>
    "tpu.trace_stop"() : () -> ()
    %55 = vector.shape_cast %54 : vector<12x8x16xf32> to vector<6x2x8x16xf32>
    %56 = vector.extract_strided_slice %55 {offsets = [0, 0, 0, 0], sizes = [6, 1, 8, 16], strides = [1, 1, 1, 1]} : vector<6x2x8x16xf32> to vector<6x1x8x16xf32>
    %57 = vector.shape_cast %56 : vector<6x1x8x16xf32> to vector<6x8x16xf32>
    %58 = vector.extract_strided_slice %55 {offsets = [0, 1, 0, 0], sizes = [6, 1, 8, 16], strides = [1, 1, 1, 1]} : vector<6x2x8x16xf32> to vector<6x1x8x16xf32>
    %59 = vector.shape_cast %58 : vector<6x1x8x16xf32> to vector<6x8x16xf32>
    %60 = tpu.concatenate %57, %59 in 2 : vector<6x8x16xf32>, vector<6x8x16xf32> -> vector<6x8x32xf32>
    %61 = vector.shape_cast %60 : vector<6x8x32xf32> to vector<48x32xf32>
    %62 = arith.truncf %61 : vector<48x32xf32> to vector<48x32xbf16>
    %c0_15 = arith.constant 0 : index
    %c0_16 = arith.constant 0 : index
    %c0_17 = arith.constant 0 : index
    %63 = vector.load %arg5[%c0_15, %c0_16, %c0_17] : memref<1x32x32xbf16, #tpu.memory_space<vmem>>, vector<1x32x32xbf16>
    %64 = vector.shape_cast %63 : vector<1x32x32xbf16> to vector<32x32xbf16>
    %cst_18 = arith.constant dense<0.000000e+00> : vector<48x32xf32>
    %65 = tpu.matmul %62, %64, %cst_18 {dimension_numbers = #tpu.dot_dimension_numbers<[1], [0], [0], [1], [0, 0, 1, 1], [], []>} : vector<48x32xbf16>, vector<32x32xbf16>, vector<48x32xf32> -> vector<48x32xf32>
    %c0_19 = arith.constant 0 : index
    %c0_20 = arith.constant 0 : index
    %c0_21 = arith.constant 0 : index
    %66 = vector.load %arg6[%c0_19, %c0_20, %c0_21] : memref<1x1x32xf32, #tpu.memory_space<vmem>>, vector<1x1x32xf32>
    %67 = vector.shape_cast %66 : vector<1x1x32xf32> to vector<1x32xf32>
    %68 = vector.broadcast %67 : vector<1x32xf32> to vector<48x32xf32>
    %69 = arith.addf %65, %68 : vector<48x32xf32>
    %70 = arith.addf %3, %69 : vector<48x32xf32>
    %c0_22 = arith.constant 0 : index
    %c0_23 = arith.constant 0 : index
    %c0_24 = arith.constant 0 : index
    %71 = vector.load %arg7[%c0_22, %c0_23, %c0_24] : memref<1x1x32xf32, #tpu.memory_space<vmem>>, vector<1x1x32xf32>
    %72 = vector.shape_cast %71 : vector<1x1x32xf32> to vector<1x32xf32>
    %c0_25 = arith.constant 0 : index
    %c0_26 = arith.constant 0 : index
    %c0_27 = arith.constant 0 : index
    %73 = vector.load %arg8[%c0_25, %c0_26, %c0_27] : memref<1x1x32xf32, #tpu.memory_space<vmem>>, vector<1x1x32xf32>
    %74 = vector.shape_cast %73 : vector<1x1x32xf32> to vector<1x32xf32>
    %cst_28 = arith.constant dense<0.000000e+00> : vector<48xf32>
    %75 = vector.multi_reduction <add>, %70, %cst_28 [1] : vector<48x32xf32> to vector<48xf32>
    %76 = vector.shape_cast %75 : vector<48xf32> to vector<48x1xf32>
    %cst_29 = arith.constant 3.200000e+01 : f32
    %77 = vector.broadcast %cst_29 : f32 to vector<48x1xf32>
    %78 = arith.divf %76, %77 : vector<48x1xf32>
    %79 = vector.broadcast %78 : vector<48x1xf32> to vector<48x32xf32>
    %80 = arith.subf %70, %79 : vector<48x32xf32>
    %81 = arith.mulf %80, %80 : vector<48x32xf32>
    %cst_30 = arith.constant dense<0.000000e+00> : vector<48xf32>
    %82 = vector.multi_reduction <add>, %81, %cst_30 [1] : vector<48x32xf32> to vector<48xf32>
    %83 = vector.shape_cast %82 : vector<48xf32> to vector<48x1xf32>
    %cst_31 = arith.constant 3.200000e+01 : f32
    %84 = vector.broadcast %cst_31 : f32 to vector<48x1xf32>
    %85 = arith.divf %83, %84 : vector<48x1xf32>
    %86 = vector.broadcast %78 : vector<48x1xf32> to vector<48x32xf32>
    %87 = arith.subf %70, %86 : vector<48x32xf32>
    %cst_32 = arith.constant 9.99999974E-6 : f32
    %88 = vector.broadcast %cst_32 : f32 to vector<48x1xf32>
    %89 = arith.addf %85, %88 : vector<48x1xf32>
    %90 = math.rsqrt %89 : vector<48x1xf32>
    %91 = vector.broadcast %90 : vector<48x1xf32> to vector<48x32xf32>
    %92 = arith.mulf %87, %91 : vector<48x32xf32>
    %93 = vector.broadcast %72 : vector<1x32xf32> to vector<48x32xf32>
    %94 = arith.mulf %92, %93 : vector<48x32xf32>
    %95 = vector.broadcast %74 : vector<1x32xf32> to vector<48x32xf32>
    %96 = arith.addf %94, %95 : vector<48x32xf32>
    %97 = arith.truncf %96 : vector<48x32xf32> to vector<48x32xbf16>
    %c0_33 = arith.constant 0 : index
    %c0_34 = arith.constant 0 : index
    %c0_35 = arith.constant 0 : index
    %98 = vector.load %arg9[%c0_33, %c0_34, %c0_35] : memref<1x32x64xbf16, #tpu.memory_space<vmem>>, vector<1x32x64xbf16>
    %99 = vector.shape_cast %98 : vector<1x32x64xbf16> to vector<32x64xbf16>
    %cst_36 = arith.constant dense<0.000000e+00> : vector<48x64xf32>
    %100 = tpu.matmul %97, %99, %cst_36 {dimension_numbers = #tpu.dot_dimension_numbers<[1], [0], [0], [1], [0, 0, 1, 1], [], []>} : vector<48x32xbf16>, vector<32x64xbf16>, vector<48x64xf32> -> vector<48x64xf32>
    %c0_37 = arith.constant 0 : index
    %c0_38 = arith.constant 0 : index
    %c0_39 = arith.constant 0 : index
    %101 = vector.load %arg10[%c0_37, %c0_38, %c0_39] : memref<1x1x64xf32, #tpu.memory_space<vmem>>, vector<1x1x64xf32>
    %102 = vector.shape_cast %101 : vector<1x1x64xf32> to vector<1x64xf32>
    %103 = vector.broadcast %102 : vector<1x64xf32> to vector<48x64xf32>
    %104 = arith.addf %100, %103 : vector<48x64xf32>
    %105 = arith.mulf %104, %104 : vector<48x64xf32>
    %106 = arith.mulf %104, %105 : vector<48x64xf32>
    %cst_40 = arith.constant 4.471500e-02 : f32
    %107 = vector.broadcast %cst_40 : f32 to vector<48x64xf32>
    %108 = arith.mulf %107, %106 : vector<48x64xf32>
    %109 = arith.addf %104, %108 : vector<48x64xf32>
    %cst_41 = arith.constant 0.797884583 : f32
    %110 = vector.broadcast %cst_41 : f32 to vector<48x64xf32>
    %111 = arith.mulf %110, %109 : vector<48x64xf32>
    %112 = math.tanh %111 : vector<48x64xf32>
    %cst_42 = arith.constant 1.000000e+00 : f32
    %113 = vector.broadcast %cst_42 : f32 to vector<48x64xf32>
    %114 = arith.addf %113, %112 : vector<48x64xf32>
    %cst_43 = arith.constant 5.000000e-01 : f32
    %115 = vector.broadcast %cst_43 : f32 to vector<48x64xf32>
    %116 = arith.mulf %115, %114 : vector<48x64xf32>
    %117 = arith.mulf %104, %116 : vector<48x64xf32>
    %118 = arith.truncf %117 : vector<48x64xf32> to vector<48x64xbf16>
    %c0_44 = arith.constant 0 : index
    %c0_45 = arith.constant 0 : index
    %c0_46 = arith.constant 0 : index
    %119 = vector.load %arg11[%c0_44, %c0_45, %c0_46] : memref<1x64x32xbf16, #tpu.memory_space<vmem>>, vector<1x64x32xbf16>
    %120 = vector.shape_cast %119 : vector<1x64x32xbf16> to vector<64x32xbf16>
    %cst_47 = arith.constant dense<0.000000e+00> : vector<48x32xf32>
    %121 = tpu.matmul %118, %120, %cst_47 {dimension_numbers = #tpu.dot_dimension_numbers<[1], [0], [0], [1], [0, 0, 1, 1], [], []>} : vector<48x64xbf16>, vector<64x32xbf16>, vector<48x32xf32> -> vector<48x32xf32>
    %c0_48 = arith.constant 0 : index
    %c0_49 = arith.constant 0 : index
    %c0_50 = arith.constant 0 : index
    %122 = vector.load %arg12[%c0_48, %c0_49, %c0_50] : memref<1x1x32xf32, #tpu.memory_space<vmem>>, vector<1x1x32xf32>
    %123 = vector.shape_cast %122 : vector<1x1x32xf32> to vector<1x32xf32>
    %124 = vector.broadcast %123 : vector<1x32xf32> to vector<48x32xf32>
    %125 = arith.addf %121, %124 : vector<48x32xf32>
    %126 = arith.addf %96, %125 : vector<48x32xf32>
    %c0_51 = arith.constant 0 : index
    %c0_52 = arith.constant 0 : index
    %c0_53 = arith.constant 0 : index
    %127 = vector.load %arg13[%c0_51, %c0_52, %c0_53] : memref<1x1x32xf32, #tpu.memory_space<vmem>>, vector<1x1x32xf32>
    %128 = vector.shape_cast %127 : vector<1x1x32xf32> to vector<1x32xf32>
    %c0_54 = arith.constant 0 : index
    %c0_55 = arith.constant 0 : index
    %c0_56 = arith.constant 0 : index
    %129 = vector.load %arg14[%c0_54, %c0_55, %c0_56] : memref<1x1x32xf32, #tpu.memory_space<vmem>>, vector<1x1x32xf32>
    %130 = vector.shape_cast %129 : vector<1x1x32xf32> to vector<1x32xf32>
    %cst_57 = arith.constant dense<0.000000e+00> : vector<48xf32>
    %131 = vector.multi_reduction <add>, %126, %cst_57 [1] : vector<48x32xf32> to vector<48xf32>
    %132 = vector.shape_cast %131 : vector<48xf32> to vector<48x1xf32>
    %cst_58 = arith.constant 3.200000e+01 : f32
    %133 = vector.broadcast %cst_58 : f32 to vector<48x1xf32>
    %134 = arith.divf %132, %133 : vector<48x1xf32>
    %135 = vector.broadcast %134 : vector<48x1xf32> to vector<48x32xf32>
    %136 = arith.subf %126, %135 : vector<48x32xf32>
    %137 = arith.mulf %136, %136 : vector<48x32xf32>
    %cst_59 = arith.constant dense<0.000000e+00> : vector<48xf32>
    %138 = vector.multi_reduction <add>, %137, %cst_59 [1] : vector<48x32xf32> to vector<48xf32>
    %139 = vector.shape_cast %138 : vector<48xf32> to vector<48x1xf32>
    %cst_60 = arith.constant 3.200000e+01 : f32
    %140 = vector.broadcast %cst_60 : f32 to vector<48x1xf32>
    %141 = arith.divf %139, %140 : vector<48x1xf32>
    %142 = vector.broadcast %134 : vector<48x1xf32> to vector<48x32xf32>
    %143 = arith.subf %126, %142 : vector<48x32xf32>
    %cst_61 = arith.constant 9.99999974E-6 : f32
    %144 = vector.broadcast %cst_61 : f32 to vector<48x1xf32>
    %145 = arith.addf %141, %144 : vector<48x1xf32>
    %146 = math.rsqrt %145 : vector<48x1xf32>
    %147 = vector.broadcast %146 : vector<48x1xf32> to vector<48x32xf32>
    %148 = arith.mulf %143, %147 : vector<48x32xf32>
    %149 = vector.broadcast %128 : vector<1x32xf32> to vector<48x32xf32>
    %150 = arith.mulf %148, %149 : vector<48x32xf32>
    %151 = vector.broadcast %130 : vector<1x32xf32> to vector<48x32xf32>
    %152 = arith.addf %150, %151 : vector<48x32xf32>
    %c0_62 = arith.constant 0 : index
    %c0_63 = arith.constant 0 : index
    %153 = vector.load %arg18[%c0_62, %c0_63] : memref<48x32xf32, #tpu.memory_space<vmem>>, vector<48x32xf32>
    tpu.vector_store %arg18[%c0_62, %c0_63], %152 {strides = array<i32>} : memref<48x32xf32, #tpu.memory_space<vmem>>, vector<48x32xf32>,
    %c1_i32 = arith.constant 1 : i32
    %154 = arith.cmpi eq, %arg0, %c1_i32 : i32
    %155 = arith.extui %154 : i1 to i32
    %c0_i32_64 = arith.constant 0 : i32
    %156 = arith.cmpi ne, %155, %c0_i32_64 : i32
    scf.if %156 {
      %157 = vector.shape_cast %152 : vector<48x32xf32> to vector<6x8x32xf32>
      %158 = vector.extract_strided_slice %157 {offsets = [0, 0, 0], sizes = [6, 1, 32], strides = [1, 1, 1]} : vector<6x8x32xf32> to vector<6x1x32xf32>
      %159 = vector.shape_cast %158 : vector<6x1x32xf32> to vector<6x32xf32>
      %160 = vector.extract_strided_slice %159 {offsets = [0, 0], sizes = [2, 32], strides = [1, 1]} : vector<6x32xf32> to vector<2x32xf32>
      %161 = vector.extract_strided_slice %159 {offsets = [2, 0], sizes = [2, 32], strides = [1, 1]} : vector<6x32xf32> to vector<2x32xf32>
      %162 = vector.extract_strided_slice %159 {offsets = [4, 0], sizes = [2, 32], strides = [1, 1]} : vector<6x32xf32> to vector<2x32xf32>
      %163 = arith.subf %161, %162 : vector<2x32xf32>
      %164 = arith.subf %160, %163 : vector<2x32xf32>
      %165 = tpu.concatenate %164, %163 in 0 : vector<2x32xf32>, vector<2x32xf32> -> vector<4x32xf32>
      %c0_65 = arith.constant 0 : index
      %c0_66 = arith.constant 0 : index
      %166 = vector.load %arg15[%c0_65, %c0_66] : memref<32x128xf32, #tpu.memory_space<vmem>>, vector<32x128xf32>
      %cst_67 = arith.constant dense<0.000000e+00> : vector<4x128xf32>
      %167 = tpu.matmul %165, %166, %cst_67 {dimension_numbers = #tpu.dot_dimension_numbers<[1], [0], [0], [1], [0, 0, 1, 1], [], []>} : vector<4x32xf32>, vector<32x128xf32>, vector<4x128xf32> -> vector<4x128xf32>
      %c0_68 = arith.constant 0 : index
      %c0_69 = arith.constant 0 : index
      %168 = vector.load %arg16[%c0_68, %c0_69] : memref<1x128xf32, #tpu.memory_space<vmem>>, vector<1x128xf32>
      %169 = vector.broadcast %168 : vector<1x128xf32> to vector<4x128xf32>
      %170 = arith.addf %167, %169 : vector<4x128xf32>
      %171 = tpu.iota {dimensions = array<i32: 1>} : vector<4x128xi32>
      %c0_i32_70 = arith.constant 0 : i32
      %172 = vector.broadcast %c0_i32_70 : i32 to vector<4x128xi32>
      %173 = arith.cmpi eq, %171, %172 : vector<4x128xi32>
      %c4_i32 = arith.constant 4 : i32
      %174 = vector.broadcast %c4_i32 : i32 to vector<4x128xi32>
      %175 = arith.cmpi eq, %171, %174 : vector<4x128xi32>
      %176 = arith.ori %173, %175 : vector<4x128xi1>
      %177 = arith.negf %170 : vector<4x128xf32>
      %178 = math.exp %177 : vector<4x128xf32>
      %cst_71 = arith.constant 1.000000e+00 : f32
      %179 = vector.broadcast %cst_71 : f32 to vector<4x128xf32>
      %180 = arith.addf %179, %178 : vector<4x128xf32>
      %181 = arith.divf %179, %180 : vector<4x128xf32>
      %182 = arith.select %176, %181, %170 : vector<4x128xi1>, vector<4x128xf32>
      %c0_72 = arith.constant 0 : index
      %c0_73 = arith.constant 0 : index
      %183 = vector.load %arg17[%c0_72, %c0_73] : memref<4x128xf32, #tpu.memory_space<vmem>>, vector<4x128xf32>
      tpu.vector_store %arg17[%c0_72, %c0_73], %182 {strides = array<i32>} : memref<4x128xf32, #tpu.memory_space<vmem>>, vector<4x128xf32>,
    } else {
    }
    return
  }
  func.func @transform_1(%arg0: i32) -> (i32, i32, i32) {
    %c0_i32 = arith.constant 0 : i32
    %c0_i32_0 = arith.constant 0 : i32
    %c0_i32_1 = arith.constant 0 : i32
    %c0_i32_2 = arith.constant 0 : i32
    return %c0_i32, %c0_i32_0, %c0_i32_1 : i32, i32, i32
  }
  func.func @transform_2(%arg0: i32) -> (i32, i32, i32) {
    %c0_i32 = arith.constant 0 : i32
    %c0_i32_0 = arith.constant 0 : i32
    %c0_i32_1 = arith.constant 0 : i32
    return %arg0, %c0_i32, %c0_i32_0 : i32, i32, i32
  }
  func.func @transform_3(%arg0: i32) -> (i32, i32, i32) {
    %c0_i32 = arith.constant 0 : i32
    %c0_i32_0 = arith.constant 0 : i32
    %c0_i32_1 = arith.constant 0 : i32
    return %arg0, %c0_i32, %c0_i32_0 : i32, i32, i32
  }
  func.func @transform_4(%arg0: i32) -> (i32, i32, i32) {
    %c0_i32 = arith.constant 0 : i32
    %c0_i32_0 = arith.constant 0 : i32
    %c0_i32_1 = arith.constant 0 : i32
    return %arg0, %c0_i32, %c0_i32_0 : i32, i32, i32
  }
  func.func @transform_5(%arg0: i32) -> (i32, i32, i32) {
    %c0_i32 = arith.constant 0 : i32
    %c0_i32_0 = arith.constant 0 : i32
    %c0_i32_1 = arith.constant 0 : i32
    return %arg0, %c0_i32, %c0_i32_0 : i32, i32, i32
  }
  func.func @transform_6(%arg0: i32) -> (i32, i32, i32) {
    %c0_i32 = arith.constant 0 : i32
    %c0_i32_0 = arith.constant 0 : i32
    %c0_i32_1 = arith.constant 0 : i32
    return %arg0, %c0_i32, %c0_i32_0 : i32, i32, i32
  }
  func.func @transform_7(%arg0: i32) -> (i32, i32, i32) {
    %c0_i32 = arith.constant 0 : i32
    %c0_i32_0 = arith.constant 0 : i32
    %c0_i32_1 = arith.constant 0 : i32
    return %arg0, %c0_i32, %c0_i32_0 : i32, i32, i32
  }
  func.func @transform_8(%arg0: i32) -> (i32, i32, i32) {
    %c0_i32 = arith.constant 0 : i32
    %c0_i32_0 = arith.constant 0 : i32
    %c0_i32_1 = arith.constant 0 : i32
    return %arg0, %c0_i32, %c0_i32_0 : i32, i32, i32
  }
  func.func @transform_9(%arg0: i32) -> (i32, i32, i32) {
    %c0_i32 = arith.constant 0 : i32
    %c0_i32_0 = arith.constant 0 : i32
    %c0_i32_1 = arith.constant 0 : i32
    return %arg0, %c0_i32, %c0_i32_0 : i32, i32, i32
  }
  func.func @transform_10(%arg0: i32) -> (i32, i32, i32) {
    %c0_i32 = arith.constant 0 : i32
    %c0_i32_0 = arith.constant 0 : i32
    %c0_i32_1 = arith.constant 0 : i32
    return %arg0, %c0_i32, %c0_i32_0 : i32, i32, i32
  }
  func.func @transform_11(%arg0: i32) -> (i32, i32, i32) {
    %c0_i32 = arith.constant 0 : i32
    %c0_i32_0 = arith.constant 0 : i32
    %c0_i32_1 = arith.constant 0 : i32
    return %arg0, %c0_i32, %c0_i32_0 : i32, i32, i32
  }
  func.func @transform_12(%arg0: i32) -> (i32, i32, i32) {
    %c0_i32 = arith.constant 0 : i32
    %c0_i32_0 = arith.constant 0 : i32
    %c0_i32_1 = arith.constant 0 : i32
    return %arg0, %c0_i32, %c0_i32_0 : i32, i32, i32
  }
  func.func @transform_13(%arg0: i32) -> (i32, i32, i32) {
    %c0_i32 = arith.constant 0 : i32
    %c0_i32_0 = arith.constant 0 : i32
    %c0_i32_1 = arith.constant 0 : i32
    return %arg0, %c0_i32, %c0_i32_0 : i32, i32, i32
  }
  func.func @transform_14(%arg0: i32) -> (i32, i32) {
    %c0_i32 = arith.constant 0 : i32
    %c0_i32_0 = arith.constant 0 : i32
    %c0_i32_1 = arith.constant 0 : i32
    return %c0_i32, %c0_i32_0 : i32, i32
  }
  func.func @transform_15(%arg0: i32) -> (i32, i32) {
    %c0_i32 = arith.constant 0 : i32
    %c0_i32_0 = arith.constant 0 : i32
    %c0_i32_1 = arith.constant 0 : i32
    return %c0_i32, %c0_i32_0 : i32, i32
  }
  func.func @transform_16(%arg0: i32) -> (i32, i32) {
    %c0_i32 = arith.constant 0 : i32
    %c0_i32_0 = arith.constant 0 : i32
    %c0_i32_1 = arith.constant 0 : i32
    return %c0_i32, %c0_i32_0 : i32, i32
  }
}

</mosaic_0001>

<llo_original>
// kernel: tpu_custom_call.1
$region0: #{tpu_custom_call.1}
  #allocation0 [shape = 'u32[]', space=smem, size = 0x4, offset = 0x4, fixed_abs, tag = 'smem constant byte address 0x4 - core index']
  #allocation1 [shape = 'u32[144,128]{1,0:T(1,128)}', space=vmem, size = 0x12000, scoped, tag = 'internal scratch']
  #allocation2 [shape = 'f32[48,32]{1,0:T(8,128)}', space=vmem, size = 0x6000, scoped, tag = 'scratch operand']
  #allocation3 [shape = 's32[1]{0}', space=sflag, size = 0x4, scoped, tag = 'scratch operand']
  #allocation6 [shape = 's32[]', space=sflag, size = 0x4, offset = 0, fixed_abs, tag = 'sflag constant byte address 0x0 - dummy sync flag']
  %s0 = inlined_call_operand.vmem [shape: f32[48,32], index: 0, kind: input, shape index: {}]
  %s1 = inlined_call_operand.vmem [shape: f32[12,1,8], index: 1, kind: input, shape index: {}]
  %s2 = inlined_call_operand.vmem [shape: bf16[2,32,96], index: 2, kind: input, shape index: {}]
  %s3 = inlined_call_operand.vmem [shape: f32[2,1,96], index: 3, kind: input, shape index: {}]
  %s4 = inlined_call_operand.vmem [shape: bf16[2,32,32], index: 4, kind: input, shape index: {}]
  %s5 = inlined_call_operand.vmem [shape: f32[2,1,32], index: 5, kind: input, shape index: {}]
  %s6 = inlined_call_operand.vmem [shape: f32[2,1,32], index: 6, kind: input, shape index: {}]
  %s7 = inlined_call_operand.vmem [shape: f32[2,1,32], index: 7, kind: input, shape index: {}]
  %s8 = inlined_call_operand.vmem [shape: bf16[2,32,64], index: 8, kind: input, shape index: {}]
  %s9 = inlined_call_operand.vmem [shape: f32[2,1,64], index: 9, kind: input, shape index: {}]
  %s10 = inlined_call_operand.vmem [shape: bf16[2,64,32], index: 10, kind: input, shape index: {}]
  %s11 = inlined_call_operand.vmem [shape: f32[2,1,32], index: 11, kind: input, shape index: {}]
  %s12 = inlined_call_operand.vmem [shape: f32[2,1,32], index: 12, kind: input, shape index: {}]
  %s13 = inlined_call_operand.vmem [shape: f32[2,1,32], index: 13, kind: input, shape index: {}]
  %s14 = inlined_call_operand.vmem [shape: f32[32,128], index: 14, kind: input, shape index: {}]
  %s15 = inlined_call_operand.vmem [shape: f32[1,128], index: 15, kind: input, shape index: {}]
  %s16 = inlined_call_operand.hbm [shape: f32[4,128], index: 16, kind: output, shape index: {}]
  %s17 = sld [smem:[#allocation0]]
  $region135: #{tpu_custom_call.1} parent=0
    _
  %s19 = ssub.s32 1, %s17
  %s20 = scalar_select 0, %s19, %s17
  $region1: #{tpu_custom_call.1} parent=0
    #allocation4 [shape = 'u8[2048]{0}', space=vmem, size = 0x800, scoped, tag = 'output window, operand 0, single buffered']
    #allocation5 [shape = 's32[2]{0}', space=sflag, size = 0x8, scoped, tag = 'scoped memory for tpu_custom_call.1']
    %21 = vsyncpa [#allocation5], 0
    loop: start=0, step=1, limit=4
    $region2: #{tpu_custom_call.1} parent=1 // loop_pre_header
      _
    $region3: #{tpu_custom_call.1} parent=1 // loop_header
      %s23 = sphi 0, %s27
      %p24 = scmp.ge.s32.totalorder %s23, 4
      %s31 = sphi 0, %s31
      %s33 = sphi 0, %s31
      %s34 = sphi 0, %s33
      %s48 = sphi 0, %s34
      %s54 = sphi 0, %s56
      %s57 = sphi 0, %s54
      %s58 = sphi 0, %s57
      %s74 = sphi 0, %s58
      %s80 = sphi 0, %s82
      %s83 = sphi 0, %s80
      %s84 = sphi 0, %s83
      %s100 = sphi 0, %s84
      %s106 = sphi 0, %s108
      %s109 = sphi 0, %s106
      %s110 = sphi 0, %s109
      %s126 = sphi 0, %s110
      %s132 = sphi 0, %s134
      %s135 = sphi 0, %s132
      %s136 = sphi 0, %s135
      %s152 = sphi 0, %s136
      %s158 = sphi 0, %s160
      %s161 = sphi 0, %s158
      %s162 = sphi 0, %s161
      %s178 = sphi 0, %s162
      %s184 = sphi 0, %s186
      %s187 = sphi 0, %s184
      %s188 = sphi 0, %s187
      %s204 = sphi 0, %s188
      %s210 = sphi 0, %s212
      %s213 = sphi 0, %s210
      %s214 = sphi 0, %s213
      %s230 = sphi 0, %s214
      %s236 = sphi 0, %s238
      %s239 = sphi 0, %s236
      %s240 = sphi 0, %s239
      %s256 = sphi 0, %s240
      %s262 = sphi 0, %s264
      %s265 = sphi 0, %s262
      %s266 = sphi 0, %s265
      %s282 = sphi 0, %s266
      %s288 = sphi 0, %s290
      %s291 = sphi 0, %s288
      %s292 = sphi 0, %s291
      %s308 = sphi 0, %s292
      %s314 = sphi 0, %s316
      %s317 = sphi 0, %s314
      %s318 = sphi 0, %s317
      %s334 = sphi 0, %s318
      %s340 = sphi 0, %s342
      %s343 = sphi 0, %s340
      %s344 = sphi 0, %s343
      %s360 = sphi 0, %s344
      %s364 = sphi 0, %s364
      %s366 = sphi 0, %s364
      %s367 = sphi 0, %s366
      %s381 = sphi 0, %s367
      %s385 = sphi 0, %s385
      %s387 = sphi 0, %s385
      %s388 = sphi 0, %s387
      %s402 = sphi 0, %s388
      %s406 = sphi 0, %s406
      %s408 = sphi 0, %s406
      %s409 = sphi 0, %s408
      %s423 = sphi 0, %s409
    $region4: #{tpu_custom_call.1} parent=1 // loop_header_branch
      %26 = sbr.rel (%p24) target = $region8
    $region5: #{tpu_custom_call.1} parent=1 // loop_body
      %s28 = ssub.s32 %s23, 1
      %s29 = ssub.s32 %s23, 2
      %s30 = sadd.s32 %s23, 1
      %s32 = sadd.s32 %s31, 1
      %p35 = scmp.eq.s32.totalorder %s23, 1
      %p36 = scmp.ne.s32.totalorder %s31, %s33
      %p37 = scmp.eq.s32.totalorder %s23, 0
      %p38 = por %p36, %p37
      %p39 = scmp.ne.s32.totalorder %s31, %s33
      %p40 = scmp.eq.s32.totalorder %s28, 1
      %p41 = por %p39, %p40
      %p42 = scmp.ne.s32.totalorder %s33, %s34
      %p43 = scmp.eq.s32.totalorder %s28, 0
      %p44 = por %p42, %p43
      %p45 = scmp.ne.s32.totalorder %s33, %s34
      %p46 = scmp.eq.s32.totalorder %s29, 1
      %p47 = por %p45, %p46
      %p49 = scmp.ne.s32.totalorder %s34, %s48
      %p50 = scmp.eq.s32.totalorder %s29, 0
      %p51 = por %p49, %p50
      %s52 = ssub.s32 %s23, %s30
      %p53 = scmp.eq.s32.totalorder %s52, 0
      %s55 = sadd.s32 %s54, 1
      %s56 = scalar_select %p53, %s54, %s55
      %p59 = pneg %p53
      %p60 = scmp.eq.s32.totalorder %s23, 1
      %p61 = por %p59, %p60
      %p62 = scmp.ne.s32.totalorder %s54, %s57
      %p63 = scmp.eq.s32.totalorder %s23, 0
      %p64 = por %p62, %p63
      %p65 = scmp.ne.s32.totalorder %s54, %s57
      %p66 = scmp.eq.s32.totalorder %s28, 1
      %p67 = por %p65, %p66
      %p68 = scmp.ne.s32.totalorder %s57, %s58
      %p69 = scmp.eq.s32.totalorder %s28, 0
      %p70 = por %p68, %p69
      %p71 = scmp.ne.s32.totalorder %s57, %s58
      %p72 = scmp.eq.s32.totalorder %s29, 1
      %p73 = por %p71, %p72
      %p75 = scmp.ne.s32.totalorder %s58, %s74
      %p76 = scmp.eq.s32.totalorder %s29, 0
      %p77 = por %p75, %p76
      %s78 = ssub.s32 %s23, %s30
      %p79 = scmp.eq.s32.totalorder %s78, 0
      %s81 = sadd.s32 %s80, 1
      %s82 = scalar_select %p79, %s80, %s81
      %p85 = pneg %p79
      %p86 = scmp.eq.s32.totalorder %s23, 1
      %p87 = por %p85, %p86
      %p88 = scmp.ne.s32.totalorder %s80, %s83
      %p89 = scmp.eq.s32.totalorder %s23, 0
      %p90 = por %p88, %p89
      %p91 = scmp.ne.s32.totalorder %s80, %s83
      %p92 = scmp.eq.s32.totalorder %s28, 1
      %p93 = por %p91, %p92
      %p94 = scmp.ne.s32.totalorder %s83, %s84
      %p95 = scmp.eq.s32.totalorder %s28, 0
      %p96 = por %p94, %p95
      %p97 = scmp.ne.s32.totalorder %s83, %s84
      %p98 = scmp.eq.s32.totalorder %s29, 1
      %p99 = por %p97, %p98
      %p101 = scmp.ne.s32.totalorder %s84, %s100
      %p102 = scmp.eq.s32.totalorder %s29, 0
      %p103 = por %p101, %p102
      %s104 = ssub.s32 %s23, %s30
      %p105 = scmp.eq.s32.totalorder %s104, 0
      %s107 = sadd.s32 %s106, 1
      %s108 = scalar_select %p105, %s106, %s107
      %p111 = pneg %p105
      %p112 = scmp.eq.s32.totalorder %s23, 1
      %p113 = por %p111, %p112
      %p114 = scmp.ne.s32.totalorder %s106, %s109
      %p115 = scmp.eq.s32.totalorder %s23, 0
      %p116 = por %p114, %p115
      %p117 = scmp.ne.s32.totalorder %s106, %s109
      %p118 = scmp.eq.s32.totalorder %s28, 1
      %p119 = por %p117, %p118
      %p120 = scmp.ne.s32.totalorder %s109, %s110
      %p121 = scmp.eq.s32.totalorder %s28, 0
      %p122 = por %p120, %p121
      %p123 = scmp.ne.s32.totalorder %s109, %s110
      %p124 = scmp.eq.s32.totalorder %s29, 1
      %p125 = por %p123, %p124
      %p127 = scmp.ne.s32.totalorder %s110, %s126
      %p128 = scmp.eq.s32.totalorder %s29, 0
      %p129 = por %p127, %p128
      %s130 = ssub.s32 %s23, %s30
      %p131 = scmp.eq.s32.totalorder %s130, 0
      %s133 = sadd.s32 %s132, 1
      %s134 = scalar_select %p131, %s132, %s133
      %p137 = pneg %p131
      %p138 = scmp.eq.s32.totalorder %s23, 1
      %p139 = por %p137, %p138
      %p140 = scmp.ne.s32.totalorder %s132, %s135
      %p141 = scmp.eq.s32.totalorder %s23, 0
      %p142 = por %p140, %p141
      %p143 = scmp.ne.s32.totalorder %s132, %s135
      %p144 = scmp.eq.s32.totalorder %s28, 1
      %p145 = por %p143, %p144
      %p146 = scmp.ne.s32.totalorder %s135, %s136
      %p147 = scmp.eq.s32.totalorder %s28, 0
      %p148 = por %p146, %p147
      %p149 = scmp.ne.s32.totalorder %s135, %s136
      %p150 = scmp.eq.s32.totalorder %s29, 1
      %p151 = por %p149, %p150
      %p153 = scmp.ne.s32.totalorder %s136, %s152
      %p154 = scmp.eq.s32.totalorder %s29, 0
      %p155 = por %p153, %p154
      %s156 = ssub.s32 %s23, %s30
      %p157 = scmp.eq.s32.totalorder %s156, 0
      %s159 = sadd.s32 %s158, 1
      %s160 = scalar_select %p157, %s158, %s159
      %p163 = pneg %p157
      %p164 = scmp.eq.s32.totalorder %s23, 1
      %p165 = por %p163, %p164
      %p166 = scmp.ne.s32.totalorder %s158, %s161
      %p167 = scmp.eq.s32.totalorder %s23, 0
      %p168 = por %p166, %p167
      %p169 = scmp.ne.s32.totalorder %s158, %s161
      %p170 = scmp.eq.s32.totalorder %s28, 1
      %p171 = por %p169, %p170
      %p172 = scmp.ne.s32.totalorder %s161, %s162
      %p173 = scmp.eq.s32.totalorder %s28, 0
      %p174 = por %p172, %p173
      %p175 = scmp.ne.s32.totalorder %s161, %s162
      %p176 = scmp.eq.s32.totalorder %s29, 1
      %p177 = por %p175, %p176
      %p179 = scmp.ne.s32.totalorder %s162, %s178
      %p180 = scmp.eq.s32.totalorder %s29, 0
      %p181 = por %p179, %p180
      %s182 = ssub.s32 %s23, %s30
      %p183 = scmp.eq.s32.totalorder %s182, 0
      %s185 = sadd.s32 %s184, 1
      %s186 = scalar_select %p183, %s184, %s185
      %p189 = pneg %p183
      %p190 = scmp.eq.s32.totalorder %s23, 1
      %p191 = por %p189, %p190
      %p192 = scmp.ne.s32.totalorder %s184, %s187
      %p193 = scmp.eq.s32.totalorder %s23, 0
      %p194 = por %p192, %p193
      %p195 = scmp.ne.s32.totalorder %s184, %s187
      %p196 = scmp.eq.s32.totalorder %s28, 1
      %p197 = por %p195, %p196
      %p198 = scmp.ne.s32.totalorder %s187, %s188
      %p199 = scmp.eq.s32.totalorder %s28, 0
      %p200 = por %p198, %p199
      %p201 = scmp.ne.s32.totalorder %s187, %s188
      %p202 = scmp.eq.s32.totalorder %s29, 1
      %p203 = por %p201, %p202
      %p205 = scmp.ne.s32.totalorder %s188, %s204
      %p206 = scmp.eq.s32.totalorder %s29, 0
      %p207 = por %p205, %p206
      %s208 = ssub.s32 %s23, %s30
      %p209 = scmp.eq.s32.totalorder %s208, 0
      %s211 = sadd.s32 %s210, 1
      %s212 = scalar_select %p209, %s210, %s211
      %p215 = pneg %p209
      %p216 = scmp.eq.s32.totalorder %s23, 1
      %p217 = por %p215, %p216
      %p218 = scmp.ne.s32.totalorder %s210, %s213
      %p219 = scmp.eq.s32.totalorder %s23, 0
      %p220 = por %p218, %p219
      %p221 = scmp.ne.s32.totalorder %s210, %s213
      %p222 = scmp.eq.s32.totalorder %s28, 1
      %p223 = por %p221, %p222
      %p224 = scmp.ne.s32.totalorder %s213, %s214
      %p225 = scmp.eq.s32.totalorder %s28, 0
      %p226 = por %p224, %p225
      %p227 = scmp.ne.s32.totalorder %s213, %s214
      %p228 = scmp.eq.s32.totalorder %s29, 1
      %p229 = por %p227, %p228
      %p231 = scmp.ne.s32.totalorder %s214, %s230
      %p232 = scmp.eq.s32.totalorder %s29, 0
      %p233 = por %p231, %p232
      %s234 = ssub.s32 %s23, %s30
      %p235 = scmp.eq.s32.totalorder %s234, 0
      %s237 = sadd.s32 %s236, 1
      %s238 = scalar_select %p235, %s236, %s237
      %p241 = pneg %p235
      %p242 = scmp.eq.s32.totalorder %s23, 1
      %p243 = por %p241, %p242
      %p244 = scmp.ne.s32.totalorder %s236, %s239
      %p245 = scmp.eq.s32.totalorder %s23, 0
      %p246 = por %p244, %p245
      %p247 = scmp.ne.s32.totalorder %s236, %s239
      %p248 = scmp.eq.s32.totalorder %s28, 1
      %p249 = por %p247, %p248
      %p250 = scmp.ne.s32.totalorder %s239, %s240
      %p251 = scmp.eq.s32.totalorder %s28, 0
      %p252 = por %p250, %p251
      %p253 = scmp.ne.s32.totalorder %s239, %s240
      %p254 = scmp.eq.s32.totalorder %s29, 1
      %p255 = por %p253, %p254
      %p257 = scmp.ne.s32.totalorder %s240, %s256
      %p258 = scmp.eq.s32.totalorder %s29, 0
      %p259 = por %p257, %p258
      %s260 = ssub.s32 %s23, %s30
      %p261 = scmp.eq.s32.totalorder %s260, 0
      %s263 = sadd.s32 %s262, 1
      %s264 = scalar_select %p261, %s262, %s263
      %p267 = pneg %p261
      %p268 = scmp.eq.s32.totalorder %s23, 1
      %p269 = por %p267, %p268
      %p270 = scmp.ne.s32.totalorder %s262, %s265
      %p271 = scmp.eq.s32.totalorder %s23, 0
      %p272 = por %p270, %p271
      %p273 = scmp.ne.s32.totalorder %s262, %s265
      %p274 = scmp.eq.s32.totalorder %s28, 1
      %p275 = por %p273, %p274
      %p276 = scmp.ne.s32.totalorder %s265, %s266
      %p277 = scmp.eq.s32.totalorder %s28, 0
      %p278 = por %p276, %p277
      %p279 = scmp.ne.s32.totalorder %s265, %s266
      %p280 = scmp.eq.s32.totalorder %s29, 1
      %p281 = por %p279, %p280
      %p283 = scmp.ne.s32.totalorder %s266, %s282
      %p284 = scmp.eq.s32.totalorder %s29, 0
      %p285 = por %p283, %p284
      %s286 = ssub.s32 %s23, %s30
      %p287 = scmp.eq.s32.totalorder %s286, 0
      %s289 = sadd.s32 %s288, 1
      %s290 = scalar_select %p287, %s288, %s289
      %p293 = pneg %p287
      %p294 = scmp.eq.s32.totalorder %s23, 1
      %p295 = por %p293, %p294
      %p296 = scmp.ne.s32.totalorder %s288, %s291
      %p297 = scmp.eq.s32.totalorder %s23, 0
      %p298 = por %p296, %p297
      %p299 = scmp.ne.s32.totalorder %s288, %s291
      %p300 = scmp.eq.s32.totalorder %s28, 1
      %p301 = por %p299, %p300
      %p302 = scmp.ne.s32.totalorder %s291, %s292
      %p303 = scmp.eq.s32.totalorder %s28, 0
      %p304 = por %p302, %p303
      %p305 = scmp.ne.s32.totalorder %s291, %s292
      %p306 = scmp.eq.s32.totalorder %s29, 1
      %p307 = por %p305, %p306
      %p309 = scmp.ne.s32.totalorder %s292, %s308
      %p310 = scmp.eq.s32.totalorder %s29, 0
      %p311 = por %p309, %p310
      %s312 = ssub.s32 %s23, %s30
      %p313 = scmp.eq.s32.totalorder %s312, 0
      %s315 = sadd.s32 %s314, 1
      %s316 = scalar_select %p313, %s314, %s315
      %p319 = pneg %p313
      %p320 = scmp.eq.s32.totalorder %s23, 1
      %p321 = por %p319, %p320
      %p322 = scmp.ne.s32.totalorder %s314, %s317
      %p323 = scmp.eq.s32.totalorder %s23, 0
      %p324 = por %p322, %p323
      %p325 = scmp.ne.s32.totalorder %s314, %s317
      %p326 = scmp.eq.s32.totalorder %s28, 1
      %p327 = por %p325, %p326
      %p328 = scmp.ne.s32.totalorder %s317, %s318
      %p329 = scmp.eq.s32.totalorder %s28, 0
      %p330 = por %p328, %p329
      %p331 = scmp.ne.s32.totalorder %s317, %s318
      %p332 = scmp.eq.s32.totalorder %s29, 1
      %p333 = por %p331, %p332
      %p335 = scmp.ne.s32.totalorder %s318, %s334
      %p336 = scmp.eq.s32.totalorder %s29, 0
      %p337 = por %p335, %p336
      %s338 = ssub.s32 %s23, %s30
      %p339 = scmp.eq.s32.totalorder %s338, 0
      %s341 = sadd.s32 %s340, 1
      %s342 = scalar_select %p339, %s340, %s341
      %p345 = pneg %p339
      %p346 = scmp.eq.s32.totalorder %s23, 1
      %p347 = por %p345, %p346
      %p348 = scmp.ne.s32.totalorder %s340, %s343
      %p349 = scmp.eq.s32.totalorder %s23, 0
      %p350 = por %p348, %p349
      %p351 = scmp.ne.s32.totalorder %s340, %s343
      %p352 = scmp.eq.s32.totalorder %s28, 1
      %p353 = por %p351, %p352
      %p354 = scmp.ne.s32.totalorder %s343, %s344
      %p355 = scmp.eq.s32.totalorder %s28, 0
      %p356 = por %p354, %p355
      %p357 = scmp.ne.s32.totalorder %s343, %s344
      %p358 = scmp.eq.s32.totalorder %s29, 1
      %p359 = por %p357, %p358
      %p361 = scmp.ne.s32.totalorder %s344, %s360
      %p362 = scmp.eq.s32.totalorder %s29, 0
      %p363 = por %p361, %p362
      %s365 = sadd.s32 %s364, 1
      %p368 = scmp.eq.s32.totalorder %s23, 1
      %p369 = scmp.ne.s32.totalorder %s364, %s366
      %p370 = scmp.eq.s32.totalorder %s23, 0
      %p371 = por %p369, %p370
      %p372 = scmp.ne.s32.totalorder %s364, %s366
      %p373 = scmp.eq.s32.totalorder %s28, 1
      %p374 = por %p372, %p373
      %p375 = scmp.ne.s32.totalorder %s366, %s367
      %p376 = scmp.eq.s32.totalorder %s28, 0
      %p377 = por %p375, %p376
      %p378 = scmp.ne.s32.totalorder %s366, %s367
      %p379 = scmp.eq.s32.totalorder %s29, 1
      %p380 = por %p378, %p379
      %p382 = scmp.ne.s32.totalorder %s367, %s381
      %p383 = scmp.eq.s32.totalorder %s29, 0
      %p384 = por %p382, %p383
      %s386 = sadd.s32 %s385, 1
      %p389 = scmp.eq.s32.totalorder %s23, 1
      %p390 = scmp.ne.s32.totalorder %s385, %s387
      %p391 = scmp.eq.s32.totalorder %s23, 0
      %p392 = por %p390, %p391
      %p393 = scmp.ne.s32.totalorder %s385, %s387
      %p394 = scmp.eq.s32.totalorder %s28, 1
      %p395 = por %p393, %p394
      %p396 = scmp.ne.s32.totalorder %s387, %s388
      %p397 = scmp.eq.s32.totalorder %s28, 0
      %p398 = por %p396, %p397
      %p399 = scmp.ne.s32.totalorder %s387, %s388
      %p400 = scmp.eq.s32.totalorder %s29, 1
      %p401 = por %p399, %p400
      %p403 = scmp.ne.s32.totalorder %s388, %s402
      %p404 = scmp.eq.s32.totalorder %s29, 0
      %p405 = por %p403, %p404
      %s407 = sadd.s32 %s406, 1
      %p410 = scmp.eq.s32.totalorder %s23, 1
      %p411 = scmp.ne.s32.totalorder %s406, %s408
      %p412 = scmp.eq.s32.totalorder %s23, 0
      %p413 = por %p411, %p412
      %p414 = scmp.ne.s32.totalorder %s406, %s408
      %p415 = scmp.eq.s32.totalorder %s28, 1
      %p416 = por %p414, %p415
      %p417 = scmp.ne.s32.totalorder %s408, %s409
      %p418 = scmp.eq.s32.totalorder %s28, 0
      %p419 = por %p417, %p418
      %p420 = scmp.ne.s32.totalorder %s408, %s409
      %p421 = scmp.eq.s32.totalorder %s29, 1
      %p422 = por %p420, %p421
      %p424 = scmp.ne.s32.totalorder %s409, %s423
      %p425 = scmp.eq.s32.totalorder %s29, 0
      %p426 = por %p424, %p425
      %p427 = scmp.le.s32.totalorder 1, %s23
      %p428 = scmp.lt.s32.totalorder %s23, 3
      %p429 = pnand %p427, %p428
      %p430 = pneg %p429
      // Predicated region
      $region9: #{tpu_custom_call.1} parent=5 // pred_check
        _
      $region10: #{tpu_custom_call.1} parent=5 // pred_check_branch
        %432 = sbr.rel (%p429) target = $region12
      $region11: #{tpu_custom_call.1} parent=5 // pred_region
        %s433 = ssub.s32 %s23, 1
        // Predicated region
        $region13: #{tpu_custom_call.1} parent=11 // pred_check
          %p434 = pneg %p44
        $region14: #{tpu_custom_call.1} parent=11 // pred_check_branch
          %436 = sbr.rel (%p434) target = $region16
        $region15: #{tpu_custom_call.1} parent=11 // pred_region
          _
        $region16: #{tpu_custom_call.1} parent=11 // pred_fallthru
          _
        // Predicated region
        $region17: #{tpu_custom_call.1} parent=11 // pred_check
          %p437 = pneg %p377
        $region18: #{tpu_custom_call.1} parent=11 // pred_check_branch
          %439 = sbr.rel (%p437) target = $region20
        $region19: #{tpu_custom_call.1} parent=11 // pred_region
          _
        $region20: #{tpu_custom_call.1} parent=11 // pred_fallthru
          _
        // Predicated region
        $region21: #{tpu_custom_call.1} parent=11 // pred_check
          %p440 = pneg %p398
        $region22: #{tpu_custom_call.1} parent=11 // pred_check_branch
          %442 = sbr.rel (%p440) target = $region24
        $region23: #{tpu_custom_call.1} parent=11 // pred_region
          _
        $region24: #{tpu_custom_call.1} parent=11 // pred_fallthru
          _
      $region12: #{tpu_custom_call.1} parent=5 // pred_fallthru
        _
      %p443 = scmp.lt.s32.totalorder %s23, 2
      // Predicated region
      $region25: #{tpu_custom_call.1} parent=5 // pred_check
        %p444 = pneg %p443
      $region26: #{tpu_custom_call.1} parent=5 // pred_check_branch
        %446 = sbr.rel (%p444) target = $region28
      $region27: #{tpu_custom_call.1} parent=5 // pred_region
        // Predicated region
        $region29: #{tpu_custom_call.1} parent=27 // pred_check
          %p447 = pneg %p64
        $region30: #{tpu_custom_call.1} parent=27 // pred_check_branch
          %449 = sbr.rel (%p447) target = $region32
        $region31: #{tpu_custom_call.1} parent=27 // pred_region
          %p450 = scmp.lt.s32.totalorder %s23, 1
          %s451 = scalar_select %p450, %s23, 1
          %s452 = smul.addr %s451, 4
          %s453 = smul.addr %s452, 4
          %s454 = scalar_lea.vmem %s2, %s453
        $region32: #{tpu_custom_call.1} parent=27 // pred_fallthru
          _
        // Predicated region
        $region33: #{tpu_custom_call.1} parent=27 // pred_check
          %p455 = pneg %p90
        $region34: #{tpu_custom_call.1} parent=27 // pred_check_branch
          %457 = sbr.rel (%p455) target = $region36
        $region35: #{tpu_custom_call.1} parent=27 // pred_region
          %p458 = scmp.lt.s32.totalorder %s23, 1
          %s459 = scalar_select %p458, %s23, 1
          %s460 = scalar_lea.vmem %s3, %s459
        $region36: #{tpu_custom_call.1} parent=27 // pred_fallthru
          _
        // Predicated region
        $region37: #{tpu_custom_call.1} parent=27 // pred_check
          %p461 = pneg %p116
        $region38: #{tpu_custom_call.1} parent=27 // pred_check_branch
          %463 = sbr.rel (%p461) target = $region40
        $region39: #{tpu_custom_call.1} parent=27 // pred_region
          %p464 = scmp.lt.s32.totalorder %s23, 1
          %s465 = scalar_select %p464, %s23, 1
          %s466 = smul.addr %s465, 4
          %s467 = smul.addr %s466, 4
          %s468 = scalar_lea.vmem %s4, %s467
        $region40: #{tpu_custom_call.1} parent=27 // pred_fallthru
          _
        // Predicated region
        $region41: #{tpu_custom_call.1} parent=27 // pred_check
          %p469 = pneg %p142
        $region42: #{tpu_custom_call.1} parent=27 // pred_check_branch
          %471 = sbr.rel (%p469) target = $region44
        $region43: #{tpu_custom_call.1} parent=27 // pred_region
          %p472 = scmp.lt.s32.totalorder %s23, 1
          %s473 = scalar_select %p472, %s23, 1
          %s474 = scalar_lea.vmem %s5, %s473
        $region44: #{tpu_custom_call.1} parent=27 // pred_fallthru
          _
        // Predicated region
        $region45: #{tpu_custom_call.1} parent=27 // pred_check
          %p475 = pneg %p168
        $region46: #{tpu_custom_call.1} parent=27 // pred_check_branch
          %477 = sbr.rel (%p475) target = $region48
        $region47: #{tpu_custom_call.1} parent=27 // pred_region
          %p478 = scmp.lt.s32.totalorder %s23, 1
          %s479 = scalar_select %p478, %s23, 1
          %s480 = scalar_lea.vmem %s6, %s479
        $region48: #{tpu_custom_call.1} parent=27 // pred_fallthru
          _
        // Predicated region
        $region49: #{tpu_custom_call.1} parent=27 // pred_check
          %p481 = pneg %p194
        $region50: #{tpu_custom_call.1} parent=27 // pred_check_branch
          %483 = sbr.rel (%p481) target = $region52
        $region51: #{tpu_custom_call.1} parent=27 // pred_region
          %p484 = scmp.lt.s32.totalorder %s23, 1
          %s485 = scalar_select %p484, %s23, 1
          %s486 = scalar_lea.vmem %s7, %s485
        $region52: #{tpu_custom_call.1} parent=27 // pred_fallthru
          _
        // Predicated region
        $region53: #{tpu_custom_call.1} parent=27 // pred_check
          %p487 = pneg %p220
        $region54: #{tpu_custom_call.1} parent=27 // pred_check_branch
          %489 = sbr.rel (%p487) target = $region56
        $region55: #{tpu_custom_call.1} parent=27 // pred_region
          %p490 = scmp.lt.s32.totalorder %s23, 1
          %s491 = scalar_select %p490, %s23, 1
          %s492 = smul.addr %s491, 4
          %s493 = smul.addr %s492, 4
          %s494 = scalar_lea.vmem %s8, %s493
        $region56: #{tpu_custom_call.1} parent=27 // pred_fallthru
          _
        // Predicated region
        $region57: #{tpu_custom_call.1} parent=27 // pred_check
          %p495 = pneg %p246
        $region58: #{tpu_custom_call.1} parent=27 // pred_check_branch
          %497 = sbr.rel (%p495) target = $region60
        $region59: #{tpu_custom_call.1} parent=27 // pred_region
          %p498 = scmp.lt.s32.totalorder %s23, 1
          %s499 = scalar_select %p498, %s23, 1
          %s500 = scalar_lea.vmem %s9, %s499
        $region60: #{tpu_custom_call.1} parent=27 // pred_fallthru
          _
        // Predicated region
        $region61: #{tpu_custom_call.1} parent=27 // pred_check
          %p501 = pneg %p272
        $region62: #{tpu_custom_call.1} parent=27 // pred_check_branch
          %503 = sbr.rel (%p501) target = $region64
        $region63: #{tpu_custom_call.1} parent=27 // pred_region
          %p504 = scmp.lt.s32.totalorder %s23, 1
          %s505 = scalar_select %p504, %s23, 1
          %s506 = smul.addr %s505, 8
          %s507 = smul.addr %s506, 4
          %s508 = scalar_lea.vmem %s10, %s507
        $region64: #{tpu_custom_call.1} parent=27 // pred_fallthru
          _
        // Predicated region
        $region65: #{tpu_custom_call.1} parent=27 // pred_check
          %p509 = pneg %p298
        $region66: #{tpu_custom_call.1} parent=27 // pred_check_branch
          %511 = sbr.rel (%p509) target = $region68
        $region67: #{tpu_custom_call.1} parent=27 // pred_region
          %p512 = scmp.lt.s32.totalorder %s23, 1
          %s513 = scalar_select %p512, %s23, 1
          %s514 = scalar_lea.vmem %s11, %s513
        $region68: #{tpu_custom_call.1} parent=27 // pred_fallthru
          _
        // Predicated region
        $region69: #{tpu_custom_call.1} parent=27 // pred_check
          %p515 = pneg %p324
        $region70: #{tpu_custom_call.1} parent=27 // pred_check_branch
          %517 = sbr.rel (%p515) target = $region72
        $region71: #{tpu_custom_call.1} parent=27 // pred_region
          %p518 = scmp.lt.s32.totalorder %s23, 1
          %s519 = scalar_select %p518, %s23, 1
          %s520 = scalar_lea.vmem %s12, %s519
        $region72: #{tpu_custom_call.1} parent=27 // pred_fallthru
          _
        // Predicated region
        $region73: #{tpu_custom_call.1} parent=27 // pred_check
          %p521 = pneg %p350
        $region74: #{tpu_custom_call.1} parent=27 // pred_check_branch
          %523 = sbr.rel (%p521) target = $region76
        $region75: #{tpu_custom_call.1} parent=27 // pred_region
          %p524 = scmp.lt.s32.totalorder %s23, 1
          %s525 = scalar_select %p524, %s23, 1
          %s526 = scalar_lea.vmem %s13, %s525
        $region76: #{tpu_custom_call.1} parent=27 // pred_fallthru
          _
      $region28: #{tpu_custom_call.1} parent=5 // pred_fallthru
        _
      %p527 = scmp.le.s32.totalorder 1, %s23
      %p528 = scmp.lt.s32.totalorder %s23, 3
      %p529 = pnand %p527, %p528
      %p530 = pneg %p529
      // Predicated region
      $region77: #{tpu_custom_call.1} parent=5 // pred_check
        _
      $region78: #{tpu_custom_call.1} parent=5 // pred_check_branch
        %532 = sbr.rel (%p529) target = $region80
      $region79: #{tpu_custom_call.1} parent=5 // pred_region
        %s533 = ssub.s32 %s23, 1
        %p534 = pneg %p44
        %p535 = pneg %p41
        %p536 = scmp.lt.s32.totalorder %s28, 1
        %s537 = scalar_select %p536, %s28, 1
        %s538 = smul.addr %s537, 4
        %s539 = smul.addr %s538, 4
        %s540 = scalar_lea.vmem %s2, %s539
        %p541 = pneg %p70
        %p542 = pneg %p67
        %p543 = scmp.lt.s32.totalorder %s28, 1
        %s544 = scalar_select %p543, %s28, 1
        %s545 = scalar_lea.vmem %s3, %s544
        %p546 = pneg %p96
        %p547 = pneg %p93
        %p548 = scmp.lt.s32.totalorder %s28, 1
        %s549 = scalar_select %p548, %s28, 1
        %s550 = smul.addr %s549, 4
        %s551 = smul.addr %s550, 4
        %s552 = scalar_lea.vmem %s4, %s551
        %p553 = pneg %p122
        %p554 = pneg %p119
        %p555 = scmp.lt.s32.totalorder %s28, 1
        %s556 = scalar_select %p555, %s28, 1
        %s557 = scalar_lea.vmem %s5, %s556
        %p558 = pneg %p148
        %p559 = pneg %p145
        %p560 = scmp.lt.s32.totalorder %s28, 1
        %s561 = scalar_select %p560, %s28, 1
        %s562 = scalar_lea.vmem %s6, %s561
        %p563 = pneg %p174
        %p564 = pneg %p171
        %p565 = scmp.lt.s32.totalorder %s28, 1
        %s566 = scalar_select %p565, %s28, 1
        %s567 = scalar_lea.vmem %s7, %s566
        %p568 = pneg %p200
        %p569 = pneg %p197
        %p570 = scmp.lt.s32.totalorder %s28, 1
        %s571 = scalar_select %p570, %s28, 1
        %s572 = smul.addr %s571, 4
        %s573 = smul.addr %s572, 4
        %s574 = scalar_lea.vmem %s8, %s573
        %p575 = pneg %p226
        %p576 = pneg %p223
        %p577 = scmp.lt.s32.totalorder %s28, 1
        %s578 = scalar_select %p577, %s28, 1
        %s579 = scalar_lea.vmem %s9, %s578
        %p580 = pneg %p252
        %p581 = pneg %p249
        %p582 = scmp.lt.s32.totalorder %s28, 1
        %s583 = scalar_select %p582, %s28, 1
        %s584 = smul.addr %s583, 8
        %s585 = smul.addr %s584, 4
        %s586 = scalar_lea.vmem %s10, %s585
        %p587 = pneg %p278
        %p588 = pneg %p275
        %p589 = scmp.lt.s32.totalorder %s28, 1
        %s590 = scalar_select %p589, %s28, 1
        %s591 = scalar_lea.vmem %s11, %s590
        %p592 = pneg %p304
        %p593 = pneg %p301
        %p594 = scmp.lt.s32.totalorder %s28, 1
        %s595 = scalar_select %p594, %s28, 1
        %s596 = scalar_lea.vmem %s12, %s595
        %p597 = pneg %p330
        %p598 = pneg %p327
        %p599 = scmp.lt.s32.totalorder %s28, 1
        %s600 = scalar_select %p599, %s28, 1
        %s601 = scalar_lea.vmem %s13, %s600
        %p602 = pneg %p356
        %p603 = pneg %p353
        %p604 = pneg %p377
        %p605 = pneg %p374
        %p606 = pneg %p398
        %p607 = pneg %p395
        %p608 = pneg %p419
        %p609 = pneg %p416
        %p610 = scmp.lt.s32.totalorder %s28, 1
        %s611 = scalar_select %p610, %s28, 1
        %s612 = smul.addr %s611, 4
        %s613 = smul.addr %s612, 4
        %s614 = scalar_lea.vmem %s2, %s613
        %p615 = scmp.lt.s32.totalorder %s28, 1
        %s616 = scalar_select %p615, %s28, 1
        %s617 = scalar_lea.vmem %s3, %s616
        %p618 = scmp.lt.s32.totalorder %s28, 1
        %s619 = scalar_select %p618, %s28, 1
        %s620 = smul.addr %s619, 4
        %s621 = smul.addr %s620, 4
        %s622 = scalar_lea.vmem %s4, %s621
        %p623 = scmp.lt.s32.totalorder %s28, 1
        %s624 = scalar_select %p623, %s28, 1
        %s625 = scalar_lea.vmem %s5, %s624
        %p626 = scmp.lt.s32.totalorder %s28, 1
        %s627 = scalar_select %p626, %s28, 1
        %s628 = scalar_lea.vmem %s6, %s627
        %p629 = scmp.lt.s32.totalorder %s28, 1
        %s630 = scalar_select %p629, %s28, 1
        %s631 = scalar_lea.vmem %s7, %s630
        %p632 = scmp.lt.s32.totalorder %s28, 1
        %s633 = scalar_select %p632, %s28, 1
        %s634 = smul.addr %s633, 4
        %s635 = smul.addr %s634, 4
        %s636 = scalar_lea.vmem %s8, %s635
        %p637 = scmp.lt.s32.totalorder %s28, 1
        %s638 = scalar_select %p637, %s28, 1
        %s639 = scalar_lea.vmem %s9, %s638
        %p640 = scmp.lt.s32.totalorder %s28, 1
        %s641 = scalar_select %p640, %s28, 1
        %s642 = smul.addr %s641, 8
        %s643 = smul.addr %s642, 4
        %s644 = scalar_lea.vmem %s10, %s643
        %p645 = scmp.lt.s32.totalorder %s28, 1
        %s646 = scalar_select %p645, %s28, 1
        %s647 = scalar_lea.vmem %s11, %s646
        %p648 = scmp.lt.s32.totalorder %s28, 1
        %s649 = scalar_select %p648, %s28, 1
        %s650 = scalar_lea.vmem %s12, %s649
        %p651 = scmp.lt.s32.totalorder %s28, 1
        %s652 = scalar_select %p651, %s28, 1
        %s653 = scalar_lea.vmem %s13, %s652
        %p655 = scmp.eq.s32.totalorder %s28, 0
        // Predicated region
        $region81: #{tpu_custom_call.1} parent=79 // pred_check
          %p656 = pneg %p655
        $region82: #{tpu_custom_call.1} parent=79 // pred_check_branch
          %658 = sbr.rel (%p656) target = $region84
        $region83: #{tpu_custom_call.1} parent=79 // pred_region
          %p660 = scmp.lt.u32.totalorder 48, 8
          %p661 = pneg %p660
          // Predicated region
          $region85: #{tpu_custom_call.1} parent=83 // pred_check
            _
          $region86: #{tpu_custom_call.1} parent=83 // pred_check_branch
            %663 = sbr.rel (%p660) target = $region88
          $region87: #{tpu_custom_call.1} parent=83 // pred_region
            %s678 = sand.u32 48, 7
            %p679 = scmp.eq.s32.totalorder %s678, 0
            // Predicated region
            $region100: #{tpu_custom_call.1} parent=87 // pred_check
              %p680 = pneg %p679
            $region101: #{tpu_custom_call.1} parent=87 // pred_check_branch
              %682 = sbr.rel (%p680) target = $region103
            $region102: #{tpu_custom_call.1} parent=87 // pred_region
              loop: start=0, step=1, limit=1
              $region104: #{tpu_custom_call.1} parent=102 // loop_pre_header
                _
              $region105: #{tpu_custom_call.1} parent=102 // loop_header
                %s684 = sphi 0, %s688
                %p685 = scmp.ge.s32.totalorder %s684, 1
                %s689 = sphi %s0, %s0
                %s690 = sphi [#allocation2], [#allocation2]
              $region106: #{tpu_custom_call.1} parent=102 // loop_header_branch
                %687 = sbr.rel (%p685) target = $region110
              $region107: #{tpu_custom_call.1} parent=102 // loop_body
                %v691 = vld [vmem:[%s689] sm:$0xff]
                %692 = vst [vmem:[%s690] sm:$0xff] %v691
                %v693 = vld [vmem:[%s689 + $0x8] sm:$0xff]
                %694 = vst [vmem:[%s690 + $0x8] sm:$0xff] %v693
                %v695 = vld [vmem:[%s689 + $0x10] sm:$0xff]
                %696 = vst [vmem:[%s690 + $0x10] sm:$0xff] %v695
                %v697 = vld [vmem:[%s689 + $0x18] sm:$0xff]
                %698 = vst [vmem:[%s690 + $0x18] sm:$0xff] %v697
                %v699 = vld [vmem:[%s689 + $0x20] sm:$0xff]
                %700 = vst [vmem:[%s690 + $0x20] sm:$0xff] %v699
                %v701 = vld [vmem:[%s689 + $0x28] sm:$0xff]
                %702 = vst [vmem:[%s690 + $0x28] sm:$0xff] %v701
              $region108: #{tpu_custom_call.1} parent=102 // loop_footer
                %s688 = sadd.s32 1, %s684
              $region109: #{tpu_custom_call.1} parent=102 // loop_footer_branch
                %683 = sbr.rel target = $region105
              $region110: #{tpu_custom_call.1} parent=102 // loop_exit
                _
            $region103: #{tpu_custom_call.1} parent=87 // pred_fallthru
              _
            %p703 = pneg %p679
            // Predicated region
            $region111: #{tpu_custom_call.1} parent=87 // pred_check
              _
            $region112: #{tpu_custom_call.1} parent=87 // pred_check_branch
              %705 = sbr.rel (%p679) target = $region114
            $region113: #{tpu_custom_call.1} parent=87 // pred_region
              %s706 = sand.u32 48, 7
            $region114: #{tpu_custom_call.1} parent=87 // pred_fallthru
              _
          $region88: #{tpu_custom_call.1} parent=83 // pred_fallthru
            _
          // Predicated region
          $region89: #{tpu_custom_call.1} parent=83 // pred_check
            %p664 = pneg %p660
          $region90: #{tpu_custom_call.1} parent=83 // pred_check_branch
            %666 = sbr.rel (%p664) target = $region92
          $region91: #{tpu_custom_call.1} parent=83 // pred_region
            %s667 = sshllo.u32 0, 48
            loop: start=0, step=1, limit=1
            $region93: #{tpu_custom_call.1} parent=91 // loop_pre_header
              _
            $region94: #{tpu_custom_call.1} parent=91 // loop_header
              %s669 = sphi 0, %s673
              %p670 = scmp.ge.s32.totalorder %s669, 1
              %s674 = sphi %s0, %s0
              %s675 = sphi [#allocation2], [#allocation2]
            $region95: #{tpu_custom_call.1} parent=91 // loop_header_branch
              %672 = sbr.rel (%p670) target = $region99
            $region96: #{tpu_custom_call.1} parent=91 // loop_body
              %v676 = vld [vmem:[%s674] sm:%s667]
              %677 = vst [vmem:[%s675] sm:%s667] %v676
            $region97: #{tpu_custom_call.1} parent=91 // loop_footer
              %s673 = sadd.s32 1, %s669
            $region98: #{tpu_custom_call.1} parent=91 // loop_footer_branch
              %668 = sbr.rel target = $region94
            $region99: #{tpu_custom_call.1} parent=91 // loop_exit
              _
          $region92: #{tpu_custom_call.1} parent=83 // pred_fallthru
            _
          // Predicated region
          $region115: #{tpu_custom_call.1} parent=83 // pred_check
            _
          $region116: #{tpu_custom_call.1} parent=83 // pred_check_branch
            %709 = sbr.rel (0) target = $region118
          $region117: #{tpu_custom_call.1} parent=83 // pred_region
            %710 = vsyncadd [#allocation3], 768
          $region118: #{tpu_custom_call.1} parent=83 // pred_fallthru
            _
          %s711 = smul.u32 48, 1
          %s712 = sshll.u32 %s711, 4
          %713 = dma.done [#allocation3], %s712
        $region84: #{tpu_custom_call.1} parent=79 // pred_fallthru
          _
        %v714 = vld [vmem:[#allocation2] sm:$0xff]
        %v715 = vld [vmem:[#allocation2 + $0x8] sm:$0xff]
        %v716 = vld [vmem:[#allocation2 + $0x10] sm:$0xff]
        %v717 = vld [vmem:[#allocation2 + $0x18] sm:$0xff]
        %v718 = vld [vmem:[#allocation2 + $0x20] sm:$0xff]
        %v719 = vld [vmem:[#allocation2 + $0x28] sm:$0xff]
        %v720 = vpack.c.bf16 %v715, %v714
        %v721 = vpack.c.bf16 %v717, %v716
        %v722 = vpack.c.bf16 %v719, %v718
        %v723 = vld [vmem:[%s614] sm:$0xf]
        %v724 = vld [vmem:[%s614 + $0x4] sm:$0xf]
        %v725 = vld [vmem:[%s614 + $0x8] sm:$0xf]
        %v726 = vld [vmem:[%s614 + $0xc] sm:$0xf]
        %v727 = vld [vmem:[%s617] sm:$0x1]
        %v729 = vlaneseq
        %v730 = vshrl.u32 %v729, 7
        %v731 = vsub.s32 0, %v730
        %v732 = vrot.slane %v727, %v731
        %v738 = vunpack.c.l.b16 %v723
        %v739 = vunpack.c.l.b16 %v724
        %v740 = vunpack.c.l.b16 %v725
        %v741 = vunpack.c.l.b16 %v726
        %v742 = vpack.c.b16 %v739, %v738
        %v743 = vpack.c.b16 %v741, %v740
        %vm746 = vcmask 261120
        %v748 = vsel %vm746, %v720, 0
        %v751 = vsel %vm746, %v721, 0
        %v754 = vsel %vm746, %v722, 0
        %756 = vmatprep.subr.bf16.mxu0 0
        %757 = vmatpush1.bf16.msra.mxu0 %v742
        %758 = vmatprep.subr.bf16.mxu0 0
        %759 = vmatpush1.bf16.msra.mxu0 %v743
        %760 = vmatprep.subr.bf16.mxu0 0
        %761 = vmatpush1.bf16.msra.mxu0 0
        %762 = vmatprep.subr.bf16.mxu0 0
        %763 = vmatpush1.bf16.msra.mxu0 0
        %764 = vmatprep.subr.bf16.mxu0 0
        %765 = vmatpush1.bf16.msra.mxu0 0
        %766 = vmatprep.subr.bf16.mxu0 0
        %767 = vmatpush1.bf16.msra.mxu0 0
        %768 = vmatprep.subr.bf16.mxu0 0
        %769 = vmatpush1.bf16.msra.mxu0 0
        %770 = vmatprep.subr.bf16.mxu0 0
        %771 = vmatpush1.bf16.msra.mxu0 0
        %772 = vmatprep.subr.bf16.mxu0 0
        %773 = vmatpush1.bf16.msra.mxu0 0
        %774 = vmatprep.subr.bf16.mxu0 0
        %775 = vmatpush1.bf16.msra.mxu0 0
        %776 = vmatprep.subr.bf16.mxu0 0
        %777 = vmatpush1.bf16.msra.mxu0 0
        %778 = vmatprep.subr.bf16.mxu0 0
        %779 = vmatpush1.bf16.msra.mxu0 0
        %780 = vmatprep.subr.bf16.mxu0 0
        %781 = vmatpush1.bf16.msra.mxu0 0
        %782 = vmatprep.subr.bf16.mxu0 0
        %783 = vmatpush1.bf16.msra.mxu0 0
        %784 = vmatprep.subr.bf16.mxu0 0
        %785 = vmatpush1.bf16.msra.mxu0 0
        %786 = vmatprep.subr.bf16.mxu0 0
        %787 = vmatpush1.bf16.msra.mxu0 0
        %788 = vmatprep.mubr.bf16.mxu0 0
        %789 = vmatmul.mubr.bf16.gmra.mrb[0].mxu0 %v748
        %v790 = vpop.f32.mrb[0].mxu0
        %v791 = vadd.f32 %v732, %v790
        %v792 = vpop.f32.mrb[0].mxu0
        %v793 = vpop.f32.mrb[0].mxu0
        %v794 = vadd.f32 %v732, %v793
        %v795 = vpop.f32.mrb[0].mxu0
        %796 = vmatprep.mubr.bf16.mxu0 0
        %797 = vmatmul.mubr.bf16.gmra.mrb[0].mxu0 %v751
        %v798 = vpop.f32.mrb[0].mxu0
        %v799 = vadd.f32 %v732, %v798
        %v800 = vpop.f32.mrb[0].mxu0
        %v801 = vpop.f32.mrb[0].mxu0
        %v802 = vadd.f32 %v732, %v801
        %v803 = vpop.f32.mrb[0].mxu0
        %804 = vmatprep.mubr.bf16.mxu0 0
        %805 = vmatmul.mubr.bf16.gmra.mrb[0].mxu0 %v754
        %v806 = vpop.f32.mrb[0].mxu0
        %v807 = vadd.f32 %v732, %v806
        %v808 = vpop.f32.mrb[0].mxu0
        %v809 = vpop.f32.mrb[0].mxu0
        %v810 = vadd.f32 %v732, %v809
        %v811 = vpop.f32.mrb[0].mxu0
        %812 = vdwg.mxu0
        %819 = vrot.lane.b32.xlu0 %v791, 112
        %v820 = vpop.permute.xlu0 %819
        %821 = vrot.lane.b32.xlu0 %v794, 112
        %v822 = vpop.permute.xlu0 %821
        %823 = vrot.lane.b32.xlu0 %v799, 112
        %v824 = vpop.permute.xlu0 %823
        %825 = vrot.lane.b32.xlu0 %v802, 112
        %v826 = vpop.permute.xlu0 %825
        %827 = vrot.lane.b32.xlu0 %v807, 112
        %v828 = vpop.permute.xlu0 %827
        %829 = vrot.lane.b32.xlu0 %v810, 112
        %v830 = vpop.permute.xlu0 %829
        %v837 = vpack.c.bf16 %v791, %v791
        %v838 = vpack.c.bf16 %v820, %v820
        %v839 = vpack.c.bf16 %v794, %v794
        %v840 = vpack.c.bf16 %v822, %v822
        %v841 = vpack.c.bf16 %v799, %v799
        %v842 = vpack.c.bf16 %v824, %v824
        %v843 = vpack.c.bf16 %v802, %v802
        %v844 = vpack.c.bf16 %v826, %v826
        %v845 = vpack.c.bf16 %v807, %v807
        %v846 = vpack.c.bf16 %v828, %v828
        %v847 = vpack.c.bf16 %v810, %v810
        %v848 = vpack.c.bf16 %v830, %v830
        %v849 = vld [vmem:[%s1] sm:$0x1]
        %v850 = vld [vmem:[%s1 + $0x1] sm:$0x1]
        %v851 = vld [vmem:[%s1 + $0x2] sm:$0x1]
        %v852 = vld [vmem:[%s1 + $0x3] sm:$0x1]
        %v853 = vld [vmem:[%s1 + $0x4] sm:$0x1]
        %v854 = vld [vmem:[%s1 + $0x5] sm:$0x1]
        %v855 = vld [vmem:[%s1 + $0x6] sm:$0x1]
        %v856 = vld [vmem:[%s1 + $0x7] sm:$0x1]
        %v857 = vld [vmem:[%s1 + $0x8] sm:$0x1]
        %v858 = vld [vmem:[%s1 + $0x9] sm:$0x1]
        %v859 = vld [vmem:[%s1 + $0xa] sm:$0x1]
        %v860 = vld [vmem:[%s1 + $0xb] sm:$0x1]
        %v873 = vlaneseq
        %v874 = vshrl.u32 %v873, 7
        %v875 = vsub.s32 0, %v874
        %v876 = vrot.slane %v849, %v875
        %v877 = vlaneseq
        %v878 = vshrl.u32 %v877, 7
        %v879 = vsub.s32 0, %v878
        %v880 = vrot.slane %v850, %v879
        %v881 = vlaneseq
        %v882 = vshrl.u32 %v881, 7
        %v883 = vsub.s32 0, %v882
        %v884 = vrot.slane %v851, %v883
        %v885 = vlaneseq
        %v886 = vshrl.u32 %v885, 7
        %v887 = vsub.s32 0, %v886
        %v888 = vrot.slane %v852, %v887
        %v889 = vlaneseq
        %v890 = vshrl.u32 %v889, 7
        %v891 = vsub.s32 0, %v890
        %v892 = vrot.slane %v853, %v891
        %v893 = vlaneseq
        %v894 = vshrl.u32 %v893, 7
        %v895 = vsub.s32 0, %v894
        %v896 = vrot.slane %v854, %v895
        %v897 = vlaneseq
        %v898 = vshrl.u32 %v897, 7
        %v899 = vsub.s32 0, %v898
        %v900 = vrot.slane %v855, %v899
        %v901 = vlaneseq
        %v902 = vshrl.u32 %v901, 7
        %v903 = vsub.s32 0, %v902
        %v904 = vrot.slane %v856, %v903
        %v905 = vlaneseq
        %v906 = vshrl.u32 %v905, 7
        %v907 = vsub.s32 0, %v906
        %v908 = vrot.slane %v857, %v907
        %v909 = vlaneseq
        %v910 = vshrl.u32 %v909, 7
        %v911 = vsub.s32 0, %v910
        %v912 = vrot.slane %v858, %v911
        %v913 = vlaneseq
        %v914 = vshrl.u32 %v913, 7
        %v915 = vsub.s32 0, %v914
        %v916 = vrot.slane %v859, %v915
        %v917 = vlaneseq
        %v918 = vshrl.u32 %v917, 7
        %v919 = vsub.s32 0, %v918
        %v920 = vrot.slane %v860, %v919
        %934 = vrot.lane.b32.xlu0 %v837, 96
        %v935 = vpop.permute.xlu0 %934
        %vm936 = vcmask 130048
        %v938 = vsel %vm936, %v837, 0
        %v941 = vsel %vm936, %v935, 0
        %943 = vmatprep.subr.bf16.mxu0 0
        %944 = vmatpush1.bf16.xpose.msra.mxu0 %v941
        %945 = vmatprep.subr.bf16.mxu0 0
        %946 = vmatpush1.bf16.xpose.msra.mxu0 0
        %947 = vmatprep.subr.bf16.mxu0 0
        %948 = vmatpush1.bf16.xpose.msra.mxu0 0
        %949 = vmatprep.subr.bf16.mxu0 0
        %950 = vmatpush1.bf16.xpose.msra.mxu0 0
        %951 = vmatprep.subr.bf16.mxu0 0
        %952 = vmatpush1.bf16.xpose.msra.mxu0 0
        %953 = vmatprep.subr.bf16.mxu0 0
        %954 = vmatpush1.bf16.xpose.msra.mxu0 0
        %955 = vmatprep.subr.bf16.mxu0 0
        %956 = vmatpush1.bf16.xpose.msra.mxu0 0
        %957 = vmatprep.subr.bf16.mxu0 0
        %958 = vmatpush1.bf16.xpose.msra.mxu0 0
        %959 = vmatprep.subr.bf16.mxu0 0
        %960 = vmatpush1.bf16.xpose.msra.mxu0 0
        %961 = vmatprep.subr.bf16.mxu0 0
        %962 = vmatpush1.bf16.xpose.msra.mxu0 0
        %963 = vmatprep.subr.bf16.mxu0 0
        %964 = vmatpush1.bf16.xpose.msra.mxu0 0
        %965 = vmatprep.subr.bf16.mxu0 0
        %966 = vmatpush1.bf16.xpose.msra.mxu0 0
        %967 = vmatprep.subr.bf16.mxu0 0
        %968 = vmatpush1.bf16.xpose.msra.mxu0 0
        %969 = vmatprep.subr.bf16.mxu0 0
        %970 = vmatpush1.bf16.xpose.msra.mxu0 0
        %971 = vmatprep.subr.bf16.mxu0 0
        %972 = vmatpush1.bf16.xpose.msra.mxu0 0
        %973 = vmatprep.subr.bf16.mxu0 0
        %974 = vmatpush1.bf16.xpose.msra.mxu0 0
        %975 = vmatprep.mubr.bf16.mxu0 0
        %976 = vmatmul.mubr.bf16.gmra.mrb[0].mxu0 %v938
        %v977 = vpop.f32.mrb[0].mxu0
        %v978 = vadd.f32 %v876, %v977
        %v979 = vpop.f32.mrb[0].mxu0
        %v980 = vpop.f32.mrb[0].mxu0
        %v981 = vpop.f32.mrb[0].mxu0
        %982 = vdwg.mxu0
        %984 = vrot.lane.b32.xlu0 %v838, 96
        %v985 = vpop.permute.xlu0 %984
        %v987 = vsel %vm936, %v838, 0
        %v990 = vsel %vm936, %v985, 0
        %992 = vmatprep.subr.bf16.mxu0 0
        %993 = vmatpush1.bf16.xpose.msra.mxu0 %v990
        %994 = vmatprep.subr.bf16.mxu0 0
        %995 = vmatpush1.bf16.xpose.msra.mxu0 0
        %996 = vmatprep.subr.bf16.mxu0 0
        %997 = vmatpush1.bf16.xpose.msra.mxu0 0
        %998 = vmatprep.subr.bf16.mxu0 0
        %999 = vmatpush1.bf16.xpose.msra.mxu0 0
        %1000 = vmatprep.subr.bf16.mxu0 0
        %1001 = vmatpush1.bf16.xpose.msra.mxu0 0
        %1002 = vmatprep.subr.bf16.mxu0 0
        %1003 = vmatpush1.bf16.xpose.msra.mxu0 0
        %1004 = vmatprep.subr.bf16.mxu0 0
        %1005 = vmatpush1.bf16.xpose.msra.mxu0 0
        %1006 = vmatprep.subr.bf16.mxu0 0
        %1007 = vmatpush1.bf16.xpose.msra.mxu0 0
        %1008 = vmatprep.subr.bf16.mxu0 0
        %1009 = vmatpush1.bf16.xpose.msra.mxu0 0
        %1010 = vmatprep.subr.bf16.mxu0 0
        %1011 = vmatpush1.bf16.xpose.msra.mxu0 0
        %1012 = vmatprep.subr.bf16.mxu0 0
        %1013 = vmatpush1.bf16.xpose.msra.mxu0 0
        %1014 = vmatprep.subr.bf16.mxu0 0
        %1015 = vmatpush1.bf16.xpose.msra.mxu0 0
        %1016 = vmatprep.subr.bf16.mxu0 0
        %1017 = vmatpush1.bf16.xpose.msra.mxu0 0
        %1018 = vmatprep.subr.bf16.mxu0 0
        %1019 = vmatpush1.bf16.xpose.msra.mxu0 0
        %1020 = vmatprep.subr.bf16.mxu0 0
        %1021 = vmatpush1.bf16.xpose.msra.mxu0 0
        %1022 = vmatprep.subr.bf16.mxu0 0
        %1023 = vmatpush1.bf16.xpose.msra.mxu0 0
        %1024 = vmatprep.mubr.bf16.mxu0 0
        %1025 = vmatmul.mubr.bf16.gmra.mrb[0].mxu0 %v987
        %v1026 = vpop.f32.mrb[0].mxu0
        %v1027 = vadd.f32 %v880, %v1026
        %v1028 = vpop.f32.mrb[0].mxu0
        %v1029 = vpop.f32.mrb[0].mxu0
        %v1030 = vpop.f32.mrb[0].mxu0
        %1031 = vdwg.mxu0
        %1033 = vrot.lane.b32.xlu0 %v839, 96
        %v1034 = vpop.permute.xlu0 %1033
        %v1036 = vsel %vm936, %v839, 0
        %v1039 = vsel %vm936, %v1034, 0
        %1041 = vmatprep.subr.bf16.mxu0 0
        %1042 = vmatpush1.bf16.xpose.msra.mxu0 %v1039
        %1043 = vmatprep.subr.bf16.mxu0 0
        %1044 = vmatpush1.bf16.xpose.msra.mxu0 0
        %1045 = vmatprep.subr.bf16.mxu0 0
        %1046 = vmatpush1.bf16.xpose.msra.mxu0 0
        %1047 = vmatprep.subr.bf16.mxu0 0
        %1048 = vmatpush1.bf16.xpose.msra.mxu0 0
        %1049 = vmatprep.subr.bf16.mxu0 0
        %1050 = vmatpush1.bf16.xpose.msra.mxu0 0
        %1051 = vmatprep.subr.bf16.mxu0 0
        %1052 = vmatpush1.bf16.xpose.msra.mxu0 0
        %1053 = vmatprep.subr.bf16.mxu0 0
        %1054 = vmatpush1.bf16.xpose.msra.mxu0 0
        %1055 = vmatprep.subr.bf16.mxu0 0
        %1056 = vmatpush1.bf16.xpose.msra.mxu0 0
        %1057 = vmatprep.subr.bf16.mxu0 0
        %1058 = vmatpush1.bf16.xpose.msra.mxu0 0
        %1059 = vmatprep.subr.bf16.mxu0 0
        %1060 = vmatpush1.bf16.xpose.msra.mxu0 0
        %1061 = vmatprep.subr.bf16.mxu0 0
        %1062 = vmatpush1.bf16.xpose.msra.mxu0 0
        %1063 = vmatprep.subr.bf16.mxu0 0
        %1064 = vmatpush1.bf16.xpose.msra.mxu0 0
        %1065 = vmatprep.subr.bf16.mxu0 0
        %1066 = vmatpush1.bf16.xpose.msra.mxu0 0
        %1067 = vmatprep.subr.bf16.mxu0 0
        %1068 = vmatpush1.bf16.xpose.msra.mxu0 0
        %1069 = vmatprep.subr.bf16.mxu0 0
        %1070 = vmatpush1.bf16.xpose.msra.mxu0 0
        %1071 = vmatprep.subr.bf16.mxu0 0
        %1072 = vmatpush1.bf16.xpose.msra.mxu0 0
        %1073 = vmatprep.mubr.bf16.mxu0 0
        %1074 = vmatmul.mubr.bf16.gmra.mrb[0].mxu0 %v1036
        %v1075 = vpop.f32.mrb[0].mxu0
        %v1076 = vadd.f32 %v884, %v1075
        %v1077 = vpop.f32.mrb[0].mxu0
        %v1078 = vpop.f32.mrb[0].mxu0
        %v1079 = vpop.f32.mrb[0].mxu0
        %1080 = vdwg.mxu0
        %1082 = vrot.lane.b32.xlu0 %v840, 96
        %v1083 = vpop.permute.xlu0 %1082
        %v1085 = vsel %vm936, %v840, 0
        %v1088 = vsel %vm936, %v1083, 0
        %1090 = vmatprep.subr.bf16.mxu0 0
        %1091 = vmatpush1.bf16.xpose.msra.mxu0 %v1088
        %1092 = vmatprep.subr.bf16.mxu0 0
        %1093 = vmatpush1.bf16.xpose.msra.mxu0 0
        %1094 = vmatprep.subr.bf16.mxu0 0
        %1095 = vmatpush1.bf16.xpose.msra.mxu0 0
        %1096 = vmatprep.subr.bf16.mxu0 0
        %1097 = vmatpush1.bf16.xpose.msra.mxu0 0
        %1098 = vmatprep.subr.bf16.mxu0 0
        %1099 = vmatpush1.bf16.xpose.msra.mxu0 0
        %1100 = vmatprep.subr.bf16.mxu0 0
        %1101 = vmatpush1.bf16.xpose.msra.mxu0 0
        %1102 = vmatprep.subr.bf16.mxu0 0
        %1103 = vmatpush1.bf16.xpose.msra.mxu0 0
        %1104 = vmatprep.subr.bf16.mxu0 0
        %1105 = vmatpush1.bf16.xpose.msra.mxu0 0
        %1106 = vmatprep.subr.bf16.mxu0 0
        %1107 = vmatpush1.bf16.xpose.msra.mxu0 0
        %1108 = vmatprep.subr.bf16.mxu0 0
        %1109 = vmatpush1.bf16.xpose.msra.mxu0 0
        %1110 = vmatprep.subr.bf16.mxu0 0
        %1111 = vmatpush1.bf16.xpose.msra.mxu0 0
        %1112 = vmatprep.subr.bf16.mxu0 0
        %1113 = vmatpush1.bf16.xpose.msra.mxu0 0
        %1114 = vmatprep.subr.bf16.mxu0 0
        %1115 = vmatpush1.bf16.xpose.msra.mxu0 0
        %1116 = vmatprep.subr.bf16.mxu0 0
        %1117 = vmatpush1.bf16.xpose.msra.mxu0 0
        %1118 = vmatprep.subr.bf16.mxu0 0
        %1119 = vmatpush1.bf16.xpose.msra.mxu0 0
        %1120 = vmatprep.subr.bf16.mxu0 0
        %1121 = vmatpush1.bf16.xpose.msra.mxu0 0
        %1122 = vmatprep.mubr.bf16.mxu0 0
        %1123 = vmatmul.mubr.bf16.gmra.mrb[0].mxu0 %v1085
        %v1124 = vpop.f32.mrb[0].mxu0
        %v1125 = vadd.f32 %v888, %v1124
        %v1126 = vpop.f32.mrb[0].mxu0
        %v1127 = vpop.f32.mrb[0].mxu0
        %v1128 = vpop.f32.mrb[0].mxu0
        %1129 = vdwg.mxu0
        %1131 = vrot.lane.b32.xlu0 %v841, 96
        %v1132 = vpop.permute.xlu0 %1131
        %v1134 = vsel %vm936, %v841, 0
        %v1137 = vsel %vm936, %v1132, 0
        %1139 = vmatprep.subr.bf16.mxu0 0
        %1140 = vmatpush1.bf16.xpose.msra.mxu0 %v1137
        %1141 = vmatprep.subr.bf16.mxu0 0
        %1142 = vmatpush1.bf16.xpose.msra.mxu0 0
        %1143 = vmatprep.subr.bf16.mxu0 0
        %1144 = vmatpush1.bf16.xpose.msra.mxu0 0
        %1145 = vmatprep.subr.bf16.mxu0 0
        %1146 = vmatpush1.bf16.xpose.msra.mxu0 0
        %1147 = vmatprep.subr.bf16.mxu0 0
        %1148 = vmatpush1.bf16.xpose.msra.mxu0 0
        %1149 = vmatprep.subr.bf16.mxu0 0
        %1150 = vmatpush1.bf16.xpose.msra.mxu0 0
        %1151 = vmatprep.subr.bf16.mxu0 0
        %1152 = vmatpush1.bf16.xpose.msra.mxu0 0
        %1153 = vmatprep.subr.bf16.mxu0 0
        %1154 = vmatpush1.bf16.xpose.msra.mxu0 0
        %1155 = vmatprep.subr.bf16.mxu0 0
        %1156 = vmatpush1.bf16.xpose.msra.mxu0 0
        %1157 = vmatprep.subr.bf16.mxu0 0
        %1158 = vmatpush1.bf16.xpose.msra.mxu0 0
        %1159 = vmatprep.subr.bf16.mxu0 0
        %1160 = vmatpush1.bf16.xpose.msra.mxu0 0
        %1161 = vmatprep.subr.bf16.mxu0 0
        %1162 = vmatpush1.bf16.xpose.msra.mxu0 0
        %1163 = vmatprep.subr.bf16.mxu0 0
        %1164 = vmatpush1.bf16.xpose.msra.mxu0 0
        %1165 = vmatprep.subr.bf16.mxu0 0
        %1166 = vmatpush1.bf16.xpose.msra.mxu0 0
        %1167 = vmatprep.subr.bf16.mxu0 0
        %1168 = vmatpush1.bf16.xpose.msra.mxu0 0
        %1169 = vmatprep.subr.bf16.mxu0 0
        %1170 = vmatpush1.bf16.xpose.msra.mxu0 0
        %1171 = vmatprep.mubr.bf16.mxu0 0
        %1172 = vmatmul.mubr.bf16.gmra.mrb[0].mxu0 %v1134
        %v1173 = vpop.f32.mrb[0].mxu0
        %v1174 = vadd.f32 %v892, %v1173
        %v1175 = vpop.f32.mrb[0].mxu0
        %v1176 = vpop.f32.mrb[0].mxu0
        %v1177 = vpop.f32.mrb[0].mxu0
        %1178 = vdwg.mxu0
        %1180 = vrot.lane.b32.xlu0 %v842, 96
        %v1181 = vpop.permute.xlu0 %1180
        %v1183 = vsel %vm936, %v842, 0
        %v1186 = vsel %vm936, %v1181, 0
        %1188 = vmatprep.subr.bf16.mxu0 0
        %1189 = vmatpush1.bf16.xpose.msra.mxu0 %v1186
        %1190 = vmatprep.subr.bf16.mxu0 0
        %1191 = vmatpush1.bf16.xpose.msra.mxu0 0
        %1192 = vmatprep.subr.bf16.mxu0 0
        %1193 = vmatpush1.bf16.xpose.msra.mxu0 0
        %1194 = vmatprep.subr.bf16.mxu0 0
        %1195 = vmatpush1.bf16.xpose.msra.mxu0 0
        %1196 = vmatprep.subr.bf16.mxu0 0
        %1197 = vmatpush1.bf16.xpose.msra.mxu0 0
        %1198 = vmatprep.subr.bf16.mxu0 0
        %1199 = vmatpush1.bf16.xpose.msra.mxu0 0
        %1200 = vmatprep.subr.bf16.mxu0 0
        %1201 = vmatpush1.bf16.xpose.msra.mxu0 0
        %1202 = vmatprep.subr.bf16.mxu0 0
        %1203 = vmatpush1.bf16.xpose.msra.mxu0 0
        %1204 = vmatprep.subr.bf16.mxu0 0
        %1205 = vmatpush1.bf16.xpose.msra.mxu0 0
        %1206 = vmatprep.subr.bf16.mxu0 0
        %1207 = vmatpush1.bf16.xpose.msra.mxu0 0
        %1208 = vmatprep.subr.bf16.mxu0 0
        %1209 = vmatpush1.bf16.xpose.msra.mxu0 0
        %1210 = vmatprep.subr.bf16.mxu0 0
        %1211 = vmatpush1.bf16.xpose.msra.mxu0 0
        %1212 = vmatprep.subr.bf16.mxu0 0
        %1213 = vmatpush1.bf16.xpose.msra.mxu0 0
        %1214 = vmatprep.subr.bf16.mxu0 0
        %1215 = vmatpush1.bf16.xpose.msra.mxu0 0
        %1216 = vmatprep.subr.bf16.mxu0 0
        %1217 = vmatpush1.bf16.xpose.msra.mxu0 0
        %1218 = vmatprep.subr.bf16.mxu0 0
        %1219 = vmatpush1.bf16.xpose.msra.mxu0 0
        %1220 = vmatprep.mubr.bf16.mxu0 0
        %1221 = vmatmul.mubr.bf16.gmra.mrb[0].mxu0 %v1183
        %v1222 = vpop.f32.mrb[0].mxu0
        %v1223 = vadd.f32 %v896, %v1222
        %v1224 = vpop.f32.mrb[0].mxu0
        %v1225 = vpop.f32.mrb[0].mxu0
        %v1226 = vpop.f32.mrb[0].mxu0
        %1227 = vdwg.mxu0
        %1229 = vrot.lane.b32.xlu0 %v843, 96
        %v1230 = vpop.permute.xlu0 %1229
        %v1232 = vsel %vm936, %v843, 0
        %v1235 = vsel %vm936, %v1230, 0
        %1237 = vmatprep.subr.bf16.mxu0 0
        %1238 = vmatpush1.bf16.xpose.msra.mxu0 %v1235
        %1239 = vmatprep.subr.bf16.mxu0 0
        %1240 = vmatpush1.bf16.xpose.msra.mxu0 0
        %1241 = vmatprep.subr.bf16.mxu0 0
        %1242 = vmatpush1.bf16.xpose.msra.mxu0 0
        %1243 = vmatprep.subr.bf16.mxu0 0
        %1244 = vmatpush1.bf16.xpose.msra.mxu0 0
        %1245 = vmatprep.subr.bf16.mxu0 0
        %1246 = vmatpush1.bf16.xpose.msra.mxu0 0
        %1247 = vmatprep.subr.bf16.mxu0 0
        %1248 = vmatpush1.bf16.xpose.msra.mxu0 0
        %1249 = vmatprep.subr.bf16.mxu0 0
        %1250 = vmatpush1.bf16.xpose.msra.mxu0 0
        %1251 = vmatprep.subr.bf16.mxu0 0
        %1252 = vmatpush1.bf16.xpose.msra.mxu0 0
        %1253 = vmatprep.subr.bf16.mxu0 0
        %1254 = vmatpush1.bf16.xpose.msra.mxu0 0
        %1255 = vmatprep.subr.bf16.mxu0 0
        %1256 = vmatpush1.bf16.xpose.msra.mxu0 0
        %1257 = vmatprep.subr.bf16.mxu0 0
        %1258 = vmatpush1.bf16.xpose.msra.mxu0 0
        %1259 = vmatprep.subr.bf16.mxu0 0
        %1260 = vmatpush1.bf16.xpose.msra.mxu0 0
        %1261 = vmatprep.subr.bf16.mxu0 0
        %1262 = vmatpush1.bf16.xpose.msra.mxu0 0
        %1263 = vmatprep.subr.bf16.mxu0 0
        %1264 = vmatpush1.bf16.xpose.msra.mxu0 0
        %1265 = vmatprep.subr.bf16.mxu0 0
        %1266 = vmatpush1.bf16.xpose.msra.mxu0 0
        %1267 = vmatprep.subr.bf16.mxu0 0
        %1268 = vmatpush1.bf16.xpose.msra.mxu0 0
        %1269 = vmatprep.mubr.bf16.mxu0 0
        %1270 = vmatmul.mubr.bf16.gmra.mrb[0].mxu0 %v1232
        %v1271 = vpop.f32.mrb[0].mxu0
        %v1272 = vadd.f32 %v900, %v1271
        %v1273 = vpop.f32.mrb[0].mxu0
        %v1274 = vpop.f32.mrb[0].mxu0
        %v1275 = vpop.f32.mrb[0].mxu0
        %1276 = vdwg.mxu0
        %1278 = vrot.lane.b32.xlu0 %v844, 96
        %v1279 = vpop.permute.xlu0 %1278
        %v1281 = vsel %vm936, %v844, 0
        %v1284 = vsel %vm936, %v1279, 0
        %1286 = vmatprep.subr.bf16.mxu0 0
        %1287 = vmatpush1.bf16.xpose.msra.mxu0 %v1284
        %1288 = vmatprep.subr.bf16.mxu0 0
        %1289 = vmatpush1.bf16.xpose.msra.mxu0 0
        %1290 = vmatprep.subr.bf16.mxu0 0
        %1291 = vmatpush1.bf16.xpose.msra.mxu0 0
        %1292 = vmatprep.subr.bf16.mxu0 0
        %1293 = vmatpush1.bf16.xpose.msra.mxu0 0
        %1294 = vmatprep.subr.bf16.mxu0 0
        %1295 = vmatpush1.bf16.xpose.msra.mxu0 0
        %1296 = vmatprep.subr.bf16.mxu0 0
        %1297 = vmatpush1.bf16.xpose.msra.mxu0 0
        %1298 = vmatprep.subr.bf16.mxu0 0
        %1299 = vmatpush1.bf16.xpose.msra.mxu0 0
        %1300 = vmatprep.subr.bf16.mxu0 0
        %1301 = vmatpush1.bf16.xpose.msra.mxu0 0
        %1302 = vmatprep.subr.bf16.mxu0 0
        %1303 = vmatpush1.bf16.xpose.msra.mxu0 0
        %1304 = vmatprep.subr.bf16.mxu0 0
        %1305 = vmatpush1.bf16.xpose.msra.mxu0 0
        %1306 = vmatprep.subr.bf16.mxu0 0
        %1307 = vmatpush1.bf16.xpose.msra.mxu0 0
        %1308 = vmatprep.subr.bf16.mxu0 0
        %1309 = vmatpush1.bf16.xpose.msra.mxu0 0
        %1310 = vmatprep.subr.bf16.mxu0 0
        %1311 = vmatpush1.bf16.xpose.msra.mxu0 0
        %1312 = vmatprep.subr.bf16.mxu0 0
        %1313 = vmatpush1.bf16.xpose.msra.mxu0 0
        %1314 = vmatprep.subr.bf16.mxu0 0
        %1315 = vmatpush1.bf16.xpose.msra.mxu0 0
        %1316 = vmatprep.subr.bf16.mxu0 0
        %1317 = vmatpush1.bf16.xpose.msra.mxu0 0
        %1318 = vmatprep.mubr.bf16.mxu0 0
        %1319 = vmatmul.mubr.bf16.gmra.mrb[0].mxu0 %v1281
        %v1320 = vpop.f32.mrb[0].mxu0
        %v1321 = vadd.f32 %v904, %v1320
        %v1322 = vpop.f32.mrb[0].mxu0
        %v1323 = vpop.f32.mrb[0].mxu0
        %v1324 = vpop.f32.mrb[0].mxu0
        %1325 = vdwg.mxu0
        %1327 = vrot.lane.b32.xlu0 %v845, 96
        %v1328 = vpop.permute.xlu0 %1327
        %v1330 = vsel %vm936, %v845, 0
        %v1333 = vsel %vm936, %v1328, 0
        %1335 = vmatprep.subr.bf16.mxu0 0
        %1336 = vmatpush1.bf16.xpose.msra.mxu0 %v1333
        %1337 = vmatprep.subr.bf16.mxu0 0
        %1338 = vmatpush1.bf16.xpose.msra.mxu0 0
        %1339 = vmatprep.subr.bf16.mxu0 0
        %1340 = vmatpush1.bf16.xpose.msra.mxu0 0
        %1341 = vmatprep.subr.bf16.mxu0 0
        %1342 = vmatpush1.bf16.xpose.msra.mxu0 0
        %1343 = vmatprep.subr.bf16.mxu0 0
        %1344 = vmatpush1.bf16.xpose.msra.mxu0 0
        %1345 = vmatprep.subr.bf16.mxu0 0
        %1346 = vmatpush1.bf16.xpose.msra.mxu0 0
        %1347 = vmatprep.subr.bf16.mxu0 0
        %1348 = vmatpush1.bf16.xpose.msra.mxu0 0
        %1349 = vmatprep.subr.bf16.mxu0 0
        %1350 = vmatpush1.bf16.xpose.msra.mxu0 0
        %1351 = vmatprep.subr.bf16.mxu0 0
        %1352 = vmatpush1.bf16.xpose.msra.mxu0 0
        %1353 = vmatprep.subr.bf16.mxu0 0
        %1354 = vmatpush1.bf16.xpose.msra.mxu0 0
        %1355 = vmatprep.subr.bf16.mxu0 0
        %1356 = vmatpush1.bf16.xpose.msra.mxu0 0
        %1357 = vmatprep.subr.bf16.mxu0 0
        %1358 = vmatpush1.bf16.xpose.msra.mxu0 0
        %1359 = vmatprep.subr.bf16.mxu0 0
        %1360 = vmatpush1.bf16.xpose.msra.mxu0 0
        %1361 = vmatprep.subr.bf16.mxu0 0
        %1362 = vmatpush1.bf16.xpose.msra.mxu0 0
        %1363 = vmatprep.subr.bf16.mxu0 0
        %1364 = vmatpush1.bf16.xpose.msra.mxu0 0
        %1365 = vmatprep.subr.bf16.mxu0 0
        %1366 = vmatpush1.bf16.xpose.msra.mxu0 0
        %1367 = vmatprep.mubr.bf16.mxu0 0
        %1368 = vmatmul.mubr.bf16.gmra.mrb[0].mxu0 %v1330
        %v1369 = vpop.f32.mrb[0].mxu0
        %v1370 = vadd.f32 %v908, %v1369
        %v1371 = vpop.f32.mrb[0].mxu0
        %v1372 = vpop.f32.mrb[0].mxu0
        %v1373 = vpop.f32.mrb[0].mxu0
        %1374 = vdwg.mxu0
        %1376 = vrot.lane.b32.xlu0 %v846, 96
        %v1377 = vpop.permute.xlu0 %1376
        %v1379 = vsel %vm936, %v846, 0
        %v1382 = vsel %vm936, %v1377, 0
        %1384 = vmatprep.subr.bf16.mxu0 0
        %1385 = vmatpush1.bf16.xpose.msra.mxu0 %v1382
        %1386 = vmatprep.subr.bf16.mxu0 0
        %1387 = vmatpush1.bf16.xpose.msra.mxu0 0
        %1388 = vmatprep.subr.bf16.mxu0 0
        %1389 = vmatpush1.bf16.xpose.msra.mxu0 0
        %1390 = vmatprep.subr.bf16.mxu0 0
        %1391 = vmatpush1.bf16.xpose.msra.mxu0 0
        %1392 = vmatprep.subr.bf16.mxu0 0
        %1393 = vmatpush1.bf16.xpose.msra.mxu0 0
        %1394 = vmatprep.subr.bf16.mxu0 0
        %1395 = vmatpush1.bf16.xpose.msra.mxu0 0
        %1396 = vmatprep.subr.bf16.mxu0 0
        %1397 = vmatpush1.bf16.xpose.msra.mxu0 0
        %1398 = vmatprep.subr.bf16.mxu0 0
        %1399 = vmatpush1.bf16.xpose.msra.mxu0 0
        %1400 = vmatprep.subr.bf16.mxu0 0
        %1401 = vmatpush1.bf16.xpose.msra.mxu0 0
        %1402 = vmatprep.subr.bf16.mxu0 0
        %1403 = vmatpush1.bf16.xpose.msra.mxu0 0
        %1404 = vmatprep.subr.bf16.mxu0 0
        %1405 = vmatpush1.bf16.xpose.msra.mxu0 0
        %1406 = vmatprep.subr.bf16.mxu0 0
        %1407 = vmatpush1.bf16.xpose.msra.mxu0 0
        %1408 = vmatprep.subr.bf16.mxu0 0
        %1409 = vmatpush1.bf16.xpose.msra.mxu0 0
        %1410 = vmatprep.subr.bf16.mxu0 0
        %1411 = vmatpush1.bf16.xpose.msra.mxu0 0
        %1412 = vmatprep.subr.bf16.mxu0 0
        %1413 = vmatpush1.bf16.xpose.msra.mxu0 0
        %1414 = vmatprep.subr.bf16.mxu0 0
        %1415 = vmatpush1.bf16.xpose.msra.mxu0 0
        %1416 = vmatprep.mubr.bf16.mxu0 0
        %1417 = vmatmul.mubr.bf16.gmra.mrb[0].mxu0 %v1379
        %v1418 = vpop.f32.mrb[0].mxu0
        %v1419 = vadd.f32 %v912, %v1418
        %v1420 = vpop.f32.mrb[0].mxu0
        %v1421 = vpop.f32.mrb[0].mxu0
        %v1422 = vpop.f32.mrb[0].mxu0
        %1423 = vdwg.mxu0
        %1425 = vrot.lane.b32.xlu0 %v847, 96
        %v1426 = vpop.permute.xlu0 %1425
        %v1428 = vsel %vm936, %v847, 0
        %v1431 = vsel %vm936, %v1426, 0
        %1433 = vmatprep.subr.bf16.mxu0 0
        %1434 = vmatpush1.bf16.xpose.msra.mxu0 %v1431
        %1435 = vmatprep.subr.bf16.mxu0 0
        %1436 = vmatpush1.bf16.xpose.msra.mxu0 0
        %1437 = vmatprep.subr.bf16.mxu0 0
        %1438 = vmatpush1.bf16.xpose.msra.mxu0 0
        %1439 = vmatprep.subr.bf16.mxu0 0
        %1440 = vmatpush1.bf16.xpose.msra.mxu0 0
        %1441 = vmatprep.subr.bf16.mxu0 0
        %1442 = vmatpush1.bf16.xpose.msra.mxu0 0
        %1443 = vmatprep.subr.bf16.mxu0 0
        %1444 = vmatpush1.bf16.xpose.msra.mxu0 0
        %1445 = vmatprep.subr.bf16.mxu0 0
        %1446 = vmatpush1.bf16.xpose.msra.mxu0 0
        %1447 = vmatprep.subr.bf16.mxu0 0
        %1448 = vmatpush1.bf16.xpose.msra.mxu0 0
        %1449 = vmatprep.subr.bf16.mxu0 0
        %1450 = vmatpush1.bf16.xpose.msra.mxu0 0
        %1451 = vmatprep.subr.bf16.mxu0 0
        %1452 = vmatpush1.bf16.xpose.msra.mxu0 0
        %1453 = vmatprep.subr.bf16.mxu0 0
        %1454 = vmatpush1.bf16.xpose.msra.mxu0 0
        %1455 = vmatprep.subr.bf16.mxu0 0
        %1456 = vmatpush1.bf16.xpose.msra.mxu0 0
        %1457 = vmatprep.subr.bf16.mxu0 0
        %1458 = vmatpush1.bf16.xpose.msra.mxu0 0
        %1459 = vmatprep.subr.bf16.mxu0 0
        %1460 = vmatpush1.bf16.xpose.msra.mxu0 0
        %1461 = vmatprep.subr.bf16.mxu0 0
        %1462 = vmatpush1.bf16.xpose.msra.mxu0 0
        %1463 = vmatprep.subr.bf16.mxu0 0
        %1464 = vmatpush1.bf16.xpose.msra.mxu0 0
        %1465 = vmatprep.mubr.bf16.mxu0 0
        %1466 = vmatmul.mubr.bf16.gmra.mrb[0].mxu0 %v1428
        %v1467 = vpop.f32.mrb[0].mxu0
        %v1468 = vadd.f32 %v916, %v1467
        %v1469 = vpop.f32.mrb[0].mxu0
        %v1470 = vpop.f32.mrb[0].mxu0
        %v1471 = vpop.f32.mrb[0].mxu0
        %1472 = vdwg.mxu0
        %1474 = vrot.lane.b32.xlu0 %v848, 96
        %v1475 = vpop.permute.xlu0 %1474
        %v1477 = vsel %vm936, %v848, 0
        %v1480 = vsel %vm936, %v1475, 0
        %1482 = vmatprep.subr.bf16.mxu0 0
        %1483 = vmatpush1.bf16.xpose.msra.mxu0 %v1480
        %1484 = vmatprep.subr.bf16.mxu0 0
        %1485 = vmatpush1.bf16.xpose.msra.mxu0 0
        %1486 = vmatprep.subr.bf16.mxu0 0
        %1487 = vmatpush1.bf16.xpose.msra.mxu0 0
        %1488 = vmatprep.subr.bf16.mxu0 0
        %1489 = vmatpush1.bf16.xpose.msra.mxu0 0
        %1490 = vmatprep.subr.bf16.mxu0 0
        %1491 = vmatpush1.bf16.xpose.msra.mxu0 0
        %1492 = vmatprep.subr.bf16.mxu0 0
        %1493 = vmatpush1.bf16.xpose.msra.mxu0 0
        %1494 = vmatprep.subr.bf16.mxu0 0
        %1495 = vmatpush1.bf16.xpose.msra.mxu0 0
        %1496 = vmatprep.subr.bf16.mxu0 0
        %1497 = vmatpush1.bf16.xpose.msra.mxu0 0
        %1498 = vmatprep.subr.bf16.mxu0 0
        %1499 = vmatpush1.bf16.xpose.msra.mxu0 0
        %1500 = vmatprep.subr.bf16.mxu0 0
        %1501 = vmatpush1.bf16.xpose.msra.mxu0 0
        %1502 = vmatprep.subr.bf16.mxu0 0
        %1503 = vmatpush1.bf16.xpose.msra.mxu0 0
        %1504 = vmatprep.subr.bf16.mxu0 0
        %1505 = vmatpush1.bf16.xpose.msra.mxu0 0
        %1506 = vmatprep.subr.bf16.mxu0 0
        %1507 = vmatpush1.bf16.xpose.msra.mxu0 0
        %1508 = vmatprep.subr.bf16.mxu0 0
        %1509 = vmatpush1.bf16.xpose.msra.mxu0 0
        %1510 = vmatprep.subr.bf16.mxu0 0
        %1511 = vmatpush1.bf16.xpose.msra.mxu0 0
        %1512 = vmatprep.subr.bf16.mxu0 0
        %1513 = vmatpush1.bf16.xpose.msra.mxu0 0
        %1514 = vmatprep.mubr.bf16.mxu0 0
        %1515 = vmatmul.mubr.bf16.gmra.mrb[0].mxu0 %v1477
        %v1516 = vpop.f32.mrb[0].mxu0
        %v1517 = vadd.f32 %v920, %v1516
        %v1518 = vpop.f32.mrb[0].mxu0
        %v1519 = vpop.f32.mrb[0].mxu0
        %v1520 = vpop.f32.mrb[0].mxu0
        %1521 = vdwg.mxu0
        %vm1522 = vcmask 64512
        %v1523 = vsel %vm1522, %v978, -inf
        %1524 = vmax.xlane.f32.xlu0 %v1523
        %v1525 = vpop.xlane.xlu0 %1524
        %v1526 = vsel %vm1522, %v1027, -inf
        %1527 = vmax.xlane.f32.xlu0 %v1526
        %v1528 = vpop.xlane.xlu0 %1527
        %v1529 = vsel %vm1522, %v1076, -inf
        %1530 = vmax.xlane.f32.xlu0 %v1529
        %v1531 = vpop.xlane.xlu0 %1530
        %v1532 = vsel %vm1522, %v1125, -inf
        %1533 = vmax.xlane.f32.xlu0 %v1532
        %v1534 = vpop.xlane.xlu0 %1533
        %v1535 = vsel %vm1522, %v1174, -inf
        %1536 = vmax.xlane.f32.xlu0 %v1535
        %v1537 = vpop.xlane.xlu0 %1536
        %v1538 = vsel %vm1522, %v1223, -inf
        %1539 = vmax.xlane.f32.xlu0 %v1538
        %v1540 = vpop.xlane.xlu0 %1539
        %v1541 = vsel %vm1522, %v1272, -inf
        %1542 = vmax.xlane.f32.xlu0 %v1541
        %v1543 = vpop.xlane.xlu0 %1542
        %v1544 = vsel %vm1522, %v1321, -inf
        %1545 = vmax.xlane.f32.xlu0 %v1544
        %v1546 = vpop.xlane.xlu0 %1545
        %v1547 = vsel %vm1522, %v1370, -inf
        %1548 = vmax.xlane.f32.xlu0 %v1547
        %v1549 = vpop.xlane.xlu0 %1548
        %v1550 = vsel %vm1522, %v1419, -inf
        %1551 = vmax.xlane.f32.xlu0 %v1550
        %v1552 = vpop.xlane.xlu0 %1551
        %v1553 = vsel %vm1522, %v1468, -inf
        %1554 = vmax.xlane.f32.xlu0 %v1553
        %v1555 = vpop.xlane.xlu0 %1554
        %v1556 = vsel %vm1522, %v1517, -inf
        %1557 = vmax.xlane.f32.xlu0 %v1556
        %v1558 = vpop.xlane.xlu0 %1557
        %v1559 = vsub.f32 %v978, %v1525
        %v1560 = vsub.f32 %v1027, %v1528
        %v1561 = vsub.f32 %v1076, %v1531
        %v1562 = vsub.f32 %v1125, %v1534
        %v1563 = vsub.f32 %v1174, %v1537
        %v1564 = vsub.f32 %v1223, %v1540
        %v1565 = vsub.f32 %v1272, %v1543
        %v1566 = vsub.f32 %v1321, %v1546
        %v1567 = vsub.f32 %v1370, %v1549
        %v1568 = vsub.f32 %v1419, %v1552
        %v1569 = vsub.f32 %v1468, %v1555
        %v1570 = vsub.f32 %v1517, %v1558
        %v1571 = vmul.f32 %v1559, 1.442695
        %v1572 = vpow.pop %v1571
        %v1573 = vmul.f32 %v1560, 1.442695
        %v1574 = vpow.pop %v1573
        %v1575 = vmul.f32 %v1561, 1.442695
        %v1576 = vpow.pop %v1575
        %v1577 = vmul.f32 %v1562, 1.442695
        %v1578 = vpow.pop %v1577
        %v1579 = vmul.f32 %v1563, 1.442695
        %v1580 = vpow.pop %v1579
        %v1581 = vmul.f32 %v1564, 1.442695
        %v1582 = vpow.pop %v1581
        %v1583 = vmul.f32 %v1565, 1.442695
        %v1584 = vpow.pop %v1583
        %v1585 = vmul.f32 %v1566, 1.442695
        %v1586 = vpow.pop %v1585
        %v1587 = vmul.f32 %v1567, 1.442695
        %v1588 = vpow.pop %v1587
        %v1589 = vmul.f32 %v1568, 1.442695
        %v1590 = vpow.pop %v1589
        %v1591 = vmul.f32 %v1569, 1.442695
        %v1592 = vpow.pop %v1591
        %v1593 = vmul.f32 %v1570, 1.442695
        %v1594 = vpow.pop %v1593
        %v1595 = vsel %vm1522, %v1572, 0.0
        %1596 = vadd.xlane.f32.xlu0 %v1595
        %v1597 = vpop.xlane.xlu0 %1596
        %v1598 = vsel %vm1522, %v1574, 0.0
        %1599 = vadd.xlane.f32.xlu0 %v1598
        %v1600 = vpop.xlane.xlu0 %1599
        %v1601 = vsel %vm1522, %v1576, 0.0
        %1602 = vadd.xlane.f32.xlu0 %v1601
        %v1603 = vpop.xlane.xlu0 %1602
        %v1604 = vsel %vm1522, %v1578, 0.0
        %1605 = vadd.xlane.f32.xlu0 %v1604
        %v1606 = vpop.xlane.xlu0 %1605
        %v1607 = vsel %vm1522, %v1580, 0.0
        %1608 = vadd.xlane.f32.xlu0 %v1607
        %v1609 = vpop.xlane.xlu0 %1608
        %v1610 = vsel %vm1522, %v1582, 0.0
        %1611 = vadd.xlane.f32.xlu0 %v1610
        %v1612 = vpop.xlane.xlu0 %1611
        %v1613 = vsel %vm1522, %v1584, 0.0
        %1614 = vadd.xlane.f32.xlu0 %v1613
        %v1615 = vpop.xlane.xlu0 %1614
        %v1616 = vsel %vm1522, %v1586, 0.0
        %1617 = vadd.xlane.f32.xlu0 %v1616
        %v1618 = vpop.xlane.xlu0 %1617
        %v1619 = vsel %vm1522, %v1588, 0.0
        %1620 = vadd.xlane.f32.xlu0 %v1619
        %v1621 = vpop.xlane.xlu0 %1620
        %v1622 = vsel %vm1522, %v1590, 0.0
        %1623 = vadd.xlane.f32.xlu0 %v1622
        %v1624 = vpop.xlane.xlu0 %1623
        %v1625 = vsel %vm1522, %v1592, 0.0
        %1626 = vadd.xlane.f32.xlu0 %v1625
        %v1627 = vpop.xlane.xlu0 %1626
        %v1628 = vsel %vm1522, %v1594, 0.0
        %1629 = vadd.xlane.f32.xlu0 %v1628
        %v1630 = vpop.xlane.xlu0 %1629
        %v1631 = vrcp.pop %v1597
        %v1632 = vrcp.pop %v1600
        %v1633 = vrcp.pop %v1603
        %v1634 = vrcp.pop %v1606
        %v1635 = vrcp.pop %v1609
        %v1636 = vrcp.pop %v1612
        %v1637 = vrcp.pop %v1615
        %v1638 = vrcp.pop %v1618
        %v1639 = vrcp.pop %v1621
        %v1640 = vrcp.pop %v1624
        %v1641 = vrcp.pop %v1627
        %v1642 = vrcp.pop %v1630
        %v1643 = vmul.f32 %v1572, %v1631
        %v1644 = vmul.f32 %v1574, %v1632
        %v1645 = vmul.f32 %v1576, %v1633
        %v1646 = vmul.f32 %v1578, %v1634
        %v1647 = vmul.f32 %v1580, %v1635
        %v1648 = vmul.f32 %v1582, %v1636
        %v1649 = vmul.f32 %v1584, %v1637
        %v1650 = vmul.f32 %v1586, %v1638
        %v1651 = vmul.f32 %v1588, %v1639
        %v1652 = vmul.f32 %v1590, %v1640
        %v1653 = vmul.f32 %v1592, %v1641
        %v1654 = vmul.f32 %v1594, %v1642
        %v1655 = vpack.c.bf16 %v1643, %v1643
        %v1656 = vpack.c.bf16 %v1644, %v1644
        %v1657 = vpack.c.bf16 %v1645, %v1645
        %v1658 = vpack.c.bf16 %v1646, %v1646
        %v1659 = vpack.c.bf16 %v1647, %v1647
        %v1660 = vpack.c.bf16 %v1648, %v1648
        %v1661 = vpack.c.bf16 %v1649, %v1649
        %v1662 = vpack.c.bf16 %v1650, %v1650
        %v1663 = vpack.c.bf16 %v1651, %v1651
        %v1664 = vpack.c.bf16 %v1652, %v1652
        %v1665 = vpack.c.bf16 %v1653, %v1653
        %v1666 = vpack.c.bf16 %v1654, %v1654
        %1667 = vrot.lane.b32.xlu0 %v837, 64
        %v1668 = vpop.permute.xlu0 %1667
        %v1670 = vsel %vm1522, %v1655, 0
        %vm1672 = vcmask 1043456
        %v1674 = vsel %vm1672, %v1668, 0
        %1676 = vmatprep.subr.bf16.mxu0 0
        %1677 = vmatpush1.bf16.msra.mxu0 %v1674
        %1678 = vmatprep.subr.bf16.mxu0 0
        %1679 = vmatpush1.bf16.msra.mxu0 0
        %1680 = vmatprep.subr.bf16.mxu0 0
        %1681 = vmatpush1.bf16.msra.mxu0 0
        %1682 = vmatprep.subr.bf16.mxu0 0
        %1683 = vmatpush1.bf16.msra.mxu0 0
        %1684 = vmatprep.subr.bf16.mxu0 0
        %1685 = vmatpush1.bf16.msra.mxu0 0
        %1686 = vmatprep.subr.bf16.mxu0 0
        %1687 = vmatpush1.bf16.msra.mxu0 0
        %1688 = vmatprep.subr.bf16.mxu0 0
        %1689 = vmatpush1.bf16.msra.mxu0 0
        %1690 = vmatprep.subr.bf16.mxu0 0
        %1691 = vmatpush1.bf16.msra.mxu0 0
        %1692 = vmatprep.subr.bf16.mxu0 0
        %1693 = vmatpush1.bf16.msra.mxu0 0
        %1694 = vmatprep.subr.bf16.mxu0 0
        %1695 = vmatpush1.bf16.msra.mxu0 0
        %1696 = vmatprep.subr.bf16.mxu0 0
        %1697 = vmatpush1.bf16.msra.mxu0 0
        %1698 = vmatprep.subr.bf16.mxu0 0
        %1699 = vmatpush1.bf16.msra.mxu0 0
        %1700 = vmatprep.subr.bf16.mxu0 0
        %1701 = vmatpush1.bf16.msra.mxu0 0
        %1702 = vmatprep.subr.bf16.mxu0 0
        %1703 = vmatpush1.bf16.msra.mxu0 0
        %1704 = vmatprep.subr.bf16.mxu0 0
        %1705 = vmatpush1.bf16.msra.mxu0 0
        %1706 = vmatprep.subr.bf16.mxu0 0
        %1707 = vmatpush1.bf16.msra.mxu0 0
        %1708 = vmatprep.mubr.bf16.mxu0 0
        %1709 = vmatmul.mubr.bf16.gmra.mrb[0].mxu0 %v1670
        %v1710 = vpop.f32.mrb[0].mxu0
        %v1711 = vadd.f32 0.0, %v1710
        %v1712 = vpop.f32.mrb[0].mxu0
        %v1713 = vpop.f32.mrb[0].mxu0
        %v1714 = vpop.f32.mrb[0].mxu0
        %1715 = vdwg.mxu0
        %1716 = vrot.lane.b32.xlu0 %v838, 64
        %v1717 = vpop.permute.xlu0 %1716
        %v1719 = vsel %vm1522, %v1656, 0
        %v1722 = vsel %vm1672, %v1717, 0
        %1724 = vmatprep.subr.bf16.mxu0 0
        %1725 = vmatpush1.bf16.msra.mxu0 %v1722
        %1726 = vmatprep.subr.bf16.mxu0 0
        %1727 = vmatpush1.bf16.msra.mxu0 0
        %1728 = vmatprep.subr.bf16.mxu0 0
        %1729 = vmatpush1.bf16.msra.mxu0 0
        %1730 = vmatprep.subr.bf16.mxu0 0
        %1731 = vmatpush1.bf16.msra.mxu0 0
        %1732 = vmatprep.subr.bf16.mxu0 0
        %1733 = vmatpush1.bf16.msra.mxu0 0
        %1734 = vmatprep.subr.bf16.mxu0 0
        %1735 = vmatpush1.bf16.msra.mxu0 0
        %1736 = vmatprep.subr.bf16.mxu0 0
        %1737 = vmatpush1.bf16.msra.mxu0 0
        %1738 = vmatprep.subr.bf16.mxu0 0
        %1739 = vmatpush1.bf16.msra.mxu0 0
        %1740 = vmatprep.subr.bf16.mxu0 0
        %1741 = vmatpush1.bf16.msra.mxu0 0
        %1742 = vmatprep.subr.bf16.mxu0 0
        %1743 = vmatpush1.bf16.msra.mxu0 0
        %1744 = vmatprep.subr.bf16.mxu0 0
        %1745 = vmatpush1.bf16.msra.mxu0 0
        %1746 = vmatprep.subr.bf16.mxu0 0
        %1747 = vmatpush1.bf16.msra.mxu0 0
        %1748 = vmatprep.subr.bf16.mxu0 0
        %1749 = vmatpush1.bf16.msra.mxu0 0
        %1750 = vmatprep.subr.bf16.mxu0 0
        %1751 = vmatpush1.bf16.msra.mxu0 0
        %1752 = vmatprep.subr.bf16.mxu0 0
        %1753 = vmatpush1.bf16.msra.mxu0 0
        %1754 = vmatprep.subr.bf16.mxu0 0
        %1755 = vmatpush1.bf16.msra.mxu0 0
        %1756 = vmatprep.mubr.bf16.mxu0 0
        %1757 = vmatmul.mubr.bf16.gmra.mrb[0].mxu0 %v1719
        %v1758 = vpop.f32.mrb[0].mxu0
        %v1759 = vadd.f32 0.0, %v1758
        %v1760 = vpop.f32.mrb[0].mxu0
        %v1761 = vpop.f32.mrb[0].mxu0
        %v1762 = vpop.f32.mrb[0].mxu0
        %1763 = vdwg.mxu0
        %1764 = vrot.lane.b32.xlu0 %v839, 64
        %v1765 = vpop.permute.xlu0 %1764
        %v1767 = vsel %vm1522, %v1657, 0
        %v1770 = vsel %vm1672, %v1765, 0
        %1772 = vmatprep.subr.bf16.mxu0 0
        %1773 = vmatpush1.bf16.msra.mxu0 %v1770
        %1774 = vmatprep.subr.bf16.mxu0 0
        %1775 = vmatpush1.bf16.msra.mxu0 0
        %1776 = vmatprep.subr.bf16.mxu0 0
        %1777 = vmatpush1.bf16.msra.mxu0 0
        %1778 = vmatprep.subr.bf16.mxu0 0
        %1779 = vmatpush1.bf16.msra.mxu0 0
        %1780 = vmatprep.subr.bf16.mxu0 0
        %1781 = vmatpush1.bf16.msra.mxu0 0
        %1782 = vmatprep.subr.bf16.mxu0 0
        %1783 = vmatpush1.bf16.msra.mxu0 0
        %1784 = vmatprep.subr.bf16.mxu0 0
        %1785 = vmatpush1.bf16.msra.mxu0 0
        %1786 = vmatprep.subr.bf16.mxu0 0
        %1787 = vmatpush1.bf16.msra.mxu0 0
        %1788 = vmatprep.subr.bf16.mxu0 0
        %1789 = vmatpush1.bf16.msra.mxu0 0
        %1790 = vmatprep.subr.bf16.mxu0 0
        %1791 = vmatpush1.bf16.msra.mxu0 0
        %1792 = vmatprep.subr.bf16.mxu0 0
        %1793 = vmatpush1.bf16.msra.mxu0 0
        %1794 = vmatprep.subr.bf16.mxu0 0
        %1795 = vmatpush1.bf16.msra.mxu0 0
        %1796 = vmatprep.subr.bf16.mxu0 0
        %1797 = vmatpush1.bf16.msra.mxu0 0
        %1798 = vmatprep.subr.bf16.mxu0 0
        %1799 = vmatpush1.bf16.msra.mxu0 0
        %1800 = vmatprep.subr.bf16.mxu0 0
        %1801 = vmatpush1.bf16.msra.mxu0 0
        %1802 = vmatprep.subr.bf16.mxu0 0
        %1803 = vmatpush1.bf16.msra.mxu0 0
        %1804 = vmatprep.mubr.bf16.mxu0 0
        %1805 = vmatmul.mubr.bf16.gmra.mrb[0].mxu0 %v1767
        %v1806 = vpop.f32.mrb[0].mxu0
        %v1807 = vadd.f32 0.0, %v1806
        %v1808 = vpop.f32.mrb[0].mxu0
        %v1809 = vpop.f32.mrb[0].mxu0
        %v1810 = vpop.f32.mrb[0].mxu0
        %1811 = vdwg.mxu0
        %1812 = vrot.lane.b32.xlu0 %v840, 64
        %v1813 = vpop.permute.xlu0 %1812
        %v1815 = vsel %vm1522, %v1658, 0
        %v1818 = vsel %vm1672, %v1813, 0
        %1820 = vmatprep.subr.bf16.mxu0 0
        %1821 = vmatpush1.bf16.msra.mxu0 %v1818
        %1822 = vmatprep.subr.bf16.mxu0 0
        %1823 = vmatpush1.bf16.msra.mxu0 0
        %1824 = vmatprep.subr.bf16.mxu0 0
        %1825 = vmatpush1.bf16.msra.mxu0 0
        %1826 = vmatprep.subr.bf16.mxu0 0
        %1827 = vmatpush1.bf16.msra.mxu0 0
        %1828 = vmatprep.subr.bf16.mxu0 0
        %1829 = vmatpush1.bf16.msra.mxu0 0
        %1830 = vmatprep.subr.bf16.mxu0 0
        %1831 = vmatpush1.bf16.msra.mxu0 0
        %1832 = vmatprep.subr.bf16.mxu0 0
        %1833 = vmatpush1.bf16.msra.mxu0 0
        %1834 = vmatprep.subr.bf16.mxu0 0
        %1835 = vmatpush1.bf16.msra.mxu0 0
        %1836 = vmatprep.subr.bf16.mxu0 0
        %1837 = vmatpush1.bf16.msra.mxu0 0
        %1838 = vmatprep.subr.bf16.mxu0 0
        %1839 = vmatpush1.bf16.msra.mxu0 0
        %1840 = vmatprep.subr.bf16.mxu0 0
        %1841 = vmatpush1.bf16.msra.mxu0 0
        %1842 = vmatprep.subr.bf16.mxu0 0
        %1843 = vmatpush1.bf16.msra.mxu0 0
        %1844 = vmatprep.subr.bf16.mxu0 0
        %1845 = vmatpush1.bf16.msra.mxu0 0
        %1846 = vmatprep.subr.bf16.mxu0 0
        %1847 = vmatpush1.bf16.msra.mxu0 0
        %1848 = vmatprep.subr.bf16.mxu0 0
        %1849 = vmatpush1.bf16.msra.mxu0 0
        %1850 = vmatprep.subr.bf16.mxu0 0
        %1851 = vmatpush1.bf16.msra.mxu0 0
        %1852 = vmatprep.mubr.bf16.mxu0 0
        %1853 = vmatmul.mubr.bf16.gmra.mrb[0].mxu0 %v1815
        %v1854 = vpop.f32.mrb[0].mxu0
        %v1855 = vadd.f32 0.0, %v1854
        %v1856 = vpop.f32.mrb[0].mxu0
        %v1857 = vpop.f32.mrb[0].mxu0
        %v1858 = vpop.f32.mrb[0].mxu0
        %1859 = vdwg.mxu0
        %1860 = vrot.lane.b32.xlu0 %v841, 64
        %v1861 = vpop.permute.xlu0 %1860
        %v1863 = vsel %vm1522, %v1659, 0
        %v1866 = vsel %vm1672, %v1861, 0
        %1868 = vmatprep.subr.bf16.mxu0 0
        %1869 = vmatpush1.bf16.msra.mxu0 %v1866
        %1870 = vmatprep.subr.bf16.mxu0 0
        %1871 = vmatpush1.bf16.msra.mxu0 0
        %1872 = vmatprep.subr.bf16.mxu0 0
        %1873 = vmatpush1.bf16.msra.mxu0 0
        %1874 = vmatprep.subr.bf16.mxu0 0
        %1875 = vmatpush1.bf16.msra.mxu0 0
        %1876 = vmatprep.subr.bf16.mxu0 0
        %1877 = vmatpush1.bf16.msra.mxu0 0
        %1878 = vmatprep.subr.bf16.mxu0 0
        %1879 = vmatpush1.bf16.msra.mxu0 0
        %1880 = vmatprep.subr.bf16.mxu0 0
        %1881 = vmatpush1.bf16.msra.mxu0 0
        %1882 = vmatprep.subr.bf16.mxu0 0
        %1883 = vmatpush1.bf16.msra.mxu0 0
        %1884 = vmatprep.subr.bf16.mxu0 0
        %1885 = vmatpush1.bf16.msra.mxu0 0
        %1886 = vmatprep.subr.bf16.mxu0 0
        %1887 = vmatpush1.bf16.msra.mxu0 0
        %1888 = vmatprep.subr.bf16.mxu0 0
        %1889 = vmatpush1.bf16.msra.mxu0 0
        %1890 = vmatprep.subr.bf16.mxu0 0
        %1891 = vmatpush1.bf16.msra.mxu0 0
        %1892 = vmatprep.subr.bf16.mxu0 0
        %1893 = vmatpush1.bf16.msra.mxu0 0
        %1894 = vmatprep.subr.bf16.mxu0 0
        %1895 = vmatpush1.bf16.msra.mxu0 0
        %1896 = vmatprep.subr.bf16.mxu0 0
        %1897 = vmatpush1.bf16.msra.mxu0 0
        %1898 = vmatprep.subr.bf16.mxu0 0
        %1899 = vmatpush1.bf16.msra.mxu0 0
        %1900 = vmatprep.mubr.bf16.mxu0 0
        %1901 = vmatmul.mubr.bf16.gmra.mrb[0].mxu0 %v1863
        %v1902 = vpop.f32.mrb[0].mxu0
        %v1903 = vadd.f32 0.0, %v1902
        %v1904 = vpop.f32.mrb[0].mxu0
        %v1905 = vpop.f32.mrb[0].mxu0
        %v1906 = vpop.f32.mrb[0].mxu0
        %1907 = vdwg.mxu0
        %1908 = vrot.lane.b32.xlu0 %v842, 64
        %v1909 = vpop.permute.xlu0 %1908
        %v1911 = vsel %vm1522, %v1660, 0
        %v1914 = vsel %vm1672, %v1909, 0
        %1916 = vmatprep.subr.bf16.mxu0 0
        %1917 = vmatpush1.bf16.msra.mxu0 %v1914
        %1918 = vmatprep.subr.bf16.mxu0 0
        %1919 = vmatpush1.bf16.msra.mxu0 0
        %1920 = vmatprep.subr.bf16.mxu0 0
        %1921 = vmatpush1.bf16.msra.mxu0 0
        %1922 = vmatprep.subr.bf16.mxu0 0
        %1923 = vmatpush1.bf16.msra.mxu0 0
        %1924 = vmatprep.subr.bf16.mxu0 0
        %1925 = vmatpush1.bf16.msra.mxu0 0
        %1926 = vmatprep.subr.bf16.mxu0 0
        %1927 = vmatpush1.bf16.msra.mxu0 0
        %1928 = vmatprep.subr.bf16.mxu0 0
        %1929 = vmatpush1.bf16.msra.mxu0 0
        %1930 = vmatprep.subr.bf16.mxu0 0
        %1931 = vmatpush1.bf16.msra.mxu0 0
        %1932 = vmatprep.subr.bf16.mxu0 0
        %1933 = vmatpush1.bf16.msra.mxu0 0
        %1934 = vmatprep.subr.bf16.mxu0 0
        %1935 = vmatpush1.bf16.msra.mxu0 0
        %1936 = vmatprep.subr.bf16.mxu0 0
        %1937 = vmatpush1.bf16.msra.mxu0 0
        %1938 = vmatprep.subr.bf16.mxu0 0
        %1939 = vmatpush1.bf16.msra.mxu0 0
        %1940 = vmatprep.subr.bf16.mxu0 0
        %1941 = vmatpush1.bf16.msra.mxu0 0
        %1942 = vmatprep.subr.bf16.mxu0 0
        %1943 = vmatpush1.bf16.msra.mxu0 0
        %1944 = vmatprep.subr.bf16.mxu0 0
        %1945 = vmatpush1.bf16.msra.mxu0 0
        %1946 = vmatprep.subr.bf16.mxu0 0
        %1947 = vmatpush1.bf16.msra.mxu0 0
        %1948 = vmatprep.mubr.bf16.mxu0 0
        %1949 = vmatmul.mubr.bf16.gmra.mrb[0].mxu0 %v1911
        %v1950 = vpop.f32.mrb[0].mxu0
        %v1951 = vadd.f32 0.0, %v1950
        %v1952 = vpop.f32.mrb[0].mxu0
        %v1953 = vpop.f32.mrb[0].mxu0
        %v1954 = vpop.f32.mrb[0].mxu0
        %1955 = vdwg.mxu0
        %1956 = vrot.lane.b32.xlu0 %v843, 64
        %v1957 = vpop.permute.xlu0 %1956
        %v1959 = vsel %vm1522, %v1661, 0
        %v1962 = vsel %vm1672, %v1957, 0
        %1964 = vmatprep.subr.bf16.mxu0 0
        %1965 = vmatpush1.bf16.msra.mxu0 %v1962
        %1966 = vmatprep.subr.bf16.mxu0 0
        %1967 = vmatpush1.bf16.msra.mxu0 0
        %1968 = vmatprep.subr.bf16.mxu0 0
        %1969 = vmatpush1.bf16.msra.mxu0 0
        %1970 = vmatprep.subr.bf16.mxu0 0
        %1971 = vmatpush1.bf16.msra.mxu0 0
        %1972 = vmatprep.subr.bf16.mxu0 0
        %1973 = vmatpush1.bf16.msra.mxu0 0
        %1974 = vmatprep.subr.bf16.mxu0 0
        %1975 = vmatpush1.bf16.msra.mxu0 0
        %1976 = vmatprep.subr.bf16.mxu0 0
        %1977 = vmatpush1.bf16.msra.mxu0 0
        %1978 = vmatprep.subr.bf16.mxu0 0
        %1979 = vmatpush1.bf16.msra.mxu0 0
        %1980 = vmatprep.subr.bf16.mxu0 0
        %1981 = vmatpush1.bf16.msra.mxu0 0
        %1982 = vmatprep.subr.bf16.mxu0 0
        %1983 = vmatpush1.bf16.msra.mxu0 0
        %1984 = vmatprep.subr.bf16.mxu0 0
        %1985 = vmatpush1.bf16.msra.mxu0 0
        %1986 = vmatprep.subr.bf16.mxu0 0
        %1987 = vmatpush1.bf16.msra.mxu0 0
        %1988 = vmatprep.subr.bf16.mxu0 0
        %1989 = vmatpush1.bf16.msra.mxu0 0
        %1990 = vmatprep.subr.bf16.mxu0 0
        %1991 = vmatpush1.bf16.msra.mxu0 0
        %1992 = vmatprep.subr.bf16.mxu0 0
        %1993 = vmatpush1.bf16.msra.mxu0 0
        %1994 = vmatprep.subr.bf16.mxu0 0
        %1995 = vmatpush1.bf16.msra.mxu0 0
        %1996 = vmatprep.mubr.bf16.mxu0 0
        %1997 = vmatmul.mubr.bf16.gmra.mrb[0].mxu0 %v1959
        %v1998 = vpop.f32.mrb[0].mxu0
        %v1999 = vadd.f32 0.0, %v1998
        %v2000 = vpop.f32.mrb[0].mxu0
        %v2001 = vpop.f32.mrb[0].mxu0
        %v2002 = vpop.f32.mrb[0].mxu0
        %2003 = vdwg.mxu0
        %2004 = vrot.lane.b32.xlu0 %v844, 64
        %v2005 = vpop.permute.xlu0 %2004
        %v2007 = vsel %vm1522, %v1662, 0
        %v2010 = vsel %vm1672, %v2005, 0
        %2012 = vmatprep.subr.bf16.mxu0 0
        %2013 = vmatpush1.bf16.msra.mxu0 %v2010
        %2014 = vmatprep.subr.bf16.mxu0 0
        %2015 = vmatpush1.bf16.msra.mxu0 0
        %2016 = vmatprep.subr.bf16.mxu0 0
        %2017 = vmatpush1.bf16.msra.mxu0 0
        %2018 = vmatprep.subr.bf16.mxu0 0
        %2019 = vmatpush1.bf16.msra.mxu0 0
        %2020 = vmatprep.subr.bf16.mxu0 0
        %2021 = vmatpush1.bf16.msra.mxu0 0
        %2022 = vmatprep.subr.bf16.mxu0 0
        %2023 = vmatpush1.bf16.msra.mxu0 0
        %2024 = vmatprep.subr.bf16.mxu0 0
        %2025 = vmatpush1.bf16.msra.mxu0 0
        %2026 = vmatprep.subr.bf16.mxu0 0
        %2027 = vmatpush1.bf16.msra.mxu0 0
        %2028 = vmatprep.subr.bf16.mxu0 0
        %2029 = vmatpush1.bf16.msra.mxu0 0
        %2030 = vmatprep.subr.bf16.mxu0 0
        %2031 = vmatpush1.bf16.msra.mxu0 0
        %2032 = vmatprep.subr.bf16.mxu0 0
        %2033 = vmatpush1.bf16.msra.mxu0 0
        %2034 = vmatprep.subr.bf16.mxu0 0
        %2035 = vmatpush1.bf16.msra.mxu0 0
        %2036 = vmatprep.subr.bf16.mxu0 0
        %2037 = vmatpush1.bf16.msra.mxu0 0
        %2038 = vmatprep.subr.bf16.mxu0 0
        %2039 = vmatpush1.bf16.msra.mxu0 0
        %2040 = vmatprep.subr.bf16.mxu0 0
        %2041 = vmatpush1.bf16.msra.mxu0 0
        %2042 = vmatprep.subr.bf16.mxu0 0
        %2043 = vmatpush1.bf16.msra.mxu0 0
        %2044 = vmatprep.mubr.bf16.mxu0 0
        %2045 = vmatmul.mubr.bf16.gmra.mrb[0].mxu0 %v2007
        %v2046 = vpop.f32.mrb[0].mxu0
        %v2047 = vadd.f32 0.0, %v2046
        %v2048 = vpop.f32.mrb[0].mxu0
        %v2049 = vpop.f32.mrb[0].mxu0
        %v2050 = vpop.f32.mrb[0].mxu0
        %2051 = vdwg.mxu0
        %2052 = vrot.lane.b32.xlu0 %v845, 64
        %v2053 = vpop.permute.xlu0 %2052
        %v2055 = vsel %vm1522, %v1663, 0
        %v2058 = vsel %vm1672, %v2053, 0
        %2060 = vmatprep.subr.bf16.mxu0 0
        %2061 = vmatpush1.bf16.msra.mxu0 %v2058
        %2062 = vmatprep.subr.bf16.mxu0 0
        %2063 = vmatpush1.bf16.msra.mxu0 0
        %2064 = vmatprep.subr.bf16.mxu0 0
        %2065 = vmatpush1.bf16.msra.mxu0 0
        %2066 = vmatprep.subr.bf16.mxu0 0
        %2067 = vmatpush1.bf16.msra.mxu0 0
        %2068 = vmatprep.subr.bf16.mxu0 0
        %2069 = vmatpush1.bf16.msra.mxu0 0
        %2070 = vmatprep.subr.bf16.mxu0 0
        %2071 = vmatpush1.bf16.msra.mxu0 0
        %2072 = vmatprep.subr.bf16.mxu0 0
        %2073 = vmatpush1.bf16.msra.mxu0 0
        %2074 = vmatprep.subr.bf16.mxu0 0
        %2075 = vmatpush1.bf16.msra.mxu0 0
        %2076 = vmatprep.subr.bf16.mxu0 0
        %2077 = vmatpush1.bf16.msra.mxu0 0
        %2078 = vmatprep.subr.bf16.mxu0 0
        %2079 = vmatpush1.bf16.msra.mxu0 0
        %2080 = vmatprep.subr.bf16.mxu0 0
        %2081 = vmatpush1.bf16.msra.mxu0 0
        %2082 = vmatprep.subr.bf16.mxu0 0
        %2083 = vmatpush1.bf16.msra.mxu0 0
        %2084 = vmatprep.subr.bf16.mxu0 0
        %2085 = vmatpush1.bf16.msra.mxu0 0
        %2086 = vmatprep.subr.bf16.mxu0 0
        %2087 = vmatpush1.bf16.msra.mxu0 0
        %2088 = vmatprep.subr.bf16.mxu0 0
        %2089 = vmatpush1.bf16.msra.mxu0 0
        %2090 = vmatprep.subr.bf16.mxu0 0
        %2091 = vmatpush1.bf16.msra.mxu0 0
        %2092 = vmatprep.mubr.bf16.mxu0 0
        %2093 = vmatmul.mubr.bf16.gmra.mrb[0].mxu0 %v2055
        %v2094 = vpop.f32.mrb[0].mxu0
        %v2095 = vadd.f32 0.0, %v2094
        %v2096 = vpop.f32.mrb[0].mxu0
        %v2097 = vpop.f32.mrb[0].mxu0
        %v2098 = vpop.f32.mrb[0].mxu0
        %2099 = vdwg.mxu0
        %2100 = vrot.lane.b32.xlu0 %v846, 64
        %v2101 = vpop.permute.xlu0 %2100
        %v2103 = vsel %vm1522, %v1664, 0
        %v2106 = vsel %vm1672, %v2101, 0
        %2108 = vmatprep.subr.bf16.mxu0 0
        %2109 = vmatpush1.bf16.msra.mxu0 %v2106
        %2110 = vmatprep.subr.bf16.mxu0 0
        %2111 = vmatpush1.bf16.msra.mxu0 0
        %2112 = vmatprep.subr.bf16.mxu0 0
        %2113 = vmatpush1.bf16.msra.mxu0 0
        %2114 = vmatprep.subr.bf16.mxu0 0
        %2115 = vmatpush1.bf16.msra.mxu0 0
        %2116 = vmatprep.subr.bf16.mxu0 0
        %2117 = vmatpush1.bf16.msra.mxu0 0
        %2118 = vmatprep.subr.bf16.mxu0 0
        %2119 = vmatpush1.bf16.msra.mxu0 0
        %2120 = vmatprep.subr.bf16.mxu0 0
        %2121 = vmatpush1.bf16.msra.mxu0 0
        %2122 = vmatprep.subr.bf16.mxu0 0
        %2123 = vmatpush1.bf16.msra.mxu0 0
        %2124 = vmatprep.subr.bf16.mxu0 0
        %2125 = vmatpush1.bf16.msra.mxu0 0
        %2126 = vmatprep.subr.bf16.mxu0 0
        %2127 = vmatpush1.bf16.msra.mxu0 0
        %2128 = vmatprep.subr.bf16.mxu0 0
        %2129 = vmatpush1.bf16.msra.mxu0 0
        %2130 = vmatprep.subr.bf16.mxu0 0
        %2131 = vmatpush1.bf16.msra.mxu0 0
        %2132 = vmatprep.subr.bf16.mxu0 0
        %2133 = vmatpush1.bf16.msra.mxu0 0
        %2134 = vmatprep.subr.bf16.mxu0 0
        %2135 = vmatpush1.bf16.msra.mxu0 0
        %2136 = vmatprep.subr.bf16.mxu0 0
        %2137 = vmatpush1.bf16.msra.mxu0 0
        %2138 = vmatprep.subr.bf16.mxu0 0
        %2139 = vmatpush1.bf16.msra.mxu0 0
        %2140 = vmatprep.mubr.bf16.mxu0 0
        %2141 = vmatmul.mubr.bf16.gmra.mrb[0].mxu0 %v2103
        %v2142 = vpop.f32.mrb[0].mxu0
        %v2143 = vadd.f32 0.0, %v2142
        %v2144 = vpop.f32.mrb[0].mxu0
        %v2145 = vpop.f32.mrb[0].mxu0
        %v2146 = vpop.f32.mrb[0].mxu0
        %2147 = vdwg.mxu0
        %2148 = vrot.lane.b32.xlu0 %v847, 64
        %v2149 = vpop.permute.xlu0 %2148
        %v2151 = vsel %vm1522, %v1665, 0
        %v2154 = vsel %vm1672, %v2149, 0
        %2156 = vmatprep.subr.bf16.mxu0 0
        %2157 = vmatpush1.bf16.msra.mxu0 %v2154
        %2158 = vmatprep.subr.bf16.mxu0 0
        %2159 = vmatpush1.bf16.msra.mxu0 0
        %2160 = vmatprep.subr.bf16.mxu0 0
        %2161 = vmatpush1.bf16.msra.mxu0 0
        %2162 = vmatprep.subr.bf16.mxu0 0
        %2163 = vmatpush1.bf16.msra.mxu0 0
        %2164 = vmatprep.subr.bf16.mxu0 0
        %2165 = vmatpush1.bf16.msra.mxu0 0
        %2166 = vmatprep.subr.bf16.mxu0 0
        %2167 = vmatpush1.bf16.msra.mxu0 0
        %2168 = vmatprep.subr.bf16.mxu0 0
        %2169 = vmatpush1.bf16.msra.mxu0 0
        %2170 = vmatprep.subr.bf16.mxu0 0
        %2171 = vmatpush1.bf16.msra.mxu0 0
        %2172 = vmatprep.subr.bf16.mxu0 0
        %2173 = vmatpush1.bf16.msra.mxu0 0
        %2174 = vmatprep.subr.bf16.mxu0 0
        %2175 = vmatpush1.bf16.msra.mxu0 0
        %2176 = vmatprep.subr.bf16.mxu0 0
        %2177 = vmatpush1.bf16.msra.mxu0 0
        %2178 = vmatprep.subr.bf16.mxu0 0
        %2179 = vmatpush1.bf16.msra.mxu0 0
        %2180 = vmatprep.subr.bf16.mxu0 0
        %2181 = vmatpush1.bf16.msra.mxu0 0
        %2182 = vmatprep.subr.bf16.mxu0 0
        %2183 = vmatpush1.bf16.msra.mxu0 0
        %2184 = vmatprep.subr.bf16.mxu0 0
        %2185 = vmatpush1.bf16.msra.mxu0 0
        %2186 = vmatprep.subr.bf16.mxu0 0
        %2187 = vmatpush1.bf16.msra.mxu0 0
        %2188 = vmatprep.mubr.bf16.mxu0 0
        %2189 = vmatmul.mubr.bf16.gmra.mrb[0].mxu0 %v2151
        %v2190 = vpop.f32.mrb[0].mxu0
        %v2191 = vadd.f32 0.0, %v2190
        %v2192 = vpop.f32.mrb[0].mxu0
        %v2193 = vpop.f32.mrb[0].mxu0
        %v2194 = vpop.f32.mrb[0].mxu0
        %2195 = vdwg.mxu0
        %2196 = vrot.lane.b32.xlu0 %v848, 64
        %v2197 = vpop.permute.xlu0 %2196
        %v2199 = vsel %vm1522, %v1666, 0
        %v2202 = vsel %vm1672, %v2197, 0
        %2204 = vmatprep.subr.bf16.mxu0 0
        %2205 = vmatpush1.bf16.msra.mxu0 %v2202
        %2206 = vmatprep.subr.bf16.mxu0 0
        %2207 = vmatpush1.bf16.msra.mxu0 0
        %2208 = vmatprep.subr.bf16.mxu0 0
        %2209 = vmatpush1.bf16.msra.mxu0 0
        %2210 = vmatprep.subr.bf16.mxu0 0
        %2211 = vmatpush1.bf16.msra.mxu0 0
        %2212 = vmatprep.subr.bf16.mxu0 0
        %2213 = vmatpush1.bf16.msra.mxu0 0
        %2214 = vmatprep.subr.bf16.mxu0 0
        %2215 = vmatpush1.bf16.msra.mxu0 0
        %2216 = vmatprep.subr.bf16.mxu0 0
        %2217 = vmatpush1.bf16.msra.mxu0 0
        %2218 = vmatprep.subr.bf16.mxu0 0
        %2219 = vmatpush1.bf16.msra.mxu0 0
        %2220 = vmatprep.subr.bf16.mxu0 0
        %2221 = vmatpush1.bf16.msra.mxu0 0
        %2222 = vmatprep.subr.bf16.mxu0 0
        %2223 = vmatpush1.bf16.msra.mxu0 0
        %2224 = vmatprep.subr.bf16.mxu0 0
        %2225 = vmatpush1.bf16.msra.mxu0 0
        %2226 = vmatprep.subr.bf16.mxu0 0
        %2227 = vmatpush1.bf16.msra.mxu0 0
        %2228 = vmatprep.subr.bf16.mxu0 0
        %2229 = vmatpush1.bf16.msra.mxu0 0
        %2230 = vmatprep.subr.bf16.mxu0 0
        %2231 = vmatpush1.bf16.msra.mxu0 0
        %2232 = vmatprep.subr.bf16.mxu0 0
        %2233 = vmatpush1.bf16.msra.mxu0 0
        %2234 = vmatprep.subr.bf16.mxu0 0
        %2235 = vmatpush1.bf16.msra.mxu0 0
        %2236 = vmatprep.mubr.bf16.mxu0 0
        %2237 = vmatmul.mubr.bf16.gmra.mrb[0].mxu0 %v2199
        %v2238 = vpop.f32.mrb[0].mxu0
        %v2239 = vadd.f32 0.0, %v2238
        %v2240 = vpop.f32.mrb[0].mxu0
        %v2241 = vpop.f32.mrb[0].mxu0
        %v2242 = vpop.f32.mrb[0].mxu0
        %2243 = vdwg.mxu0
        %2250 = vrot.lane.b32.xlu0 %v1759, 16
        %v2251 = vpop.permute.xlu0 %2250
        %2252 = vrot.lane.b32.xlu0 %v1855, 16
        %v2253 = vpop.permute.xlu0 %2252
        %2254 = vrot.lane.b32.xlu0 %v1951, 16
        %v2255 = vpop.permute.xlu0 %2254
        %2256 = vrot.lane.b32.xlu0 %v2047, 16
        %v2257 = vpop.permute.xlu0 %2256
        %2258 = vrot.lane.b32.xlu0 %v2143, 16
        %v2259 = vpop.permute.xlu0 %2258
        %2260 = vrot.lane.b32.xlu0 %v2239, 16
        %v2261 = vpop.permute.xlu0 %2260
        %v2268 = vsel %vm936, %v1711, %v2251
        %v2269 = vsel %vm936, %v1807, %v2253
        %v2270 = vsel %vm936, %v1903, %v2255
        %v2271 = vsel %vm936, %v1999, %v2257
        %v2272 = vsel %vm936, %v2095, %v2259
        %v2273 = vsel %vm936, %v2191, %v2261
        %v2274 = vpack.c.bf16 %v2269, %v2268
        %v2275 = vpack.c.bf16 %v2271, %v2270
        %v2276 = vpack.c.bf16 %v2273, %v2272
        %v2277 = vld [vmem:[%s622] sm:$0xf]
        %v2278 = vld [vmem:[%s622 + $0x4] sm:$0xf]
        %v2279 = vld [vmem:[%s622 + $0x8] sm:$0xf]
        %v2280 = vld [vmem:[%s622 + $0xc] sm:$0xf]
        %v2281 = vld [vmem:[%s625] sm:$0x1]
        %v2283 = vlaneseq
        %v2284 = vshrl.u32 %v2283, 7
        %v2285 = vsub.s32 0, %v2284
        %v2286 = vrot.slane %v2281, %v2285
        %v2292 = vunpack.c.l.b16 %v2277
        %v2293 = vunpack.c.l.b16 %v2278
        %v2294 = vunpack.c.l.b16 %v2279
        %v2295 = vunpack.c.l.b16 %v2280
        %v2296 = vpack.c.b16 %v2293, %v2292
        %v2297 = vpack.c.b16 %v2295, %v2294
        %v2301 = vsel %vm746, %v2274, 0
        %v2304 = vsel %vm746, %v2275, 0
        %v2307 = vsel %vm746, %v2276, 0
        %2309 = vmatprep.subr.bf16.mxu0 0
        %2310 = vmatpush1.bf16.msra.mxu0 %v2296
        %2311 = vmatprep.subr.bf16.mxu0 0
        %2312 = vmatpush1.bf16.msra.mxu0 %v2297
        %2313 = vmatprep.subr.bf16.mxu0 0
        %2314 = vmatpush1.bf16.msra.mxu0 0
        %2315 = vmatprep.subr.bf16.mxu0 0
        %2316 = vmatpush1.bf16.msra.mxu0 0
        %2317 = vmatprep.subr.bf16.mxu0 0
        %2318 = vmatpush1.bf16.msra.mxu0 0
        %2319 = vmatprep.subr.bf16.mxu0 0
        %2320 = vmatpush1.bf16.msra.mxu0 0
        %2321 = vmatprep.subr.bf16.mxu0 0
        %2322 = vmatpush1.bf16.msra.mxu0 0
        %2323 = vmatprep.subr.bf16.mxu0 0
        %2324 = vmatpush1.bf16.msra.mxu0 0
        %2325 = vmatprep.subr.bf16.mxu0 0
        %2326 = vmatpush1.bf16.msra.mxu0 0
        %2327 = vmatprep.subr.bf16.mxu0 0
        %2328 = vmatpush1.bf16.msra.mxu0 0
        %2329 = vmatprep.subr.bf16.mxu0 0
        %2330 = vmatpush1.bf16.msra.mxu0 0
        %2331 = vmatprep.subr.bf16.mxu0 0
        %2332 = vmatpush1.bf16.msra.mxu0 0
        %2333 = vmatprep.subr.bf16.mxu0 0
        %2334 = vmatpush1.bf16.msra.mxu0 0
        %2335 = vmatprep.subr.bf16.mxu0 0
        %2336 = vmatpush1.bf16.msra.mxu0 0
        %2337 = vmatprep.subr.bf16.mxu0 0
        %2338 = vmatpush1.bf16.msra.mxu0 0
        %2339 = vmatprep.subr.bf16.mxu0 0
        %2340 = vmatpush1.bf16.msra.mxu0 0
        %2341 = vmatprep.mubr.bf16.mxu0 0
        %2342 = vmatmul.mubr.bf16.gmra.mrb[0].mxu0 %v2301
        %v2343 = vpop.f32.mrb[0].mxu0
        %v2344 = vadd.f32 %v2286, %v2343
        %v2345 = vpop.f32.mrb[0].mxu0
        %v2346 = vpop.f32.mrb[0].mxu0
        %v2347 = vadd.f32 %v2286, %v2346
        %v2348 = vpop.f32.mrb[0].mxu0
        %2349 = vmatprep.mubr.bf16.mxu0 0
        %2350 = vmatmul.mubr.bf16.gmra.mrb[0].mxu0 %v2304
        %v2351 = vpop.f32.mrb[0].mxu0
        %v2352 = vadd.f32 %v2286, %v2351
        %v2353 = vpop.f32.mrb[0].mxu0
        %v2354 = vpop.f32.mrb[0].mxu0
        %v2355 = vadd.f32 %v2286, %v2354
        %v2356 = vpop.f32.mrb[0].mxu0
        %2357 = vmatprep.mubr.bf16.mxu0 0
        %2358 = vmatmul.mubr.bf16.gmra.mrb[0].mxu0 %v2307
        %v2359 = vpop.f32.mrb[0].mxu0
        %v2360 = vadd.f32 %v2286, %v2359
        %v2361 = vpop.f32.mrb[0].mxu0
        %v2362 = vpop.f32.mrb[0].mxu0
        %v2363 = vadd.f32 %v2286, %v2362
        %v2364 = vpop.f32.mrb[0].mxu0
        %2365 = vdwg.mxu0
        %v2366 = vadd.f32 %v714, %v2344
        %v2367 = vadd.f32 %v715, %v2347
        %v2368 = vadd.f32 %v716, %v2352
        %v2369 = vadd.f32 %v717, %v2355
        %v2370 = vadd.f32 %v718, %v2360
        %v2371 = vadd.f32 %v719, %v2363
        %v2372 = vld [vmem:[%s628] sm:$0x1]
        %v2373 = vld [vmem:[%s631] sm:$0x1]
        %v2374 = vsel %vm746, %v2366, 0.0
        %2375 = vadd.xlane.f32.xlu0 %v2374
        %v2376 = vpop.xlane.xlu0 %2375
        %v2377 = vsel %vm746, %v2367, 0.0
        %2378 = vadd.xlane.f32.xlu0 %v2377
        %v2379 = vpop.xlane.xlu0 %2378
        %v2380 = vsel %vm746, %v2368, 0.0
        %2381 = vadd.xlane.f32.xlu0 %v2380
        %v2382 = vpop.xlane.xlu0 %2381
        %v2383 = vsel %vm746, %v2369, 0.0
        %2384 = vadd.xlane.f32.xlu0 %v2383
        %v2385 = vpop.xlane.xlu0 %2384
        %v2386 = vsel %vm746, %v2370, 0.0
        %2387 = vadd.xlane.f32.xlu0 %v2386
        %v2388 = vpop.xlane.xlu0 %2387
        %v2389 = vsel %vm746, %v2371, 0.0
        %2390 = vadd.xlane.f32.xlu0 %v2389
        %v2391 = vpop.xlane.xlu0 %2390
        %v2392 = vrcp.pop 32.0
        %v2393 = vmul.f32 %v2376, %v2392
        %v2394 = vmul.f32 %v2379, %v2392
        %v2395 = vmul.f32 %v2382, %v2392
        %v2396 = vmul.f32 %v2385, %v2392
        %v2397 = vmul.f32 %v2388, %v2392
        %v2398 = vmul.f32 %v2391, %v2392
        %v2399 = vsub.f32 %v2366, %v2393
        %v2400 = vsub.f32 %v2367, %v2394
        %v2401 = vsub.f32 %v2368, %v2395
        %v2402 = vsub.f32 %v2369, %v2396
        %v2403 = vsub.f32 %v2370, %v2397
        %v2404 = vsub.f32 %v2371, %v2398
        %v2405 = vmul.f32 %v2399, %v2399
        %v2406 = vmul.f32 %v2400, %v2400
        %v2407 = vmul.f32 %v2401, %v2401
        %v2408 = vmul.f32 %v2402, %v2402
        %v2409 = vmul.f32 %v2403, %v2403
        %v2410 = vmul.f32 %v2404, %v2404
        %v2411 = vsel %vm746, %v2405, 0.0
        %2412 = vadd.xlane.f32.xlu0 %v2411
        %v2413 = vpop.xlane.xlu0 %2412
        %v2414 = vsel %vm746, %v2406, 0.0
        %2415 = vadd.xlane.f32.xlu0 %v2414
        %v2416 = vpop.xlane.xlu0 %2415
        %v2417 = vsel %vm746, %v2407, 0.0
        %2418 = vadd.xlane.f32.xlu0 %v2417
        %v2419 = vpop.xlane.xlu0 %2418
        %v2420 = vsel %vm746, %v2408, 0.0
        %2421 = vadd.xlane.f32.xlu0 %v2420
        %v2422 = vpop.xlane.xlu0 %2421
        %v2423 = vsel %vm746, %v2409, 0.0
        %2424 = vadd.xlane.f32.xlu0 %v2423
        %v2425 = vpop.xlane.xlu0 %2424
        %v2426 = vsel %vm746, %v2410, 0.0
        %2427 = vadd.xlane.f32.xlu0 %v2426
        %v2428 = vpop.xlane.xlu0 %2427
        %v2429 = vmul.f32 %v2413, %v2392
        %v2430 = vmul.f32 %v2416, %v2392
        %v2431 = vmul.f32 %v2419, %v2392
        %v2432 = vmul.f32 %v2422, %v2392
        %v2433 = vmul.f32 %v2425, %v2392
        %v2434 = vmul.f32 %v2428, %v2392
        %v2435 = vadd.f32 %v2429, 1e-05
        %v2436 = vadd.f32 %v2430, 1e-05
        %v2437 = vadd.f32 %v2431, 1e-05
        %v2438 = vadd.f32 %v2432, 1e-05
        %v2439 = vadd.f32 %v2433, 1e-05
        %v2440 = vadd.f32 %v2434, 1e-05
        %v2441 = vrsqrt.pop %v2435
        %v2442 = vrsqrt.pop %v2436
        %v2443 = vrsqrt.pop %v2437
        %v2444 = vrsqrt.pop %v2438
        %v2445 = vrsqrt.pop %v2439
        %v2446 = vrsqrt.pop %v2440
        %v2447 = vmul.f32 %v2399, %v2441
        %v2448 = vmul.f32 %v2400, %v2442
        %v2449 = vmul.f32 %v2401, %v2443
        %v2450 = vmul.f32 %v2402, %v2444
        %v2451 = vmul.f32 %v2403, %v2445
        %v2452 = vmul.f32 %v2404, %v2446
        %v2454 = vlaneseq
        %v2455 = vshrl.u32 %v2454, 7
        %v2456 = vsub.s32 0, %v2455
        %v2457 = vrot.slane %v2372, %v2456
        %v2459 = vmul.f32 %v2447, %v2457
        %v2460 = vmul.f32 %v2448, %v2457
        %v2461 = vmul.f32 %v2449, %v2457
        %v2462 = vmul.f32 %v2450, %v2457
        %v2463 = vmul.f32 %v2451, %v2457
        %v2464 = vmul.f32 %v2452, %v2457
        %v2466 = vlaneseq
        %v2467 = vshrl.u32 %v2466, 7
        %v2468 = vsub.s32 0, %v2467
        %v2469 = vrot.slane %v2373, %v2468
        %v2471 = vadd.f32 %v2459, %v2469
        %v2472 = vadd.f32 %v2460, %v2469
        %v2473 = vadd.f32 %v2461, %v2469
        %v2474 = vadd.f32 %v2462, %v2469
        %v2475 = vadd.f32 %v2463, %v2469
        %v2476 = vadd.f32 %v2464, %v2469
        %v2477 = vpack.c.bf16 %v2472, %v2471
        %v2478 = vpack.c.bf16 %v2474, %v2473
        %v2479 = vpack.c.bf16 %v2476, %v2475
        %v2480 = vld [vmem:[%s636] sm:$0xf]
        %v2481 = vld [vmem:[%s636 + $0x4] sm:$0xf]
        %v2482 = vld [vmem:[%s636 + $0x8] sm:$0xf]
        %v2483 = vld [vmem:[%s636 + $0xc] sm:$0xf]
        %v2484 = vld [vmem:[%s639] sm:$0x1]
        %v2486 = vlaneseq
        %v2487 = vshrl.u32 %v2486, 7
        %v2488 = vsub.s32 0, %v2487
        %v2489 = vrot.slane %v2484, %v2488
        %v2495 = vunpack.c.l.b16 %v2480
        %v2496 = vunpack.c.l.b16 %v2481
        %v2497 = vunpack.c.l.b16 %v2482
        %v2498 = vunpack.c.l.b16 %v2483
        %v2499 = vpack.c.b16 %v2496, %v2495
        %v2500 = vpack.c.b16 %v2498, %v2497
        %v2504 = vsel %vm746, %v2477, 0
        %v2507 = vsel %vm746, %v2478, 0
        %v2510 = vsel %vm746, %v2479, 0
        %2512 = vmatprep.subr.bf16.mxu0 0
        %2513 = vmatpush1.bf16.msra.mxu0 %v2499
        %2514 = vmatprep.subr.bf16.mxu0 0
        %2515 = vmatpush1.bf16.msra.mxu0 %v2500
        %2516 = vmatprep.subr.bf16.mxu0 0
        %2517 = vmatpush1.bf16.msra.mxu0 0
        %2518 = vmatprep.subr.bf16.mxu0 0
        %2519 = vmatpush1.bf16.msra.mxu0 0
        %2520 = vmatprep.subr.bf16.mxu0 0
        %2521 = vmatpush1.bf16.msra.mxu0 0
        %2522 = vmatprep.subr.bf16.mxu0 0
        %2523 = vmatpush1.bf16.msra.mxu0 0
        %2524 = vmatprep.subr.bf16.mxu0 0
        %2525 = vmatpush1.bf16.msra.mxu0 0
        %2526 = vmatprep.subr.bf16.mxu0 0
        %2527 = vmatpush1.bf16.msra.mxu0 0
        %2528 = vmatprep.subr.bf16.mxu0 0
        %2529 = vmatpush1.bf16.msra.mxu0 0
        %2530 = vmatprep.subr.bf16.mxu0 0
        %2531 = vmatpush1.bf16.msra.mxu0 0
        %2532 = vmatprep.subr.bf16.mxu0 0
        %2533 = vmatpush1.bf16.msra.mxu0 0
        %2534 = vmatprep.subr.bf16.mxu0 0
        %2535 = vmatpush1.bf16.msra.mxu0 0
        %2536 = vmatprep.subr.bf16.mxu0 0
        %2537 = vmatpush1.bf16.msra.mxu0 0
        %2538 = vmatprep.subr.bf16.mxu0 0
        %2539 = vmatpush1.bf16.msra.mxu0 0
        %2540 = vmatprep.subr.bf16.mxu0 0
        %2541 = vmatpush1.bf16.msra.mxu0 0
        %2542 = vmatprep.subr.bf16.mxu0 0
        %2543 = vmatpush1.bf16.msra.mxu0 0
        %2544 = vmatprep.mubr.bf16.mxu0 0
        %2545 = vmatmul.mubr.bf16.gmra.mrb[0].mxu0 %v2504
        %v2546 = vpop.f32.mrb[0].mxu0
        %v2547 = vadd.f32 %v2489, %v2546
        %v2548 = vpop.f32.mrb[0].mxu0
        %v2549 = vpop.f32.mrb[0].mxu0
        %v2550 = vadd.f32 %v2489, %v2549
        %v2551 = vpop.f32.mrb[0].mxu0
        %2552 = vmatprep.mubr.bf16.mxu0 0
        %2553 = vmatmul.mubr.bf16.gmra.mrb[0].mxu0 %v2507
        %v2554 = vpop.f32.mrb[0].mxu0
        %v2555 = vadd.f32 %v2489, %v2554
        %v2556 = vpop.f32.mrb[0].mxu0
        %v2557 = vpop.f32.mrb[0].mxu0
        %v2558 = vadd.f32 %v2489, %v2557
        %v2559 = vpop.f32.mrb[0].mxu0
        %2560 = vmatprep.mubr.bf16.mxu0 0
        %2561 = vmatmul.mubr.bf16.gmra.mrb[0].mxu0 %v2510
        %v2562 = vpop.f32.mrb[0].mxu0
        %v2563 = vadd.f32 %v2489, %v2562
        %v2564 = vpop.f32.mrb[0].mxu0
        %v2565 = vpop.f32.mrb[0].mxu0
        %v2566 = vadd.f32 %v2489, %v2565
        %v2567 = vpop.f32.mrb[0].mxu0
        %2568 = vdwg.mxu0
        %v2569 = vmul.f32 %v2547, %v2547
        %v2570 = vmul.f32 %v2550, %v2550
        %v2571 = vmul.f32 %v2555, %v2555
        %v2572 = vmul.f32 %v2558, %v2558
        %v2573 = vmul.f32 %v2563, %v2563
        %v2574 = vmul.f32 %v2566, %v2566
        %v2575 = vmul.f32 %v2547, %v2569
        %v2576 = vmul.f32 %v2550, %v2570
        %v2577 = vmul.f32 %v2555, %v2571
        %v2578 = vmul.f32 %v2558, %v2572
        %v2579 = vmul.f32 %v2563, %v2573
        %v2580 = vmul.f32 %v2566, %v2574
        %v2581 = vmul.f32 %v2575, 0.044715
        %v2582 = vmul.f32 %v2576, 0.044715
        %v2583 = vmul.f32 %v2577, 0.044715
        %v2584 = vmul.f32 %v2578, 0.044715
        %v2585 = vmul.f32 %v2579, 0.044715
        %v2586 = vmul.f32 %v2580, 0.044715
        %v2587 = vadd.f32 %v2547, %v2581
        %v2588 = vadd.f32 %v2550, %v2582
        %v2589 = vadd.f32 %v2555, %v2583
        %v2590 = vadd.f32 %v2558, %v2584
        %v2591 = vadd.f32 %v2563, %v2585
        %v2592 = vadd.f32 %v2566, %v2586
        %v2593 = vmul.f32 %v2587, 0.7978846
        %v2594 = vmul.f32 %v2588, 0.7978846
        %v2595 = vmul.f32 %v2589, 0.7978846
        %v2596 = vmul.f32 %v2590, 0.7978846
        %v2597 = vmul.f32 %v2591, 0.7978846
        %v2598 = vmul.f32 %v2592, 0.7978846
        %v2599 = vtanh.pop %v2593
        %v2600 = vtanh.pop %v2594
        %v2601 = vtanh.pop %v2595
        %v2602 = vtanh.pop %v2596
        %v2603 = vtanh.pop %v2597
        %v2604 = vtanh.pop %v2598
        %v2605 = vadd.f32 %v2599, 1.0
        %v2606 = vadd.f32 %v2600, 1.0
        %v2607 = vadd.f32 %v2601, 1.0
        %v2608 = vadd.f32 %v2602, 1.0
        %v2609 = vadd.f32 %v2603, 1.0
        %v2610 = vadd.f32 %v2604, 1.0
        %v2611 = vmul.f32 %v2605, 0.5
        %v2612 = vmul.f32 %v2606, 0.5
        %v2613 = vmul.f32 %v2607, 0.5
        %v2614 = vmul.f32 %v2608, 0.5
        %v2615 = vmul.f32 %v2609, 0.5
        %v2616 = vmul.f32 %v2610, 0.5
        %v2617 = vmul.f32 %v2547, %v2611
        %v2618 = vmul.f32 %v2550, %v2612
        %v2619 = vmul.f32 %v2555, %v2613
        %v2620 = vmul.f32 %v2558, %v2614
        %v2621 = vmul.f32 %v2563, %v2615
        %v2622 = vmul.f32 %v2566, %v2616
        %v2623 = vpack.c.bf16 %v2618, %v2617
        %v2624 = vpack.c.bf16 %v2620, %v2619
        %v2625 = vpack.c.bf16 %v2622, %v2621
        %v2626 = vld [vmem:[%s644] sm:$0xf]
        %v2627 = vld [vmem:[%s644 + $0x4] sm:$0xf]
        %v2628 = vld [vmem:[%s644 + $0x8] sm:$0xf]
        %v2629 = vld [vmem:[%s644 + $0xc] sm:$0xf]
        %v2630 = vld [vmem:[%s644 + $0x10] sm:$0xf]
        %v2631 = vld [vmem:[%s644 + $0x14] sm:$0xf]
        %v2632 = vld [vmem:[%s644 + $0x18] sm:$0xf]
        %v2633 = vld [vmem:[%s644 + $0x1c] sm:$0xf]
        %v2634 = vld [vmem:[%s647] sm:$0x1]
        %v2636 = vlaneseq
        %v2637 = vshrl.u32 %v2636, 7
        %v2638 = vsub.s32 0, %v2637
        %v2639 = vrot.slane %v2634, %v2638
        %v2649 = vunpack.c.l.b16 %v2626
        %v2650 = vunpack.c.l.b16 %v2627
        %v2651 = vunpack.c.l.b16 %v2628
        %v2652 = vunpack.c.l.b16 %v2629
        %v2653 = vunpack.c.l.b16 %v2630
        %v2654 = vunpack.c.l.b16 %v2631
        %v2655 = vunpack.c.l.b16 %v2632
        %v2656 = vunpack.c.l.b16 %v2633
        %v2657 = vpack.c.b16 %v2650, %v2649
        %v2658 = vpack.c.b16 %v2652, %v2651
        %v2659 = vpack.c.b16 %v2654, %v2653
        %v2660 = vpack.c.b16 %v2656, %v2655
        %vm2665 = vcmask 523264
        %v2667 = vsel %vm2665, %v2623, 0
        %v2670 = vsel %vm2665, %v2624, 0
        %v2673 = vsel %vm2665, %v2625, 0
        %2675 = vmatprep.subr.bf16.mxu0 0
        %2676 = vmatpush1.bf16.msra.mxu0 %v2657
        %2677 = vmatprep.subr.bf16.mxu0 0
        %2678 = vmatpush1.bf16.msra.mxu0 %v2658
        %2679 = vmatprep.subr.bf16.mxu0 0
        %2680 = vmatpush1.bf16.msra.mxu0 %v2659
        %2681 = vmatprep.subr.bf16.mxu0 0
        %2682 = vmatpush1.bf16.msra.mxu0 %v2660
        %2683 = vmatprep.subr.bf16.mxu0 0
        %2684 = vmatpush1.bf16.msra.mxu0 0
        %2685 = vmatprep.subr.bf16.mxu0 0
        %2686 = vmatpush1.bf16.msra.mxu0 0
        %2687 = vmatprep.subr.bf16.mxu0 0
        %2688 = vmatpush1.bf16.msra.mxu0 0
        %2689 = vmatprep.subr.bf16.mxu0 0
        %2690 = vmatpush1.bf16.msra.mxu0 0
        %2691 = vmatprep.subr.bf16.mxu0 0
        %2692 = vmatpush1.bf16.msra.mxu0 0
        %2693 = vmatprep.subr.bf16.mxu0 0
        %2694 = vmatpush1.bf16.msra.mxu0 0
        %2695 = vmatprep.subr.bf16.mxu0 0
        %2696 = vmatpush1.bf16.msra.mxu0 0
        %2697 = vmatprep.subr.bf16.mxu0 0
        %2698 = vmatpush1.bf16.msra.mxu0 0
        %2699 = vmatprep.subr.bf16.mxu0 0
        %2700 = vmatpush1.bf16.msra.mxu0 0
        %2701 = vmatprep.subr.bf16.mxu0 0
        %2702 = vmatpush1.bf16.msra.mxu0 0
        %2703 = vmatprep.subr.bf16.mxu0 0
        %2704 = vmatpush1.bf16.msra.mxu0 0
        %2705 = vmatprep.subr.bf16.mxu0 0
        %2706 = vmatpush1.bf16.msra.mxu0 0
        %2707 = vmatprep.mubr.bf16.mxu0 0
        %2708 = vmatmul.mubr.bf16.gmra.mrb[0].mxu0 %v2667
        %v2709 = vpop.f32.mrb[0].mxu0
        %v2710 = vadd.f32 %v2639, %v2709
        %v2711 = vpop.f32.mrb[0].mxu0
        %v2712 = vpop.f32.mrb[0].mxu0
        %v2713 = vadd.f32 %v2639, %v2712
        %v2714 = vpop.f32.mrb[0].mxu0
        %2715 = vmatprep.mubr.bf16.mxu0 0
        %2716 = vmatmul.mubr.bf16.gmra.mrb[0].mxu0 %v2670
        %v2717 = vpop.f32.mrb[0].mxu0
        %v2718 = vadd.f32 %v2639, %v2717
        %v2719 = vpop.f32.mrb[0].mxu0
        %v2720 = vpop.f32.mrb[0].mxu0
        %v2721 = vadd.f32 %v2639, %v2720
        %v2722 = vpop.f32.mrb[0].mxu0
        %2723 = vmatprep.mubr.bf16.mxu0 0
        %2724 = vmatmul.mubr.bf16.gmra.mrb[0].mxu0 %v2673
        %v2725 = vpop.f32.mrb[0].mxu0
        %v2726 = vadd.f32 %v2639, %v2725
        %v2727 = vpop.f32.mrb[0].mxu0
        %v2728 = vpop.f32.mrb[0].mxu0
        %v2729 = vadd.f32 %v2639, %v2728
        %v2730 = vpop.f32.mrb[0].mxu0
        %2731 = vdwg.mxu0
        %v2732 = vadd.f32 %v2471, %v2710
        %v2733 = vadd.f32 %v2472, %v2713
        %v2734 = vadd.f32 %v2473, %v2718
        %v2735 = vadd.f32 %v2474, %v2721
        %v2736 = vadd.f32 %v2475, %v2726
        %v2737 = vadd.f32 %v2476, %v2729
        %v2738 = vld [vmem:[%s650] sm:$0x1]
        %v2739 = vld [vmem:[%s653] sm:$0x1]
        %v2740 = vsel %vm746, %v2732, 0.0
        %2741 = vadd.xlane.f32.xlu0 %v2740
        %v2742 = vpop.xlane.xlu0 %2741
        %v2743 = vsel %vm746, %v2733, 0.0
        %2744 = vadd.xlane.f32.xlu0 %v2743
        %v2745 = vpop.xlane.xlu0 %2744
        %v2746 = vsel %vm746, %v2734, 0.0
        %2747 = vadd.xlane.f32.xlu0 %v2746
        %v2748 = vpop.xlane.xlu0 %2747
        %v2749 = vsel %vm746, %v2735, 0.0
        %2750 = vadd.xlane.f32.xlu0 %v2749
        %v2751 = vpop.xlane.xlu0 %2750
        %v2752 = vsel %vm746, %v2736, 0.0
        %2753 = vadd.xlane.f32.xlu0 %v2752
        %v2754 = vpop.xlane.xlu0 %2753
        %v2755 = vsel %vm746, %v2737, 0.0
        %2756 = vadd.xlane.f32.xlu0 %v2755
        %v2757 = vpop.xlane.xlu0 %2756
        %v2758 = vmul.f32 %v2742, %v2392
        %v2759 = vmul.f32 %v2745, %v2392
        %v2760 = vmul.f32 %v2748, %v2392
        %v2761 = vmul.f32 %v2751, %v2392
        %v2762 = vmul.f32 %v2754, %v2392
        %v2763 = vmul.f32 %v2757, %v2392
        %v2764 = vsub.f32 %v2732, %v2758
        %v2765 = vsub.f32 %v2733, %v2759
        %v2766 = vsub.f32 %v2734, %v2760
        %v2767 = vsub.f32 %v2735, %v2761
        %v2768 = vsub.f32 %v2736, %v2762
        %v2769 = vsub.f32 %v2737, %v2763
        %v2770 = vmul.f32 %v2764, %v2764
        %v2771 = vmul.f32 %v2765, %v2765
        %v2772 = vmul.f32 %v2766, %v2766
        %v2773 = vmul.f32 %v2767, %v2767
        %v2774 = vmul.f32 %v2768, %v2768
        %v2775 = vmul.f32 %v2769, %v2769
        %v2776 = vsel %vm746, %v2770, 0.0
        %2777 = vadd.xlane.f32.xlu0 %v2776
        %v2778 = vpop.xlane.xlu0 %2777
        %v2779 = vsel %vm746, %v2771, 0.0
        %2780 = vadd.xlane.f32.xlu0 %v2779
        %v2781 = vpop.xlane.xlu0 %2780
        %v2782 = vsel %vm746, %v2772, 0.0
        %2783 = vadd.xlane.f32.xlu0 %v2782
        %v2784 = vpop.xlane.xlu0 %2783
        %v2785 = vsel %vm746, %v2773, 0.0
        %2786 = vadd.xlane.f32.xlu0 %v2785
        %v2787 = vpop.xlane.xlu0 %2786
        %v2788 = vsel %vm746, %v2774, 0.0
        %2789 = vadd.xlane.f32.xlu0 %v2788
        %v2790 = vpop.xlane.xlu0 %2789
        %v2791 = vsel %vm746, %v2775, 0.0
        %2792 = vadd.xlane.f32.xlu0 %v2791
        %v2793 = vpop.xlane.xlu0 %2792
        %v2794 = vmul.f32 %v2778, %v2392
        %v2795 = vmul.f32 %v2781, %v2392
        %v2796 = vmul.f32 %v2784, %v2392
        %v2797 = vmul.f32 %v2787, %v2392
        %v2798 = vmul.f32 %v2790, %v2392
        %v2799 = vmul.f32 %v2793, %v2392
        %v2800 = vadd.f32 %v2794, 1e-05
        %v2801 = vadd.f32 %v2795, 1e-05
        %v2802 = vadd.f32 %v2796, 1e-05
        %v2803 = vadd.f32 %v2797, 1e-05
        %v2804 = vadd.f32 %v2798, 1e-05
        %v2805 = vadd.f32 %v2799, 1e-05
        %v2806 = vrsqrt.pop %v2800
        %v2807 = vrsqrt.pop %v2801
        %v2808 = vrsqrt.pop %v2802
        %v2809 = vrsqrt.pop %v2803
        %v2810 = vrsqrt.pop %v2804
        %v2811 = vrsqrt.pop %v2805
        %v2812 = vmul.f32 %v2764, %v2806
        %v2813 = vmul.f32 %v2765, %v2807
        %v2814 = vmul.f32 %v2766, %v2808
        %v2815 = vmul.f32 %v2767, %v2809
        %v2816 = vmul.f32 %v2768, %v2810
        %v2817 = vmul.f32 %v2769, %v2811
        %v2819 = vlaneseq
        %v2820 = vshrl.u32 %v2819, 7
        %v2821 = vsub.s32 0, %v2820
        %v2822 = vrot.slane %v2738, %v2821
        %v2824 = vmul.f32 %v2812, %v2822
        %v2825 = vmul.f32 %v2813, %v2822
        %v2826 = vmul.f32 %v2814, %v2822
        %v2827 = vmul.f32 %v2815, %v2822
        %v2828 = vmul.f32 %v2816, %v2822
        %v2829 = vmul.f32 %v2817, %v2822
        %v2831 = vlaneseq
        %v2832 = vshrl.u32 %v2831, 7
        %v2833 = vsub.s32 0, %v2832
        %v2834 = vrot.slane %v2739, %v2833
        %v2836 = vadd.f32 %v2824, %v2834
        %v2837 = vadd.f32 %v2825, %v2834
        %v2838 = vadd.f32 %v2826, %v2834
        %v2839 = vadd.f32 %v2827, %v2834
        %v2840 = vadd.f32 %v2828, %v2834
        %v2841 = vadd.f32 %v2829, %v2834
        %2842 = vst.msk [vmem:[#allocation2] sm:$0xff] %vm746, %v2836
        %2843 = vst.msk [vmem:[#allocation2 + $0x8] sm:$0xff] %vm746, %v2837
        %2844 = vst.msk [vmem:[#allocation2 + $0x10] sm:$0xff] %vm746, %v2838
        %2845 = vst.msk [vmem:[#allocation2 + $0x18] sm:$0xff] %vm746, %v2839
        %2846 = vst.msk [vmem:[#allocation2 + $0x20] sm:$0xff] %vm746, %v2840
        %2847 = vst.msk [vmem:[#allocation2 + $0x28] sm:$0xff] %vm746, %v2841
        %p2848 = scmp.eq.s32.totalorder %s28, 1
        // Predicated region
        $region119: #{tpu_custom_call.1} parent=79 // pred_check
          %p2849 = pneg %p2848
        $region120: #{tpu_custom_call.1} parent=79 // pred_check_branch
          %2851 = sbr.rel (%p2849) target = $region122
        $region121: #{tpu_custom_call.1} parent=79 // pred_region
          %v2852 = vsub.f32 %v2838, %v2840
          %v2853 = vsub.f32 %v2839, %v2841
          %v2854 = vsub.f32 %v2836, %v2852
          %v2855 = vsub.f32 %v2837, %v2853
          %v2858 = vrot.slane %v2855, 7
          %vm2859 = vcmask 1041409
          %v2860 = vsel %vm2859, %v2858, %v2854
          %v2864 = vrot.slane %v2852, 6
          %v2865 = vrot.slane %v2853, 5
          %vm2866 = vcmask 1043459
          %v2867 = vsel %vm2866, %v2865, %v2864
          %vm2869 = vcmask 1041408
          %v2870 = vsel %vm2869, %v2860, %v2867
          %v2871 = vld [vmem:[%s14] sm:$0xff]
          %v2872 = vld [vmem:[%s14 + $0x8] sm:$0xff]
          %v2873 = vld [vmem:[%s14 + $0x10] sm:$0xff]
          %v2874 = vld [vmem:[%s14 + $0x18] sm:$0xff]
          %v2875 = vld [vmem:[%s15] sm:$0x1]
          %v2877 = vlaneseq
          %v2878 = vshrl.u32 %v2877, 7
          %v2879 = vsub.s32 0, %v2878
          %v2880 = vrot.slane %v2875, %v2879
          %v2883 = vsel %vm746, %v2870, 0
          %2885 = vmatprep.subr.mxu0 0.0
          %2886 = vmatpush1.msra.mxu0 %v2871
          %2887 = vmatprep.subr.mxu0 0.0
          %2888 = vmatpush1.msra.mxu0 %v2872
          %2889 = vmatprep.subr.mxu0 0.0
          %2890 = vmatpush1.msra.mxu0 %v2873
          %2891 = vmatprep.subr.mxu0 0.0
          %2892 = vmatpush1.msra.mxu0 %v2874
          %2893 = vmatprep.subr.mxu0 0.0
          %2894 = vmatpush1.msra.mxu0 0.0
          %2895 = vmatprep.subr.mxu0 0.0
          %2896 = vmatpush1.msra.mxu0 0.0
          %2897 = vmatprep.subr.mxu0 0.0
          %2898 = vmatpush1.msra.mxu0 0.0
          %2899 = vmatprep.subr.mxu0 0.0
          %2900 = vmatpush1.msra.mxu0 0.0
          %2901 = vmatprep.subr.mxu0 0.0
          %2902 = vmatpush1.msra.mxu0 0.0
          %2903 = vmatprep.subr.mxu0 0.0
          %2904 = vmatpush1.msra.mxu0 0.0
          %2905 = vmatprep.subr.mxu0 0.0
          %2906 = vmatpush1.msra.mxu0 0.0
          %2907 = vmatprep.subr.mxu0 0.0
          %2908 = vmatpush1.msra.mxu0 0.0
          %2909 = vmatprep.subr.mxu0 0.0
          %2910 = vmatpush1.msra.mxu0 0.0
          %2911 = vmatprep.subr.mxu0 0.0
          %2912 = vmatpush1.msra.mxu0 0.0
          %2913 = vmatprep.subr.mxu0 0.0
          %2914 = vmatpush1.msra.mxu0 0.0
          %2915 = vmatprep.subr.mxu0 0.0
          %2916 = vmatpush1.msra.mxu0 0.0
          %2917 = vmatprep.subr.mxu0 0.0
          %2918 = vmatpush1.msra.mxu0 0.0
          %2919 = vmatprep.subr.mxu0 0.0
          %2920 = vmatpush1.msra.mxu0 0.0
          %2921 = vmatprep.subr.mxu0 0.0
          %2922 = vmatpush1.msra.mxu0 0.0
          %2923 = vmatprep.subr.mxu0 0.0
          %2924 = vmatpush1.msra.mxu0 0.0
          %2925 = vmatprep.subr.mxu0 0.0
          %2926 = vmatpush1.msra.mxu0 0.0
          %2927 = vmatprep.subr.mxu0 0.0
          %2928 = vmatpush1.msra.mxu0 0.0
          %2929 = vmatprep.subr.mxu0 0.0
          %2930 = vmatpush1.msra.mxu0 0.0
          %2931 = vmatprep.subr.mxu0 0.0
          %2932 = vmatpush1.msra.mxu0 0.0
          %2933 = vmatprep.subr.mxu0 0.0
          %2934 = vmatpush1.msra.mxu0 0.0
          %2935 = vmatprep.subr.mxu0 0.0
          %2936 = vmatpush1.msra.mxu0 0.0
          %2937 = vmatprep.subr.mxu0 0.0
          %2938 = vmatpush1.msra.mxu0 0.0
          %2939 = vmatprep.subr.mxu0 0.0
          %2940 = vmatpush1.msra.mxu0 0.0
          %2941 = vmatprep.subr.mxu0 0.0
          %2942 = vmatpush1.msra.mxu0 0.0
          %2943 = vmatprep.subr.mxu0 0.0
          %2944 = vmatpush1.msra.mxu0 0.0
          %2945 = vmatprep.subr.mxu0 0.0
          %2946 = vmatpush1.msra.mxu0 0.0
          %2947 = vmatprep.subr.mxu0 0.0
          %2948 = vmatpush1.msra.mxu0 0.0
          %2949 = vmatprep.mubr.f32.mxu0 0.0
          %2950 = vmatmul.mubr.f32.gmra.mrb[0].mxu0 %v2883
          %v2951 = vpop.f32.mrb[0].mxu0
          %v2952 = vadd.f32 %v2880, %v2951
          %v2953 = vpop.f32.mrb[0].mxu0
          %2954 = vdwg.mxu0
          %v2955 = vlaneseq
          %v2956 = vand.u32 %v2955, 127
          %vm2957 = vcmp.eq.s32.totalorder %v2956, 0
          %vm2958 = vcmp.eq.s32.totalorder %v2956, 4
          %vm2959 = vmor %vm2957, %vm2958
          %v2960 = vxor.u32 %v2952, 2147483648
          %v2961 = vmul.f32 %v2960, 1.442695
          %v2962 = vpow.pop %v2961
          %v2963 = vadd.f32 %v2962, 1.0
          %v2964 = vrcp.pop %v2963
          %v2965 = vmul.f32 1.0, %v2964
          %v2966 = vsel %vm2959, %v2965, %v2952
          %2967 = vst [vmem:[#allocation4] sm:$0xf] %v2966
        $region122: #{tpu_custom_call.1} parent=79 // pred_fallthru
          _
        // Predicated region
        $region123: #{tpu_custom_call.1} parent=79 // pred_check
          %p2968 = pneg %p416
        $region124: #{tpu_custom_call.1} parent=79 // pred_check_branch
          %2970 = sbr.rel (%p2968) target = $region126
        $region125: #{tpu_custom_call.1} parent=79 // pred_region
          %s2972 = ssub.s32 64, 64
          %2973 = vsyncadd [#allocation5], %s2972
          %s2975 = sshll.u32 [#allocation4], 4
          %s2976 = int_to_ptr.vmem [resolvable:$true] %s2975
          %2978 = dma.vmem_to_hbm [thread:$0]  %s2976, 64, %s16, [#allocation5]
        $region126: #{tpu_custom_call.1} parent=79 // pred_fallthru
          _
        // Predicated region
        $region127: #{tpu_custom_call.1} parent=79 // pred_check
          %p2979 = pneg %p416
        $region128: #{tpu_custom_call.1} parent=79 // pred_check_branch
          %2981 = sbr.rel (%p2979) target = $region130
        $region129: #{tpu_custom_call.1} parent=79 // pred_region
          %2982 = dma.done [#allocation5], 64
        $region130: #{tpu_custom_call.1} parent=79 // pred_fallthru
          _
      $region80: #{tpu_custom_call.1} parent=5 // pred_fallthru
        _
      %p2983 = scmp.le.s32.totalorder 2, %s23
      // Predicated region
      $region131: #{tpu_custom_call.1} parent=5 // pred_check
        %p2984 = pneg %p2983
      $region132: #{tpu_custom_call.1} parent=5 // pred_check_branch
        %2986 = sbr.rel (%p2984) target = $region134
      $region133: #{tpu_custom_call.1} parent=5 // pred_region
        %s2987 = ssub.s32 %s23, 2
      $region134: #{tpu_custom_call.1} parent=5 // pred_fallthru
        _
    $region6: #{tpu_custom_call.1} parent=1 // loop_footer
      %s27 = sadd.s32 1, %s23
    $region7: #{tpu_custom_call.1} parent=1 // loop_footer_branch
      %22 = sbr.rel target = $region3
    $region8: #{tpu_custom_call.1} parent=1 // loop_exit
      _
    %2988 = vsyncpa [#allocation5], 1
    %s2989 = scalar_lea.sflag [#allocation5], 1
    %2990 = vsyncpa %s2989, 1
  %2991 = vsyncmov [#allocation3]
  %s2992 = vpop.sfrf %2991
  %p2993 = scmp.eq.s32.totalorder %s2992, 0
  %p2994 = pneg %p2993
  %2996 = shalt.err (%p2994)

</llo_original>
